<compile_context>
chip_gen: v7x
topology: tpu7x:2x2x1
jax: 0.10.0
libtpu: 0.0.40
codegen_flags: <defaults>
</compile_context>

<pallas_src>
import random

import jax
import jax.numpy as jnp
from jax import lax
from jax.experimental import pallas as pl
from jax.experimental.pallas import tpu as pltpu

# ----------------------------- problem sizes --------------------------------
VOCAB = 128      # encoder input_dim == decoder output_dim (one lane tile)
EMB = 32         # embedding dim (encoder and decoder)
HID = 32         # LSTM hidden size (4*HID = 128 -> lane-dense gate matmuls)
BATCH = 8        # one sublane tile
SRC_LEN = 8
TRG_LEN = 8
TEACHER_FORCING_RATIO = 0.5


# ----------------------------- fused Pallas kernel ---------------------------
def seq2seq_kernel(tf_ref,          # (TRG_LEN,) int32 SMEM  runtime teacher-forcing flags
                   enc_x_ref,       # (SRC_LEN, B, EMB)      pre-embedded source
                   dec_x_ref,       # (TRG_LEN, B, EMB)      pre-embedded target (teacher forcing)
                   wih_enc_ref,     # (EMB, 4H)  g-cols pre-scaled x2
                   whh_enc_ref,     # (HID, 4H)  g-cols pre-scaled x2
                   b_enc_ref,       # (B, 4H)    pre-broadcast, g-cols pre-scaled x2
                   wih_dec_ref,     # (EMB, 4H)
                   whh_dec_ref,     # (HID, 4H)
                   b_dec_ref,       # (B, 4H)
                   w_out_ref,       # (HID, VOCAB)
                   b_out_ref,       # (B, VOCAB) pre-broadcast
                   emb_dec_ref,     # (VOCAB, EMB)  decoder embedding (greedy feedback)
                   out_ref):        # (TRG_LEN, B, VOCAB)
    f32 = jnp.float32
    B, H = BATCH, HID

    # Hoist all reused weights / biases into vregs once, off the serial chain.
    wih_e = wih_enc_ref[...]
    whh_e = whh_enc_ref[...]
    b_e = b_enc_ref[...]
    wih_d = wih_dec_ref[...]
    whh_d = whh_dec_ref[...]
    b_d = b_dec_ref[...]
    w_out = w_out_ref[...]
    b_out = b_out_ref[...]
    # emb_dec_ref stays in VMEM: only read on greedy-feedback steps.

    def cell(x, h, c, wih, whh, b):
        # Split-cell form: two small MXU passes, no scratch-buffer round-trip.
        gates = (jnp.dot(x, wih, preferred_element_type=f32)
                 + jnp.dot(h, whh, preferred_element_type=f32) + b)
        # Single full-vreg sigmoid pass; g columns were pre-scaled by 2 at
        # init, so tanh(g) = 2*sigmoid(2g) - 1 comes out of the same pass.
        sig = jax.nn.sigmoid(gates)
        i_g = sig[:, 0 * H:1 * H]
        f_g = sig[:, 1 * H:2 * H]
        g_g = 2.0 * sig[:, 2 * H:3 * H] - 1.0
        o_g = sig[:, 3 * H:4 * H]
        c_new = f_g * c + i_g * g_g
        h_new = o_g * jnp.tanh(c_new)
        return h_new, c_new

    h = jnp.zeros((B, H), f32)
    c = jnp.zeros((B, H), f32)

    # -------- encoder: fully unrolled, h/c live in vregs --------
    for t in range(SRC_LEN):
        h, c = cell(enc_x_ref[t], h, c, wih_e, whh_e, b_e)

    # outputs[0] stays zero (matches torch.zeros initialization)
    out_ref[0] = jnp.zeros((B, VOCAB), f32)

    lane = lax.broadcasted_iota(jnp.int32, (B, VOCAB), 1)

    # -------- decoder: fully unrolled, feedback selected at runtime --------
    x = dec_x_ref[0]                         # embedded <sos> row = trg[0]
    for t in range(1, TRG_LEN):
        h, c = cell(x, h, c, wih_d, whh_d, b_d)
        logits = jnp.dot(h, w_out, preferred_element_type=f32) + b_out
        out_ref[t] = logits                  # lane-dense (8,128) store
        if t < TRG_LEN - 1:
            # Greedy feedback: first-index argmax -> one-hot -> embedding
            # matmul (XLU reduces + one (8,128)@(128,32) MXU pass).
            m = jnp.max(logits, axis=-1, keepdims=True)
            idx = jnp.min(jnp.where(logits >= m, lane, VOCAB),
                          axis=-1, keepdims=True)          # first argmax
            onehot = (lane == idx).astype(f32)              # (B, VOCAB)
            greedy_x = jnp.dot(onehot, emb_dec_ref[...],
                               preferred_element_type=f32)  # (B, EMB)
            # Runtime teacher-forcing flag (SMEM scalar) -> arithmetic blend.
            tf = (tf_ref[t] != 0).astype(f32)
            x = tf * dec_x_ref[t] + (1.0 - tf) * greedy_x


# ----------------------------- jitted forward --------------------------------
@jax.jit
def seq2seq_forward(params, src, trg, tf_flags):
    """src: (SRC_LEN, B) int32, trg: (TRG_LEN, B) int32,
    tf_flags: (TRG_LEN,) int32 runtime teacher-forcing draws (entry t decides
    the input of step t+1). Returns (TRG_LEN, B, VOCAB) f32, outputs[0] == 0."""
    # Two single XLA gathers outside the kernel (encoder + teacher-forcing
    # decoder inputs); the greedy-feedback embedding happens in-kernel.
    enc_x = jnp.take(params["emb_enc"], src, axis=0)      # (SRC_LEN, B, EMB)
    dec_x = jnp.take(params["emb_dec"], trg, axis=0)      # (TRG_LEN, B, EMB)

    n_vmem_inputs = 11
    return pl.pallas_call(
        seq2seq_kernel,
        out_shape=jax.ShapeDtypeStruct((TRG_LEN, BATCH, VOCAB), jnp.float32),
        in_specs=(
            [pl.BlockSpec(memory_space=pltpu.MemorySpace.SMEM)]
            + [pl.BlockSpec(memory_space=pltpu.MemorySpace.VMEM)] * n_vmem_inputs
        ),
        out_specs=pl.BlockSpec(memory_space=pltpu.MemorySpace.VMEM),
    )(tf_flags.astype(jnp.int32), enc_x, dec_x,
      params["wih_enc"], params["whh_enc"], params["b_enc"],
      params["wih_dec"], params["whh_dec"], params["b_dec"],
      params["w_out"], params["b_out"], params["emb_dec"])


# ----------------------------- parameter setup -------------------------------
def _scale_g_cols(w):
    """Pre-scale the g-gate columns by 2 (tanh(x) = 2*sigmoid(2x) - 1)."""
    return w.at[..., 2 * HID:3 * HID].multiply(2.0)


def init_params(key):
    ks = jax.random.split(key, 10)
    s = 0.1
    wih_e = _scale_g_cols(jax.random.normal(ks[1], (EMB, 4 * HID), jnp.float32) * s)
    whh_e = _scale_g_cols(jax.random.normal(ks[2], (HID, 4 * HID), jnp.float32) * s)
    b_e = _scale_g_cols(jax.random.normal(ks[3], (1, 4 * HID), jnp.float32) * s)
    wih_d = _scale_g_cols(jax.random.normal(ks[5], (EMB, 4 * HID), jnp.float32) * s)
    whh_d = _scale_g_cols(jax.random.normal(ks[6], (HID, 4 * HID), jnp.float32) * s)
    b_d = _scale_g_cols(jax.random.normal(ks[7], (1, 4 * HID), jnp.float32) * s)
    b_out = jax.random.normal(ks[9], (1, VOCAB), jnp.float32) * s
    return {
        # encoder
        "emb_enc": jax.random.normal(ks[0], (VOCAB, EMB), jnp.float32) * s,
        "wih_enc": wih_e,
        "whh_enc": whh_e,
        "b_enc": jnp.tile(b_e, (BATCH, 1)),        # (B, 4H): no per-step broadcast
        # decoder
        "emb_dec": jax.random.normal(ks[4], (VOCAB, EMB), jnp.float32) * s,
        "wih_dec": wih_d,
        "whh_dec": whh_d,
        "b_dec": jnp.tile(b_d, (BATCH, 1)),
        "w_out": jax.random.normal(ks[8], (HID, VOCAB), jnp.float32) * s,
        "b_out": jnp.tile(b_out, (BATCH, 1)),      # (B, VOCAB)
    }


# ----------------------------- main -------------------------------------------
if __name__ == "__main__":
    key = jax.random.PRNGKey(0)
    pkey, skey, tkey = jax.random.split(key, 3)

    params = init_params(pkey)
    src = jax.random.randint(skey, (SRC_LEN, BATCH), 0, VOCAB, dtype=jnp.int32)
    trg = jax.random.randint(tkey, (TRG_LEN, BATCH), 0, VOCAB, dtype=jnp.int32)

    # Runtime per-step teacher-forcing draws (PyTorch's `random.random() <
    # ratio` per decoder step), passed as a runtime SMEM vector -> one kernel
    # compile regardless of the draws. Entry 0 is unused.
    random.seed(0)
    tf_flags = jnp.array(
        [0] + [int(random.random() < TEACHER_FORCING_RATIO)
               for _ in range(1, TRG_LEN)],
        dtype=jnp.int32)

    outputs = seq2seq_forward(params, src, trg, tf_flags)
    outputs = jax.block_until_ready(outputs)

    assert outputs.shape == (TRG_LEN, BATCH, VOCAB)
    assert bool(jnp.all(outputs[0] == 0.0))
    assert bool(jnp.all(jnp.isfinite(outputs)))
    print("KERNEL_OK")
</pallas_src>

<mosaic_0001>
module attributes {stable_mosaic.version = 11 : i64} {
  func.func @seq2seq_kernel(%arg0: memref<8xi32, #tpu.memory_space<smem>>, %arg1: memref<8x8x32xf32, #tpu.memory_space<vmem>>, %arg2: memref<8x8x32xf32, #tpu.memory_space<vmem>>, %arg3: memref<32x128xf32, #tpu.memory_space<vmem>>, %arg4: memref<32x128xf32, #tpu.memory_space<vmem>>, %arg5: memref<8x128xf32, #tpu.memory_space<vmem>>, %arg6: memref<32x128xf32, #tpu.memory_space<vmem>>, %arg7: memref<32x128xf32, #tpu.memory_space<vmem>>, %arg8: memref<8x128xf32, #tpu.memory_space<vmem>>, %arg9: memref<32x128xf32, #tpu.memory_space<vmem>>, %arg10: memref<8x128xf32, #tpu.memory_space<vmem>>, %arg11: memref<128x32xf32, #tpu.memory_space<vmem>>, %arg12: memref<8x8x128xf32, #tpu.memory_space<vmem>>) attributes {dimension_semantics = [], scalar_prefetch = 0 : i64, scratch_operands = 0 : i64, tpu.core_type = #tpu.core_type<tc>} {
    %c0 = arith.constant 0 : index
    %c0_0 = arith.constant 0 : index
    %0 = vector.load %arg3[%c0, %c0_0] : memref<32x128xf32, #tpu.memory_space<vmem>>, vector<32x128xf32>
    %c0_1 = arith.constant 0 : index
    %c0_2 = arith.constant 0 : index
    %1 = vector.load %arg4[%c0_1, %c0_2] : memref<32x128xf32, #tpu.memory_space<vmem>>, vector<32x128xf32>
    %c0_3 = arith.constant 0 : index
    %c0_4 = arith.constant 0 : index
    %2 = vector.load %arg5[%c0_3, %c0_4] : memref<8x128xf32, #tpu.memory_space<vmem>>, vector<8x128xf32>
    %c0_5 = arith.constant 0 : index
    %c0_6 = arith.constant 0 : index
    %3 = vector.load %arg6[%c0_5, %c0_6] : memref<32x128xf32, #tpu.memory_space<vmem>>, vector<32x128xf32>
    %c0_7 = arith.constant 0 : index
    %c0_8 = arith.constant 0 : index
    %4 = vector.load %arg7[%c0_7, %c0_8] : memref<32x128xf32, #tpu.memory_space<vmem>>, vector<32x128xf32>
    %c0_9 = arith.constant 0 : index
    %c0_10 = arith.constant 0 : index
    %5 = vector.load %arg8[%c0_9, %c0_10] : memref<8x128xf32, #tpu.memory_space<vmem>>, vector<8x128xf32>
    %c0_11 = arith.constant 0 : index
    %c0_12 = arith.constant 0 : index
    %6 = vector.load %arg9[%c0_11, %c0_12] : memref<32x128xf32, #tpu.memory_space<vmem>>, vector<32x128xf32>
    %c0_13 = arith.constant 0 : index
    %c0_14 = arith.constant 0 : index
    %7 = vector.load %arg10[%c0_13, %c0_14] : memref<8x128xf32, #tpu.memory_space<vmem>>, vector<8x128xf32>
    %cst = arith.constant 0.000000e+00 : f32
    %8 = vector.broadcast %cst : f32 to vector<8x32xf32>
    %cst_15 = arith.constant 0.000000e+00 : f32
    %9 = vector.broadcast %cst_15 : f32 to vector<8x32xf32>
    %c0_16 = arith.constant 0 : index
    %c0_17 = arith.constant 0 : index
    %c0_18 = arith.constant 0 : index
    %10 = vector.load %arg1[%c0_16, %c0_17, %c0_18] : memref<8x8x32xf32, #tpu.memory_space<vmem>>, vector<1x8x32xf32>
    %11 = vector.shape_cast %10 : vector<1x8x32xf32> to vector<8x32xf32>
    %cst_19 = arith.constant dense<0.000000e+00> : vector<8x128xf32>
    %12 = tpu.matmul %11, %0, %cst_19 {dimension_numbers = #tpu.dot_dimension_numbers<[1], [0], [0], [1], [0, 0, 1, 1], [], []>} : vector<8x32xf32>, vector<32x128xf32>, vector<8x128xf32> -> vector<8x128xf32>
    %cst_20 = arith.constant dense<0.000000e+00> : vector<8x128xf32>
    %13 = tpu.matmul %8, %1, %cst_20 {dimension_numbers = #tpu.dot_dimension_numbers<[1], [0], [0], [1], [0, 0, 1, 1], [], []>} : vector<8x32xf32>, vector<32x128xf32>, vector<8x128xf32> -> vector<8x128xf32>
    %14 = arith.addf %12, %13 : vector<8x128xf32>
    %15 = arith.addf %14, %2 : vector<8x128xf32>
    %16 = arith.negf %15 : vector<8x128xf32>
    %17 = math.exp %16 : vector<8x128xf32>
    %cst_21 = arith.constant 1.000000e+00 : f32
    %18 = vector.broadcast %cst_21 : f32 to vector<8x128xf32>
    %19 = arith.addf %18, %17 : vector<8x128xf32>
    %20 = arith.divf %18, %19 : vector<8x128xf32>
    %21 = vector.extract_strided_slice %20 {offsets = [0, 0], sizes = [8, 32], strides = [1, 1]} : vector<8x128xf32> to vector<8x32xf32>
    %22 = vector.extract_strided_slice %20 {offsets = [0, 32], sizes = [8, 32], strides = [1, 1]} : vector<8x128xf32> to vector<8x32xf32>
    %23 = vector.extract_strided_slice %20 {offsets = [0, 64], sizes = [8, 32], strides = [1, 1]} : vector<8x128xf32> to vector<8x32xf32>
    %cst_22 = arith.constant 2.000000e+00 : f32
    %24 = vector.broadcast %cst_22 : f32 to vector<8x32xf32>
    %25 = arith.mulf %24, %23 : vector<8x32xf32>
    %cst_23 = arith.constant 1.000000e+00 : f32
    %26 = vector.broadcast %cst_23 : f32 to vector<8x32xf32>
    %27 = arith.subf %25, %26 : vector<8x32xf32>
    %28 = vector.extract_strided_slice %20 {offsets = [0, 96], sizes = [8, 32], strides = [1, 1]} : vector<8x128xf32> to vector<8x32xf32>
    %29 = arith.mulf %22, %9 : vector<8x32xf32>
    %30 = arith.mulf %21, %27 : vector<8x32xf32>
    %31 = arith.addf %29, %30 : vector<8x32xf32>
    %32 = math.tanh %31 : vector<8x32xf32>
    %33 = arith.mulf %28, %32 : vector<8x32xf32>
    %c1 = arith.constant 1 : index
    %c0_24 = arith.constant 0 : index
    %c0_25 = arith.constant 0 : index
    %34 = vector.load %arg1[%c1, %c0_24, %c0_25] : memref<8x8x32xf32, #tpu.memory_space<vmem>>, vector<1x8x32xf32>
    %35 = vector.shape_cast %34 : vector<1x8x32xf32> to vector<8x32xf32>
    %cst_26 = arith.constant dense<0.000000e+00> : vector<8x128xf32>
    %36 = tpu.matmul %35, %0, %cst_26 {dimension_numbers = #tpu.dot_dimension_numbers<[1], [0], [0], [1], [0, 0, 1, 1], [], []>} : vector<8x32xf32>, vector<32x128xf32>, vector<8x128xf32> -> vector<8x128xf32>
    %cst_27 = arith.constant dense<0.000000e+00> : vector<8x128xf32>
    %37 = tpu.matmul %33, %1, %cst_27 {dimension_numbers = #tpu.dot_dimension_numbers<[1], [0], [0], [1], [0, 0, 1, 1], [], []>} : vector<8x32xf32>, vector<32x128xf32>, vector<8x128xf32> -> vector<8x128xf32>
    %38 = arith.addf %36, %37 : vector<8x128xf32>
    %39 = arith.addf %38, %2 : vector<8x128xf32>
    %40 = arith.negf %39 : vector<8x128xf32>
    %41 = math.exp %40 : vector<8x128xf32>
    %cst_28 = arith.constant 1.000000e+00 : f32
    %42 = vector.broadcast %cst_28 : f32 to vector<8x128xf32>
    %43 = arith.addf %42, %41 : vector<8x128xf32>
    %44 = arith.divf %42, %43 : vector<8x128xf32>
    %45 = vector.extract_strided_slice %44 {offsets = [0, 0], sizes = [8, 32], strides = [1, 1]} : vector<8x128xf32> to vector<8x32xf32>
    %46 = vector.extract_strided_slice %44 {offsets = [0, 32], sizes = [8, 32], strides = [1, 1]} : vector<8x128xf32> to vector<8x32xf32>
    %47 = vector.extract_strided_slice %44 {offsets = [0, 64], sizes = [8, 32], strides = [1, 1]} : vector<8x128xf32> to vector<8x32xf32>
    %cst_29 = arith.constant 2.000000e+00 : f32
    %48 = vector.broadcast %cst_29 : f32 to vector<8x32xf32>
    %49 = arith.mulf %48, %47 : vector<8x32xf32>
    %cst_30 = arith.constant 1.000000e+00 : f32
    %50 = vector.broadcast %cst_30 : f32 to vector<8x32xf32>
    %51 = arith.subf %49, %50 : vector<8x32xf32>
    %52 = vector.extract_strided_slice %44 {offsets = [0, 96], sizes = [8, 32], strides = [1, 1]} : vector<8x128xf32> to vector<8x32xf32>
    %53 = arith.mulf %46, %31 : vector<8x32xf32>
    %54 = arith.mulf %45, %51 : vector<8x32xf32>
    %55 = arith.addf %53, %54 : vector<8x32xf32>
    %56 = math.tanh %55 : vector<8x32xf32>
    %57 = arith.mulf %52, %56 : vector<8x32xf32>
    %c2 = arith.constant 2 : index
    %c0_31 = arith.constant 0 : index
    %c0_32 = arith.constant 0 : index
    %58 = vector.load %arg1[%c2, %c0_31, %c0_32] : memref<8x8x32xf32, #tpu.memory_space<vmem>>, vector<1x8x32xf32>
    %59 = vector.shape_cast %58 : vector<1x8x32xf32> to vector<8x32xf32>
    %cst_33 = arith.constant dense<0.000000e+00> : vector<8x128xf32>
    %60 = tpu.matmul %59, %0, %cst_33 {dimension_numbers = #tpu.dot_dimension_numbers<[1], [0], [0], [1], [0, 0, 1, 1], [], []>} : vector<8x32xf32>, vector<32x128xf32>, vector<8x128xf32> -> vector<8x128xf32>
    %cst_34 = arith.constant dense<0.000000e+00> : vector<8x128xf32>
    %61 = tpu.matmul %57, %1, %cst_34 {dimension_numbers = #tpu.dot_dimension_numbers<[1], [0], [0], [1], [0, 0, 1, 1], [], []>} : vector<8x32xf32>, vector<32x128xf32>, vector<8x128xf32> -> vector<8x128xf32>
    %62 = arith.addf %60, %61 : vector<8x128xf32>
    %63 = arith.addf %62, %2 : vector<8x128xf32>
    %64 = arith.negf %63 : vector<8x128xf32>
    %65 = math.exp %64 : vector<8x128xf32>
    %cst_35 = arith.constant 1.000000e+00 : f32
    %66 = vector.broadcast %cst_35 : f32 to vector<8x128xf32>
    %67 = arith.addf %66, %65 : vector<8x128xf32>
    %68 = arith.divf %66, %67 : vector<8x128xf32>
    %69 = vector.extract_strided_slice %68 {offsets = [0, 0], sizes = [8, 32], strides = [1, 1]} : vector<8x128xf32> to vector<8x32xf32>
    %70 = vector.extract_strided_slice %68 {offsets = [0, 32], sizes = [8, 32], strides = [1, 1]} : vector<8x128xf32> to vector<8x32xf32>
    %71 = vector.extract_strided_slice %68 {offsets = [0, 64], sizes = [8, 32], strides = [1, 1]} : vector<8x128xf32> to vector<8x32xf32>
    %cst_36 = arith.constant 2.000000e+00 : f32
    %72 = vector.broadcast %cst_36 : f32 to vector<8x32xf32>
    %73 = arith.mulf %72, %71 : vector<8x32xf32>
    %cst_37 = arith.constant 1.000000e+00 : f32
    %74 = vector.broadcast %cst_37 : f32 to vector<8x32xf32>
    %75 = arith.subf %73, %74 : vector<8x32xf32>
    %76 = vector.extract_strided_slice %68 {offsets = [0, 96], sizes = [8, 32], strides = [1, 1]} : vector<8x128xf32> to vector<8x32xf32>
    %77 = arith.mulf %70, %55 : vector<8x32xf32>
    %78 = arith.mulf %69, %75 : vector<8x32xf32>
    %79 = arith.addf %77, %78 : vector<8x32xf32>
    %80 = math.tanh %79 : vector<8x32xf32>
    %81 = arith.mulf %76, %80 : vector<8x32xf32>
    %c3 = arith.constant 3 : index
    %c0_38 = arith.constant 0 : index
    %c0_39 = arith.constant 0 : index
    %82 = vector.load %arg1[%c3, %c0_38, %c0_39] : memref<8x8x32xf32, #tpu.memory_space<vmem>>, vector<1x8x32xf32>
    %83 = vector.shape_cast %82 : vector<1x8x32xf32> to vector<8x32xf32>
    %cst_40 = arith.constant dense<0.000000e+00> : vector<8x128xf32>
    %84 = tpu.matmul %83, %0, %cst_40 {dimension_numbers = #tpu.dot_dimension_numbers<[1], [0], [0], [1], [0, 0, 1, 1], [], []>} : vector<8x32xf32>, vector<32x128xf32>, vector<8x128xf32> -> vector<8x128xf32>
    %cst_41 = arith.constant dense<0.000000e+00> : vector<8x128xf32>
    %85 = tpu.matmul %81, %1, %cst_41 {dimension_numbers = #tpu.dot_dimension_numbers<[1], [0], [0], [1], [0, 0, 1, 1], [], []>} : vector<8x32xf32>, vector<32x128xf32>, vector<8x128xf32> -> vector<8x128xf32>
    %86 = arith.addf %84, %85 : vector<8x128xf32>
    %87 = arith.addf %86, %2 : vector<8x128xf32>
    %88 = arith.negf %87 : vector<8x128xf32>
    %89 = math.exp %88 : vector<8x128xf32>
    %cst_42 = arith.constant 1.000000e+00 : f32
    %90 = vector.broadcast %cst_42 : f32 to vector<8x128xf32>
    %91 = arith.addf %90, %89 : vector<8x128xf32>
    %92 = arith.divf %90, %91 : vector<8x128xf32>
    %93 = vector.extract_strided_slice %92 {offsets = [0, 0], sizes = [8, 32], strides = [1, 1]} : vector<8x128xf32> to vector<8x32xf32>
    %94 = vector.extract_strided_slice %92 {offsets = [0, 32], sizes = [8, 32], strides = [1, 1]} : vector<8x128xf32> to vector<8x32xf32>
    %95 = vector.extract_strided_slice %92 {offsets = [0, 64], sizes = [8, 32], strides = [1, 1]} : vector<8x128xf32> to vector<8x32xf32>
    %cst_43 = arith.constant 2.000000e+00 : f32
    %96 = vector.broadcast %cst_43 : f32 to vector<8x32xf32>
    %97 = arith.mulf %96, %95 : vector<8x32xf32>
    %cst_44 = arith.constant 1.000000e+00 : f32
    %98 = vector.broadcast %cst_44 : f32 to vector<8x32xf32>
    %99 = arith.subf %97, %98 : vector<8x32xf32>
    %100 = vector.extract_strided_slice %92 {offsets = [0, 96], sizes = [8, 32], strides = [1, 1]} : vector<8x128xf32> to vector<8x32xf32>
    %101 = arith.mulf %94, %79 : vector<8x32xf32>
    %102 = arith.mulf %93, %99 : vector<8x32xf32>
    %103 = arith.addf %101, %102 : vector<8x32xf32>
    %104 = math.tanh %103 : vector<8x32xf32>
    %105 = arith.mulf %100, %104 : vector<8x32xf32>
    %c4 = arith.constant 4 : index
    %c0_45 = arith.constant 0 : index
    %c0_46 = arith.constant 0 : index
    %106 = vector.load %arg1[%c4, %c0_45, %c0_46] : memref<8x8x32xf32, #tpu.memory_space<vmem>>, vector<1x8x32xf32>
    %107 = vector.shape_cast %106 : vector<1x8x32xf32> to vector<8x32xf32>
    %cst_47 = arith.constant dense<0.000000e+00> : vector<8x128xf32>
    %108 = tpu.matmul %107, %0, %cst_47 {dimension_numbers = #tpu.dot_dimension_numbers<[1], [0], [0], [1], [0, 0, 1, 1], [], []>} : vector<8x32xf32>, vector<32x128xf32>, vector<8x128xf32> -> vector<8x128xf32>
    %cst_48 = arith.constant dense<0.000000e+00> : vector<8x128xf32>
    %109 = tpu.matmul %105, %1, %cst_48 {dimension_numbers = #tpu.dot_dimension_numbers<[1], [0], [0], [1], [0, 0, 1, 1], [], []>} : vector<8x32xf32>, vector<32x128xf32>, vector<8x128xf32> -> vector<8x128xf32>
    %110 = arith.addf %108, %109 : vector<8x128xf32>
    %111 = arith.addf %110, %2 : vector<8x128xf32>
    %112 = arith.negf %111 : vector<8x128xf32>
    %113 = math.exp %112 : vector<8x128xf32>
    %cst_49 = arith.constant 1.000000e+00 : f32
    %114 = vector.broadcast %cst_49 : f32 to vector<8x128xf32>
    %115 = arith.addf %114, %113 : vector<8x128xf32>
    %116 = arith.divf %114, %115 : vector<8x128xf32>
    %117 = vector.extract_strided_slice %116 {offsets = [0, 0], sizes = [8, 32], strides = [1, 1]} : vector<8x128xf32> to vector<8x32xf32>
    %118 = vector.extract_strided_slice %116 {offsets = [0, 32], sizes = [8, 32], strides = [1, 1]} : vector<8x128xf32> to vector<8x32xf32>
    %119 = vector.extract_strided_slice %116 {offsets = [0, 64], sizes = [8, 32], strides = [1, 1]} : vector<8x128xf32> to vector<8x32xf32>
    %cst_50 = arith.constant 2.000000e+00 : f32
    %120 = vector.broadcast %cst_50 : f32 to vector<8x32xf32>
    %121 = arith.mulf %120, %119 : vector<8x32xf32>
    %cst_51 = arith.constant 1.000000e+00 : f32
    %122 = vector.broadcast %cst_51 : f32 to vector<8x32xf32>
    %123 = arith.subf %121, %122 : vector<8x32xf32>
    %124 = vector.extract_strided_slice %116 {offsets = [0, 96], sizes = [8, 32], strides = [1, 1]} : vector<8x128xf32> to vector<8x32xf32>
    %125 = arith.mulf %118, %103 : vector<8x32xf32>
    %126 = arith.mulf %117, %123 : vector<8x32xf32>
    %127 = arith.addf %125, %126 : vector<8x32xf32>
    %128 = math.tanh %127 : vector<8x32xf32>
    %129 = arith.mulf %124, %128 : vector<8x32xf32>
    %c5 = arith.constant 5 : index
    %c0_52 = arith.constant 0 : index
    %c0_53 = arith.constant 0 : index
    %130 = vector.load %arg1[%c5, %c0_52, %c0_53] : memref<8x8x32xf32, #tpu.memory_space<vmem>>, vector<1x8x32xf32>
    %131 = vector.shape_cast %130 : vector<1x8x32xf32> to vector<8x32xf32>
    %cst_54 = arith.constant dense<0.000000e+00> : vector<8x128xf32>
    %132 = tpu.matmul %131, %0, %cst_54 {dimension_numbers = #tpu.dot_dimension_numbers<[1], [0], [0], [1], [0, 0, 1, 1], [], []>} : vector<8x32xf32>, vector<32x128xf32>, vector<8x128xf32> -> vector<8x128xf32>
    %cst_55 = arith.constant dense<0.000000e+00> : vector<8x128xf32>
    %133 = tpu.matmul %129, %1, %cst_55 {dimension_numbers = #tpu.dot_dimension_numbers<[1], [0], [0], [1], [0, 0, 1, 1], [], []>} : vector<8x32xf32>, vector<32x128xf32>, vector<8x128xf32> -> vector<8x128xf32>
    %134 = arith.addf %132, %133 : vector<8x128xf32>
    %135 = arith.addf %134, %2 : vector<8x128xf32>
    %136 = arith.negf %135 : vector<8x128xf32>
    %137 = math.exp %136 : vector<8x128xf32>
    %cst_56 = arith.constant 1.000000e+00 : f32
    %138 = vector.broadcast %cst_56 : f32 to vector<8x128xf32>
    %139 = arith.addf %138, %137 : vector<8x128xf32>
    %140 = arith.divf %138, %139 : vector<8x128xf32>
    %141 = vector.extract_strided_slice %140 {offsets = [0, 0], sizes = [8, 32], strides = [1, 1]} : vector<8x128xf32> to vector<8x32xf32>
    %142 = vector.extract_strided_slice %140 {offsets = [0, 32], sizes = [8, 32], strides = [1, 1]} : vector<8x128xf32> to vector<8x32xf32>
    %143 = vector.extract_strided_slice %140 {offsets = [0, 64], sizes = [8, 32], strides = [1, 1]} : vector<8x128xf32> to vector<8x32xf32>
    %cst_57 = arith.constant 2.000000e+00 : f32
    %144 = vector.broadcast %cst_57 : f32 to vector<8x32xf32>
    %145 = arith.mulf %144, %143 : vector<8x32xf32>
    %cst_58 = arith.constant 1.000000e+00 : f32
    %146 = vector.broadcast %cst_58 : f32 to vector<8x32xf32>
    %147 = arith.subf %145, %146 : vector<8x32xf32>
    %148 = vector.extract_strided_slice %140 {offsets = [0, 96], sizes = [8, 32], strides = [1, 1]} : vector<8x128xf32> to vector<8x32xf32>
    %149 = arith.mulf %142, %127 : vector<8x32xf32>
    %150 = arith.mulf %141, %147 : vector<8x32xf32>
    %151 = arith.addf %149, %150 : vector<8x32xf32>
    %152 = math.tanh %151 : vector<8x32xf32>
    %153 = arith.mulf %148, %152 : vector<8x32xf32>
    %c6 = arith.constant 6 : index
    %c0_59 = arith.constant 0 : index
    %c0_60 = arith.constant 0 : index
    %154 = vector.load %arg1[%c6, %c0_59, %c0_60] : memref<8x8x32xf32, #tpu.memory_space<vmem>>, vector<1x8x32xf32>
    %155 = vector.shape_cast %154 : vector<1x8x32xf32> to vector<8x32xf32>
    %cst_61 = arith.constant dense<0.000000e+00> : vector<8x128xf32>
    %156 = tpu.matmul %155, %0, %cst_61 {dimension_numbers = #tpu.dot_dimension_numbers<[1], [0], [0], [1], [0, 0, 1, 1], [], []>} : vector<8x32xf32>, vector<32x128xf32>, vector<8x128xf32> -> vector<8x128xf32>
    %cst_62 = arith.constant dense<0.000000e+00> : vector<8x128xf32>
    %157 = tpu.matmul %153, %1, %cst_62 {dimension_numbers = #tpu.dot_dimension_numbers<[1], [0], [0], [1], [0, 0, 1, 1], [], []>} : vector<8x32xf32>, vector<32x128xf32>, vector<8x128xf32> -> vector<8x128xf32>
    %158 = arith.addf %156, %157 : vector<8x128xf32>
    %159 = arith.addf %158, %2 : vector<8x128xf32>
    %160 = arith.negf %159 : vector<8x128xf32>
    %161 = math.exp %160 : vector<8x128xf32>
    %cst_63 = arith.constant 1.000000e+00 : f32
    %162 = vector.broadcast %cst_63 : f32 to vector<8x128xf32>
    %163 = arith.addf %162, %161 : vector<8x128xf32>
    %164 = arith.divf %162, %163 : vector<8x128xf32>
    %165 = vector.extract_strided_slice %164 {offsets = [0, 0], sizes = [8, 32], strides = [1, 1]} : vector<8x128xf32> to vector<8x32xf32>
    %166 = vector.extract_strided_slice %164 {offsets = [0, 32], sizes = [8, 32], strides = [1, 1]} : vector<8x128xf32> to vector<8x32xf32>
    %167 = vector.extract_strided_slice %164 {offsets = [0, 64], sizes = [8, 32], strides = [1, 1]} : vector<8x128xf32> to vector<8x32xf32>
    %cst_64 = arith.constant 2.000000e+00 : f32
    %168 = vector.broadcast %cst_64 : f32 to vector<8x32xf32>
    %169 = arith.mulf %168, %167 : vector<8x32xf32>
    %cst_65 = arith.constant 1.000000e+00 : f32
    %170 = vector.broadcast %cst_65 : f32 to vector<8x32xf32>
    %171 = arith.subf %169, %170 : vector<8x32xf32>
    %172 = vector.extract_strided_slice %164 {offsets = [0, 96], sizes = [8, 32], strides = [1, 1]} : vector<8x128xf32> to vector<8x32xf32>
    %173 = arith.mulf %166, %151 : vector<8x32xf32>
    %174 = arith.mulf %165, %171 : vector<8x32xf32>
    %175 = arith.addf %173, %174 : vector<8x32xf32>
    %176 = math.tanh %175 : vector<8x32xf32>
    %177 = arith.mulf %172, %176 : vector<8x32xf32>
    %c7 = arith.constant 7 : index
    %c0_66 = arith.constant 0 : index
    %c0_67 = arith.constant 0 : index
    %178 = vector.load %arg1[%c7, %c0_66, %c0_67] : memref<8x8x32xf32, #tpu.memory_space<vmem>>, vector<1x8x32xf32>
    %179 = vector.shape_cast %178 : vector<1x8x32xf32> to vector<8x32xf32>
    %cst_68 = arith.constant dense<0.000000e+00> : vector<8x128xf32>
    %180 = tpu.matmul %179, %0, %cst_68 {dimension_numbers = #tpu.dot_dimension_numbers<[1], [0], [0], [1], [0, 0, 1, 1], [], []>} : vector<8x32xf32>, vector<32x128xf32>, vector<8x128xf32> -> vector<8x128xf32>
    %cst_69 = arith.constant dense<0.000000e+00> : vector<8x128xf32>
    %181 = tpu.matmul %177, %1, %cst_69 {dimension_numbers = #tpu.dot_dimension_numbers<[1], [0], [0], [1], [0, 0, 1, 1], [], []>} : vector<8x32xf32>, vector<32x128xf32>, vector<8x128xf32> -> vector<8x128xf32>
    %182 = arith.addf %180, %181 : vector<8x128xf32>
    %183 = arith.addf %182, %2 : vector<8x128xf32>
    %184 = arith.negf %183 : vector<8x128xf32>
    %185 = math.exp %184 : vector<8x128xf32>
    %cst_70 = arith.constant 1.000000e+00 : f32
    %186 = vector.broadcast %cst_70 : f32 to vector<8x128xf32>
    %187 = arith.addf %186, %185 : vector<8x128xf32>
    %188 = arith.divf %186, %187 : vector<8x128xf32>
    %189 = vector.extract_strided_slice %188 {offsets = [0, 0], sizes = [8, 32], strides = [1, 1]} : vector<8x128xf32> to vector<8x32xf32>
    %190 = vector.extract_strided_slice %188 {offsets = [0, 32], sizes = [8, 32], strides = [1, 1]} : vector<8x128xf32> to vector<8x32xf32>
    %191 = vector.extract_strided_slice %188 {offsets = [0, 64], sizes = [8, 32], strides = [1, 1]} : vector<8x128xf32> to vector<8x32xf32>
    %cst_71 = arith.constant 2.000000e+00 : f32
    %192 = vector.broadcast %cst_71 : f32 to vector<8x32xf32>
    %193 = arith.mulf %192, %191 : vector<8x32xf32>
    %cst_72 = arith.constant 1.000000e+00 : f32
    %194 = vector.broadcast %cst_72 : f32 to vector<8x32xf32>
    %195 = arith.subf %193, %194 : vector<8x32xf32>
    %196 = vector.extract_strided_slice %188 {offsets = [0, 96], sizes = [8, 32], strides = [1, 1]} : vector<8x128xf32> to vector<8x32xf32>
    %197 = arith.mulf %190, %175 : vector<8x32xf32>
    %198 = arith.mulf %189, %195 : vector<8x32xf32>
    %199 = arith.addf %197, %198 : vector<8x32xf32>
    %200 = math.tanh %199 : vector<8x32xf32>
    %201 = arith.mulf %196, %200 : vector<8x32xf32>
    %cst_73 = arith.constant 0.000000e+00 : f32
    %202 = vector.broadcast %cst_73 : f32 to vector<8x128xf32>
    %c0_74 = arith.constant 0 : index
    %c0_75 = arith.constant 0 : index
    %c0_76 = arith.constant 0 : index
    %203 = vector.load %arg12[%c0_74, %c0_75, %c0_76] : memref<8x8x128xf32, #tpu.memory_space<vmem>>, vector<1x8x128xf32>
    %204 = vector.shape_cast %203 : vector<1x8x128xf32> to vector<8x128xf32>
    %205 = vector.shape_cast %202 : vector<8x128xf32> to vector<1x8x128xf32>
    tpu.vector_store %arg12[%c0_74, %c0_75, %c0_76], %205 {strides = array<i32>} : memref<8x8x128xf32, #tpu.memory_space<vmem>>, vector<1x8x128xf32>,
    %206 = tpu.iota {dimensions = array<i32: 1>} : vector<8x128xi32>
    %c0_77 = arith.constant 0 : index
    %c0_78 = arith.constant 0 : index
    %c0_79 = arith.constant 0 : index
    %207 = vector.load %arg2[%c0_77, %c0_78, %c0_79] : memref<8x8x32xf32, #tpu.memory_space<vmem>>, vector<1x8x32xf32>
    %208 = vector.shape_cast %207 : vector<1x8x32xf32> to vector<8x32xf32>
    %cst_80 = arith.constant dense<0.000000e+00> : vector<8x128xf32>
    %209 = tpu.matmul %208, %3, %cst_80 {dimension_numbers = #tpu.dot_dimension_numbers<[1], [0], [0], [1], [0, 0, 1, 1], [], []>} : vector<8x32xf32>, vector<32x128xf32>, vector<8x128xf32> -> vector<8x128xf32>
    %cst_81 = arith.constant dense<0.000000e+00> : vector<8x128xf32>
    %210 = tpu.matmul %201, %4, %cst_81 {dimension_numbers = #tpu.dot_dimension_numbers<[1], [0], [0], [1], [0, 0, 1, 1], [], []>} : vector<8x32xf32>, vector<32x128xf32>, vector<8x128xf32> -> vector<8x128xf32>
    %211 = arith.addf %209, %210 : vector<8x128xf32>
    %212 = arith.addf %211, %5 : vector<8x128xf32>
    %213 = arith.negf %212 : vector<8x128xf32>
    %214 = math.exp %213 : vector<8x128xf32>
    %cst_82 = arith.constant 1.000000e+00 : f32
    %215 = vector.broadcast %cst_82 : f32 to vector<8x128xf32>
    %216 = arith.addf %215, %214 : vector<8x128xf32>
    %217 = arith.divf %215, %216 : vector<8x128xf32>
    %218 = vector.extract_strided_slice %217 {offsets = [0, 0], sizes = [8, 32], strides = [1, 1]} : vector<8x128xf32> to vector<8x32xf32>
    %219 = vector.extract_strided_slice %217 {offsets = [0, 32], sizes = [8, 32], strides = [1, 1]} : vector<8x128xf32> to vector<8x32xf32>
    %220 = vector.extract_strided_slice %217 {offsets = [0, 64], sizes = [8, 32], strides = [1, 1]} : vector<8x128xf32> to vector<8x32xf32>
    %cst_83 = arith.constant 2.000000e+00 : f32
    %221 = vector.broadcast %cst_83 : f32 to vector<8x32xf32>
    %222 = arith.mulf %221, %220 : vector<8x32xf32>
    %cst_84 = arith.constant 1.000000e+00 : f32
    %223 = vector.broadcast %cst_84 : f32 to vector<8x32xf32>
    %224 = arith.subf %222, %223 : vector<8x32xf32>
    %225 = vector.extract_strided_slice %217 {offsets = [0, 96], sizes = [8, 32], strides = [1, 1]} : vector<8x128xf32> to vector<8x32xf32>
    %226 = arith.mulf %219, %199 : vector<8x32xf32>
    %227 = arith.mulf %218, %224 : vector<8x32xf32>
    %228 = arith.addf %226, %227 : vector<8x32xf32>
    %229 = math.tanh %228 : vector<8x32xf32>
    %230 = arith.mulf %225, %229 : vector<8x32xf32>
    %cst_85 = arith.constant dense<0.000000e+00> : vector<8x128xf32>
    %231 = tpu.matmul %230, %6, %cst_85 {dimension_numbers = #tpu.dot_dimension_numbers<[1], [0], [0], [1], [0, 0, 1, 1], [], []>} : vector<8x32xf32>, vector<32x128xf32>, vector<8x128xf32> -> vector<8x128xf32>
    %232 = arith.addf %231, %7 : vector<8x128xf32>
    %c1_86 = arith.constant 1 : index
    %c0_87 = arith.constant 0 : index
    %c0_88 = arith.constant 0 : index
    %233 = vector.load %arg12[%c1_86, %c0_87, %c0_88] : memref<8x8x128xf32, #tpu.memory_space<vmem>>, vector<1x8x128xf32>
    %234 = vector.shape_cast %233 : vector<1x8x128xf32> to vector<8x128xf32>
    %235 = vector.shape_cast %232 : vector<8x128xf32> to vector<1x8x128xf32>
    tpu.vector_store %arg12[%c1_86, %c0_87, %c0_88], %235 {strides = array<i32>} : memref<8x8x128xf32, #tpu.memory_space<vmem>>, vector<1x8x128xf32>,
    %cst_89 = arith.constant dense<0xFF800000> : vector<8xf32>
    %236 = vector.multi_reduction <maximumf>, %232, %cst_89 [1] : vector<8x128xf32> to vector<8xf32>
    %237 = vector.shape_cast %236 : vector<8xf32> to vector<8x1xf32>
    %238 = vector.broadcast %237 : vector<8x1xf32> to vector<8x128xf32>
    %239 = arith.cmpf oge, %232, %238 : vector<8x128xf32>
    %c128_i32 = arith.constant 128 : i32
    %240 = vector.broadcast %c128_i32 : i32 to vector<8x128xi32>
    %241 = arith.select %239, %206, %240 : vector<8x128xi1>, vector<8x128xi32>
    %cst_90 = arith.constant dense<2147483647> : vector<8xi32>
    %242 = vector.multi_reduction <minsi>, %241, %cst_90 [1] : vector<8x128xi32> to vector<8xi32>
    %243 = vector.shape_cast %242 : vector<8xi32> to vector<8x1xi32>
    %244 = vector.broadcast %243 : vector<8x1xi32> to vector<8x128xi32>
    %245 = arith.cmpi eq, %206, %244 : vector<8x128xi32>
    %246 = arith.extui %245 : vector<8x128xi1> to vector<8x128xi32>
    %247 = arith.sitofp %246 : vector<8x128xi32> to vector<8x128xf32>
    %c0_91 = arith.constant 0 : index
    %c0_92 = arith.constant 0 : index
    %248 = vector.load %arg11[%c0_91, %c0_92] : memref<128x32xf32, #tpu.memory_space<vmem>>, vector<128x32xf32>
    %cst_93 = arith.constant dense<0.000000e+00> : vector<8x32xf32>
    %249 = tpu.matmul %247, %248, %cst_93 {dimension_numbers = #tpu.dot_dimension_numbers<[1], [0], [0], [1], [0, 0, 1, 1], [], []>} : vector<8x128xf32>, vector<128x32xf32>, vector<8x32xf32> -> vector<8x32xf32>
    %c1_94 = arith.constant 1 : index
    %250 = memref.load %arg0[%c1_94] : memref<8xi32, #tpu.memory_space<smem>>
    %c0_i32 = arith.constant 0 : i32
    %251 = arith.cmpi ne, %250, %c0_i32 : i32
    %252 = arith.extui %251 : i1 to i32
    %253 = arith.sitofp %252 : i32 to f32
    %c1_95 = arith.constant 1 : index
    %c0_96 = arith.constant 0 : index
    %c0_97 = arith.constant 0 : index
    %254 = vector.load %arg2[%c1_95, %c0_96, %c0_97] : memref<8x8x32xf32, #tpu.memory_space<vmem>>, vector<1x8x32xf32>
    %255 = vector.shape_cast %254 : vector<1x8x32xf32> to vector<8x32xf32>
    %256 = vector.broadcast %253 : f32 to vector<8x32xf32>
    %257 = arith.mulf %256, %255 : vector<8x32xf32>
    %cst_98 = arith.constant 1.000000e+00 : f32
    %258 = arith.subf %cst_98, %253 : f32
    %259 = vector.broadcast %258 : f32 to vector<8x32xf32>
    %260 = arith.mulf %259, %249 : vector<8x32xf32>
    %261 = arith.addf %257, %260 : vector<8x32xf32>
    %cst_99 = arith.constant dense<0.000000e+00> : vector<8x128xf32>
    %262 = tpu.matmul %261, %3, %cst_99 {dimension_numbers = #tpu.dot_dimension_numbers<[1], [0], [0], [1], [0, 0, 1, 1], [], []>} : vector<8x32xf32>, vector<32x128xf32>, vector<8x128xf32> -> vector<8x128xf32>
    %cst_100 = arith.constant dense<0.000000e+00> : vector<8x128xf32>
    %263 = tpu.matmul %230, %4, %cst_100 {dimension_numbers = #tpu.dot_dimension_numbers<[1], [0], [0], [1], [0, 0, 1, 1], [], []>} : vector<8x32xf32>, vector<32x128xf32>, vector<8x128xf32> -> vector<8x128xf32>
    %264 = arith.addf %262, %263 : vector<8x128xf32>
    %265 = arith.addf %264, %5 : vector<8x128xf32>
    %266 = arith.negf %265 : vector<8x128xf32>
    %267 = math.exp %266 : vector<8x128xf32>
    %cst_101 = arith.constant 1.000000e+00 : f32
    %268 = vector.broadcast %cst_101 : f32 to vector<8x128xf32>
    %269 = arith.addf %268, %267 : vector<8x128xf32>
    %270 = arith.divf %268, %269 : vector<8x128xf32>
    %271 = vector.extract_strided_slice %270 {offsets = [0, 0], sizes = [8, 32], strides = [1, 1]} : vector<8x128xf32> to vector<8x32xf32>
    %272 = vector.extract_strided_slice %270 {offsets = [0, 32], sizes = [8, 32], strides = [1, 1]} : vector<8x128xf32> to vector<8x32xf32>
    %273 = vector.extract_strided_slice %270 {offsets = [0, 64], sizes = [8, 32], strides = [1, 1]} : vector<8x128xf32> to vector<8x32xf32>
    %cst_102 = arith.constant 2.000000e+00 : f32
    %274 = vector.broadcast %cst_102 : f32 to vector<8x32xf32>
    %275 = arith.mulf %274, %273 : vector<8x32xf32>
    %cst_103 = arith.constant 1.000000e+00 : f32
    %276 = vector.broadcast %cst_103 : f32 to vector<8x32xf32>
    %277 = arith.subf %275, %276 : vector<8x32xf32>
    %278 = vector.extract_strided_slice %270 {offsets = [0, 96], sizes = [8, 32], strides = [1, 1]} : vector<8x128xf32> to vector<8x32xf32>
    %279 = arith.mulf %272, %228 : vector<8x32xf32>
    %280 = arith.mulf %271, %277 : vector<8x32xf32>
    %281 = arith.addf %279, %280 : vector<8x32xf32>
    %282 = math.tanh %281 : vector<8x32xf32>
    %283 = arith.mulf %278, %282 : vector<8x32xf32>
    %cst_104 = arith.constant dense<0.000000e+00> : vector<8x128xf32>
    %284 = tpu.matmul %283, %6, %cst_104 {dimension_numbers = #tpu.dot_dimension_numbers<[1], [0], [0], [1], [0, 0, 1, 1], [], []>} : vector<8x32xf32>, vector<32x128xf32>, vector<8x128xf32> -> vector<8x128xf32>
    %285 = arith.addf %284, %7 : vector<8x128xf32>
    %c2_105 = arith.constant 2 : index
    %c0_106 = arith.constant 0 : index
    %c0_107 = arith.constant 0 : index
    %286 = vector.load %arg12[%c2_105, %c0_106, %c0_107] : memref<8x8x128xf32, #tpu.memory_space<vmem>>, vector<1x8x128xf32>
    %287 = vector.shape_cast %286 : vector<1x8x128xf32> to vector<8x128xf32>
    %288 = vector.shape_cast %285 : vector<8x128xf32> to vector<1x8x128xf32>
    tpu.vector_store %arg12[%c2_105, %c0_106, %c0_107], %288 {strides = array<i32>} : memref<8x8x128xf32, #tpu.memory_space<vmem>>, vector<1x8x128xf32>,
    %cst_108 = arith.constant dense<0xFF800000> : vector<8xf32>
    %289 = vector.multi_reduction <maximumf>, %285, %cst_108 [1] : vector<8x128xf32> to vector<8xf32>
    %290 = vector.shape_cast %289 : vector<8xf32> to vector<8x1xf32>
    %291 = vector.broadcast %290 : vector<8x1xf32> to vector<8x128xf32>
    %292 = arith.cmpf oge, %285, %291 : vector<8x128xf32>
    %c128_i32_109 = arith.constant 128 : i32
    %293 = vector.broadcast %c128_i32_109 : i32 to vector<8x128xi32>
    %294 = arith.select %292, %206, %293 : vector<8x128xi1>, vector<8x128xi32>
    %cst_110 = arith.constant dense<2147483647> : vector<8xi32>
    %295 = vector.multi_reduction <minsi>, %294, %cst_110 [1] : vector<8x128xi32> to vector<8xi32>
    %296 = vector.shape_cast %295 : vector<8xi32> to vector<8x1xi32>
    %297 = vector.broadcast %296 : vector<8x1xi32> to vector<8x128xi32>
    %298 = arith.cmpi eq, %206, %297 : vector<8x128xi32>
    %299 = arith.extui %298 : vector<8x128xi1> to vector<8x128xi32>
    %300 = arith.sitofp %299 : vector<8x128xi32> to vector<8x128xf32>
    %c0_111 = arith.constant 0 : index
    %c0_112 = arith.constant 0 : index
    %301 = vector.load %arg11[%c0_111, %c0_112] : memref<128x32xf32, #tpu.memory_space<vmem>>, vector<128x32xf32>
    %cst_113 = arith.constant dense<0.000000e+00> : vector<8x32xf32>
    %302 = tpu.matmul %300, %301, %cst_113 {dimension_numbers = #tpu.dot_dimension_numbers<[1], [0], [0], [1], [0, 0, 1, 1], [], []>} : vector<8x128xf32>, vector<128x32xf32>, vector<8x32xf32> -> vector<8x32xf32>
    %c2_114 = arith.constant 2 : index
    %303 = memref.load %arg0[%c2_114] : memref<8xi32, #tpu.memory_space<smem>>
    %c0_i32_115 = arith.constant 0 : i32
    %304 = arith.cmpi ne, %303, %c0_i32_115 : i32
    %305 = arith.extui %304 : i1 to i32
    %306 = arith.sitofp %305 : i32 to f32
    %c2_116 = arith.constant 2 : index
    %c0_117 = arith.constant 0 : index
    %c0_118 = arith.constant 0 : index
    %307 = vector.load %arg2[%c2_116, %c0_117, %c0_118] : memref<8x8x32xf32, #tpu.memory_space<vmem>>, vector<1x8x32xf32>
    %308 = vector.shape_cast %307 : vector<1x8x32xf32> to vector<8x32xf32>
    %309 = vector.broadcast %306 : f32 to vector<8x32xf32>
    %310 = arith.mulf %309, %308 : vector<8x32xf32>
    %cst_119 = arith.constant 1.000000e+00 : f32
    %311 = arith.subf %cst_119, %306 : f32
    %312 = vector.broadcast %311 : f32 to vector<8x32xf32>
    %313 = arith.mulf %312, %302 : vector<8x32xf32>
    %314 = arith.addf %310, %313 : vector<8x32xf32>
    %cst_120 = arith.constant dense<0.000000e+00> : vector<8x128xf32>
    %315 = tpu.matmul %314, %3, %cst_120 {dimension_numbers = #tpu.dot_dimension_numbers<[1], [0], [0], [1], [0, 0, 1, 1], [], []>} : vector<8x32xf32>, vector<32x128xf32>, vector<8x128xf32> -> vector<8x128xf32>
    %cst_121 = arith.constant dense<0.000000e+00> : vector<8x128xf32>
    %316 = tpu.matmul %283, %4, %cst_121 {dimension_numbers = #tpu.dot_dimension_numbers<[1], [0], [0], [1], [0, 0, 1, 1], [], []>} : vector<8x32xf32>, vector<32x128xf32>, vector<8x128xf32> -> vector<8x128xf32>
    %317 = arith.addf %315, %316 : vector<8x128xf32>
    %318 = arith.addf %317, %5 : vector<8x128xf32>
    %319 = arith.negf %318 : vector<8x128xf32>
    %320 = math.exp %319 : vector<8x128xf32>
    %cst_122 = arith.constant 1.000000e+00 : f32
    %321 = vector.broadcast %cst_122 : f32 to vector<8x128xf32>
    %322 = arith.addf %321, %320 : vector<8x128xf32>
    %323 = arith.divf %321, %322 : vector<8x128xf32>
    %324 = vector.extract_strided_slice %323 {offsets = [0, 0], sizes = [8, 32], strides = [1, 1]} : vector<8x128xf32> to vector<8x32xf32>
    %325 = vector.extract_strided_slice %323 {offsets = [0, 32], sizes = [8, 32], strides = [1, 1]} : vector<8x128xf32> to vector<8x32xf32>
    %326 = vector.extract_strided_slice %323 {offsets = [0, 64], sizes = [8, 32], strides = [1, 1]} : vector<8x128xf32> to vector<8x32xf32>
    %cst_123 = arith.constant 2.000000e+00 : f32
    %327 = vector.broadcast %cst_123 : f32 to vector<8x32xf32>
    %328 = arith.mulf %327, %326 : vector<8x32xf32>
    %cst_124 = arith.constant 1.000000e+00 : f32
    %329 = vector.broadcast %cst_124 : f32 to vector<8x32xf32>
    %330 = arith.subf %328, %329 : vector<8x32xf32>
    %331 = vector.extract_strided_slice %323 {offsets = [0, 96], sizes = [8, 32], strides = [1, 1]} : vector<8x128xf32> to vector<8x32xf32>
    %332 = arith.mulf %325, %281 : vector<8x32xf32>
    %333 = arith.mulf %324, %330 : vector<8x32xf32>
    %334 = arith.addf %332, %333 : vector<8x32xf32>
    %335 = math.tanh %334 : vector<8x32xf32>
    %336 = arith.mulf %331, %335 : vector<8x32xf32>
    %cst_125 = arith.constant dense<0.000000e+00> : vector<8x128xf32>
    %337 = tpu.matmul %336, %6, %cst_125 {dimension_numbers = #tpu.dot_dimension_numbers<[1], [0], [0], [1], [0, 0, 1, 1], [], []>} : vector<8x32xf32>, vector<32x128xf32>, vector<8x128xf32> -> vector<8x128xf32>
    %338 = arith.addf %337, %7 : vector<8x128xf32>
    %c3_126 = arith.constant 3 : index
    %c0_127 = arith.constant 0 : index
    %c0_128 = arith.constant 0 : index
    %339 = vector.load %arg12[%c3_126, %c0_127, %c0_128] : memref<8x8x128xf32, #tpu.memory_space<vmem>>, vector<1x8x128xf32>
    %340 = vector.shape_cast %339 : vector<1x8x128xf32> to vector<8x128xf32>
    %341 = vector.shape_cast %338 : vector<8x128xf32> to vector<1x8x128xf32>
    tpu.vector_store %arg12[%c3_126, %c0_127, %c0_128], %341 {strides = array<i32>} : memref<8x8x128xf32, #tpu.memory_space<vmem>>, vector<1x8x128xf32>,
    %cst_129 = arith.constant dense<0xFF800000> : vector<8xf32>
    %342 = vector.multi_reduction <maximumf>, %338, %cst_129 [1] : vector<8x128xf32> to vector<8xf32>
    %343 = vector.shape_cast %342 : vector<8xf32> to vector<8x1xf32>
    %344 = vector.broadcast %343 : vector<8x1xf32> to vector<8x128xf32>
    %345 = arith.cmpf oge, %338, %344 : vector<8x128xf32>
    %c128_i32_130 = arith.constant 128 : i32
    %346 = vector.broadcast %c128_i32_130 : i32 to vector<8x128xi32>
    %347 = arith.select %345, %206, %346 : vector<8x128xi1>, vector<8x128xi32>
    %cst_131 = arith.constant dense<2147483647> : vector<8xi32>
    %348 = vector.multi_reduction <minsi>, %347, %cst_131 [1] : vector<8x128xi32> to vector<8xi32>
    %349 = vector.shape_cast %348 : vector<8xi32> to vector<8x1xi32>
    %350 = vector.broadcast %349 : vector<8x1xi32> to vector<8x128xi32>
    %351 = arith.cmpi eq, %206, %350 : vector<8x128xi32>
    %352 = arith.extui %351 : vector<8x128xi1> to vector<8x128xi32>
    %353 = arith.sitofp %352 : vector<8x128xi32> to vector<8x128xf32>
    %c0_132 = arith.constant 0 : index
    %c0_133 = arith.constant 0 : index
    %354 = vector.load %arg11[%c0_132, %c0_133] : memref<128x32xf32, #tpu.memory_space<vmem>>, vector<128x32xf32>
    %cst_134 = arith.constant dense<0.000000e+00> : vector<8x32xf32>
    %355 = tpu.matmul %353, %354, %cst_134 {dimension_numbers = #tpu.dot_dimension_numbers<[1], [0], [0], [1], [0, 0, 1, 1], [], []>} : vector<8x128xf32>, vector<128x32xf32>, vector<8x32xf32> -> vector<8x32xf32>
    %c3_135 = arith.constant 3 : index
    %356 = memref.load %arg0[%c3_135] : memref<8xi32, #tpu.memory_space<smem>>
    %c0_i32_136 = arith.constant 0 : i32
    %357 = arith.cmpi ne, %356, %c0_i32_136 : i32
    %358 = arith.extui %357 : i1 to i32
    %359 = arith.sitofp %358 : i32 to f32
    %c3_137 = arith.constant 3 : index
    %c0_138 = arith.constant 0 : index
    %c0_139 = arith.constant 0 : index
    %360 = vector.load %arg2[%c3_137, %c0_138, %c0_139] : memref<8x8x32xf32, #tpu.memory_space<vmem>>, vector<1x8x32xf32>
    %361 = vector.shape_cast %360 : vector<1x8x32xf32> to vector<8x32xf32>
    %362 = vector.broadcast %359 : f32 to vector<8x32xf32>
    %363 = arith.mulf %362, %361 : vector<8x32xf32>
    %cst_140 = arith.constant 1.000000e+00 : f32
    %364 = arith.subf %cst_140, %359 : f32
    %365 = vector.broadcast %364 : f32 to vector<8x32xf32>
    %366 = arith.mulf %365, %355 : vector<8x32xf32>
    %367 = arith.addf %363, %366 : vector<8x32xf32>
    %cst_141 = arith.constant dense<0.000000e+00> : vector<8x128xf32>
    %368 = tpu.matmul %367, %3, %cst_141 {dimension_numbers = #tpu.dot_dimension_numbers<[1], [0], [0], [1], [0, 0, 1, 1], [], []>} : vector<8x32xf32>, vector<32x128xf32>, vector<8x128xf32> -> vector<8x128xf32>
    %cst_142 = arith.constant dense<0.000000e+00> : vector<8x128xf32>
    %369 = tpu.matmul %336, %4, %cst_142 {dimension_numbers = #tpu.dot_dimension_numbers<[1], [0], [0], [1], [0, 0, 1, 1], [], []>} : vector<8x32xf32>, vector<32x128xf32>, vector<8x128xf32> -> vector<8x128xf32>
    %370 = arith.addf %368, %369 : vector<8x128xf32>
    %371 = arith.addf %370, %5 : vector<8x128xf32>
    %372 = arith.negf %371 : vector<8x128xf32>
    %373 = math.exp %372 : vector<8x128xf32>
    %cst_143 = arith.constant 1.000000e+00 : f32
    %374 = vector.broadcast %cst_143 : f32 to vector<8x128xf32>
    %375 = arith.addf %374, %373 : vector<8x128xf32>
    %376 = arith.divf %374, %375 : vector<8x128xf32>
    %377 = vector.extract_strided_slice %376 {offsets = [0, 0], sizes = [8, 32], strides = [1, 1]} : vector<8x128xf32> to vector<8x32xf32>
    %378 = vector.extract_strided_slice %376 {offsets = [0, 32], sizes = [8, 32], strides = [1, 1]} : vector<8x128xf32> to vector<8x32xf32>
    %379 = vector.extract_strided_slice %376 {offsets = [0, 64], sizes = [8, 32], strides = [1, 1]} : vector<8x128xf32> to vector<8x32xf32>
    %cst_144 = arith.constant 2.000000e+00 : f32
    %380 = vector.broadcast %cst_144 : f32 to vector<8x32xf32>
    %381 = arith.mulf %380, %379 : vector<8x32xf32>
    %cst_145 = arith.constant 1.000000e+00 : f32
    %382 = vector.broadcast %cst_145 : f32 to vector<8x32xf32>
    %383 = arith.subf %381, %382 : vector<8x32xf32>
    %384 = vector.extract_strided_slice %376 {offsets = [0, 96], sizes = [8, 32], strides = [1, 1]} : vector<8x128xf32> to vector<8x32xf32>
    %385 = arith.mulf %378, %334 : vector<8x32xf32>
    %386 = arith.mulf %377, %383 : vector<8x32xf32>
    %387 = arith.addf %385, %386 : vector<8x32xf32>
    %388 = math.tanh %387 : vector<8x32xf32>
    %389 = arith.mulf %384, %388 : vector<8x32xf32>
    %cst_146 = arith.constant dense<0.000000e+00> : vector<8x128xf32>
    %390 = tpu.matmul %389, %6, %cst_146 {dimension_numbers = #tpu.dot_dimension_numbers<[1], [0], [0], [1], [0, 0, 1, 1], [], []>} : vector<8x32xf32>, vector<32x128xf32>, vector<8x128xf32> -> vector<8x128xf32>
    %391 = arith.addf %390, %7 : vector<8x128xf32>
    %c4_147 = arith.constant 4 : index
    %c0_148 = arith.constant 0 : index
    %c0_149 = arith.constant 0 : index
    %392 = vector.load %arg12[%c4_147, %c0_148, %c0_149] : memref<8x8x128xf32, #tpu.memory_space<vmem>>, vector<1x8x128xf32>
    %393 = vector.shape_cast %392 : vector<1x8x128xf32> to vector<8x128xf32>
    %394 = vector.shape_cast %391 : vector<8x128xf32> to vector<1x8x128xf32>
    tpu.vector_store %arg12[%c4_147, %c0_148, %c0_149], %394 {strides = array<i32>} : memref<8x8x128xf32, #tpu.memory_space<vmem>>, vector<1x8x128xf32>,
    %cst_150 = arith.constant dense<0xFF800000> : vector<8xf32>
    %395 = vector.multi_reduction <maximumf>, %391, %cst_150 [1] : vector<8x128xf32> to vector<8xf32>
    %396 = vector.shape_cast %395 : vector<8xf32> to vector<8x1xf32>
    %397 = vector.broadcast %396 : vector<8x1xf32> to vector<8x128xf32>
    %398 = arith.cmpf oge, %391, %397 : vector<8x128xf32>
    %c128_i32_151 = arith.constant 128 : i32
    %399 = vector.broadcast %c128_i32_151 : i32 to vector<8x128xi32>
    %400 = arith.select %398, %206, %399 : vector<8x128xi1>, vector<8x128xi32>
    %cst_152 = arith.constant dense<2147483647> : vector<8xi32>
    %401 = vector.multi_reduction <minsi>, %400, %cst_152 [1] : vector<8x128xi32> to vector<8xi32>
    %402 = vector.shape_cast %401 : vector<8xi32> to vector<8x1xi32>
    %403 = vector.broadcast %402 : vector<8x1xi32> to vector<8x128xi32>
    %404 = arith.cmpi eq, %206, %403 : vector<8x128xi32>
    %405 = arith.extui %404 : vector<8x128xi1> to vector<8x128xi32>
    %406 = arith.sitofp %405 : vector<8x128xi32> to vector<8x128xf32>
    %c0_153 = arith.constant 0 : index
    %c0_154 = arith.constant 0 : index
    %407 = vector.load %arg11[%c0_153, %c0_154] : memref<128x32xf32, #tpu.memory_space<vmem>>, vector<128x32xf32>
    %cst_155 = arith.constant dense<0.000000e+00> : vector<8x32xf32>
    %408 = tpu.matmul %406, %407, %cst_155 {dimension_numbers = #tpu.dot_dimension_numbers<[1], [0], [0], [1], [0, 0, 1, 1], [], []>} : vector<8x128xf32>, vector<128x32xf32>, vector<8x32xf32> -> vector<8x32xf32>
    %c4_156 = arith.constant 4 : index
    %409 = memref.load %arg0[%c4_156] : memref<8xi32, #tpu.memory_space<smem>>
    %c0_i32_157 = arith.constant 0 : i32
    %410 = arith.cmpi ne, %409, %c0_i32_157 : i32
    %411 = arith.extui %410 : i1 to i32
    %412 = arith.sitofp %411 : i32 to f32
    %c4_158 = arith.constant 4 : index
    %c0_159 = arith.constant 0 : index
    %c0_160 = arith.constant 0 : index
    %413 = vector.load %arg2[%c4_158, %c0_159, %c0_160] : memref<8x8x32xf32, #tpu.memory_space<vmem>>, vector<1x8x32xf32>
    %414 = vector.shape_cast %413 : vector<1x8x32xf32> to vector<8x32xf32>
    %415 = vector.broadcast %412 : f32 to vector<8x32xf32>
    %416 = arith.mulf %415, %414 : vector<8x32xf32>
    %cst_161 = arith.constant 1.000000e+00 : f32
    %417 = arith.subf %cst_161, %412 : f32
    %418 = vector.broadcast %417 : f32 to vector<8x32xf32>
    %419 = arith.mulf %418, %408 : vector<8x32xf32>
    %420 = arith.addf %416, %419 : vector<8x32xf32>
    %cst_162 = arith.constant dense<0.000000e+00> : vector<8x128xf32>
    %421 = tpu.matmul %420, %3, %cst_162 {dimension_numbers = #tpu.dot_dimension_numbers<[1], [0], [0], [1], [0, 0, 1, 1], [], []>} : vector<8x32xf32>, vector<32x128xf32>, vector<8x128xf32> -> vector<8x128xf32>
    %cst_163 = arith.constant dense<0.000000e+00> : vector<8x128xf32>
    %422 = tpu.matmul %389, %4, %cst_163 {dimension_numbers = #tpu.dot_dimension_numbers<[1], [0], [0], [1], [0, 0, 1, 1], [], []>} : vector<8x32xf32>, vector<32x128xf32>, vector<8x128xf32> -> vector<8x128xf32>
    %423 = arith.addf %421, %422 : vector<8x128xf32>
    %424 = arith.addf %423, %5 : vector<8x128xf32>
    %425 = arith.negf %424 : vector<8x128xf32>
    %426 = math.exp %425 : vector<8x128xf32>
    %cst_164 = arith.constant 1.000000e+00 : f32
    %427 = vector.broadcast %cst_164 : f32 to vector<8x128xf32>
    %428 = arith.addf %427, %426 : vector<8x128xf32>
    %429 = arith.divf %427, %428 : vector<8x128xf32>
    %430 = vector.extract_strided_slice %429 {offsets = [0, 0], sizes = [8, 32], strides = [1, 1]} : vector<8x128xf32> to vector<8x32xf32>
    %431 = vector.extract_strided_slice %429 {offsets = [0, 32], sizes = [8, 32], strides = [1, 1]} : vector<8x128xf32> to vector<8x32xf32>
    %432 = vector.extract_strided_slice %429 {offsets = [0, 64], sizes = [8, 32], strides = [1, 1]} : vector<8x128xf32> to vector<8x32xf32>
    %cst_165 = arith.constant 2.000000e+00 : f32
    %433 = vector.broadcast %cst_165 : f32 to vector<8x32xf32>
    %434 = arith.mulf %433, %432 : vector<8x32xf32>
    %cst_166 = arith.constant 1.000000e+00 : f32
    %435 = vector.broadcast %cst_166 : f32 to vector<8x32xf32>
    %436 = arith.subf %434, %435 : vector<8x32xf32>
    %437 = vector.extract_strided_slice %429 {offsets = [0, 96], sizes = [8, 32], strides = [1, 1]} : vector<8x128xf32> to vector<8x32xf32>
    %438 = arith.mulf %431, %387 : vector<8x32xf32>
    %439 = arith.mulf %430, %436 : vector<8x32xf32>
    %440 = arith.addf %438, %439 : vector<8x32xf32>
    %441 = math.tanh %440 : vector<8x32xf32>
    %442 = arith.mulf %437, %441 : vector<8x32xf32>
    %cst_167 = arith.constant dense<0.000000e+00> : vector<8x128xf32>
    %443 = tpu.matmul %442, %6, %cst_167 {dimension_numbers = #tpu.dot_dimension_numbers<[1], [0], [0], [1], [0, 0, 1, 1], [], []>} : vector<8x32xf32>, vector<32x128xf32>, vector<8x128xf32> -> vector<8x128xf32>
    %444 = arith.addf %443, %7 : vector<8x128xf32>
    %c5_168 = arith.constant 5 : index
    %c0_169 = arith.constant 0 : index
    %c0_170 = arith.constant 0 : index
    %445 = vector.load %arg12[%c5_168, %c0_169, %c0_170] : memref<8x8x128xf32, #tpu.memory_space<vmem>>, vector<1x8x128xf32>
    %446 = vector.shape_cast %445 : vector<1x8x128xf32> to vector<8x128xf32>
    %447 = vector.shape_cast %444 : vector<8x128xf32> to vector<1x8x128xf32>
    tpu.vector_store %arg12[%c5_168, %c0_169, %c0_170], %447 {strides = array<i32>} : memref<8x8x128xf32, #tpu.memory_space<vmem>>, vector<1x8x128xf32>,
    %cst_171 = arith.constant dense<0xFF800000> : vector<8xf32>
    %448 = vector.multi_reduction <maximumf>, %444, %cst_171 [1] : vector<8x128xf32> to vector<8xf32>
    %449 = vector.shape_cast %448 : vector<8xf32> to vector<8x1xf32>
    %450 = vector.broadcast %449 : vector<8x1xf32> to vector<8x128xf32>
    %451 = arith.cmpf oge, %444, %450 : vector<8x128xf32>
    %c128_i32_172 = arith.constant 128 : i32
    %452 = vector.broadcast %c128_i32_172 : i32 to vector<8x128xi32>
    %453 = arith.select %451, %206, %452 : vector<8x128xi1>, vector<8x128xi32>
    %cst_173 = arith.constant dense<2147483647> : vector<8xi32>
    %454 = vector.multi_reduction <minsi>, %453, %cst_173 [1] : vector<8x128xi32> to vector<8xi32>
    %455 = vector.shape_cast %454 : vector<8xi32> to vector<8x1xi32>
    %456 = vector.broadcast %455 : vector<8x1xi32> to vector<8x128xi32>
    %457 = arith.cmpi eq, %206, %456 : vector<8x128xi32>
    %458 = arith.extui %457 : vector<8x128xi1> to vector<8x128xi32>
    %459 = arith.sitofp %458 : vector<8x128xi32> to vector<8x128xf32>
    %c0_174 = arith.constant 0 : index
    %c0_175 = arith.constant 0 : index
    %460 = vector.load %arg11[%c0_174, %c0_175] : memref<128x32xf32, #tpu.memory_space<vmem>>, vector<128x32xf32>
    %cst_176 = arith.constant dense<0.000000e+00> : vector<8x32xf32>
    %461 = tpu.matmul %459, %460, %cst_176 {dimension_numbers = #tpu.dot_dimension_numbers<[1], [0], [0], [1], [0, 0, 1, 1], [], []>} : vector<8x128xf32>, vector<128x32xf32>, vector<8x32xf32> -> vector<8x32xf32>
    %c5_177 = arith.constant 5 : index
    %462 = memref.load %arg0[%c5_177] : memref<8xi32, #tpu.memory_space<smem>>
    %c0_i32_178 = arith.constant 0 : i32
    %463 = arith.cmpi ne, %462, %c0_i32_178 : i32
    %464 = arith.extui %463 : i1 to i32
    %465 = arith.sitofp %464 : i32 to f32
    %c5_179 = arith.constant 5 : index
    %c0_180 = arith.constant 0 : index
    %c0_181 = arith.constant 0 : index
    %466 = vector.load %arg2[%c5_179, %c0_180, %c0_181] : memref<8x8x32xf32, #tpu.memory_space<vmem>>, vector<1x8x32xf32>
    %467 = vector.shape_cast %466 : vector<1x8x32xf32> to vector<8x32xf32>
    %468 = vector.broadcast %465 : f32 to vector<8x32xf32>
    %469 = arith.mulf %468, %467 : vector<8x32xf32>
    %cst_182 = arith.constant 1.000000e+00 : f32
    %470 = arith.subf %cst_182, %465 : f32
    %471 = vector.broadcast %470 : f32 to vector<8x32xf32>
    %472 = arith.mulf %471, %461 : vector<8x32xf32>
    %473 = arith.addf %469, %472 : vector<8x32xf32>
    %cst_183 = arith.constant dense<0.000000e+00> : vector<8x128xf32>
    %474 = tpu.matmul %473, %3, %cst_183 {dimension_numbers = #tpu.dot_dimension_numbers<[1], [0], [0], [1], [0, 0, 1, 1], [], []>} : vector<8x32xf32>, vector<32x128xf32>, vector<8x128xf32> -> vector<8x128xf32>
    %cst_184 = arith.constant dense<0.000000e+00> : vector<8x128xf32>
    %475 = tpu.matmul %442, %4, %cst_184 {dimension_numbers = #tpu.dot_dimension_numbers<[1], [0], [0], [1], [0, 0, 1, 1], [], []>} : vector<8x32xf32>, vector<32x128xf32>, vector<8x128xf32> -> vector<8x128xf32>
    %476 = arith.addf %474, %475 : vector<8x128xf32>
    %477 = arith.addf %476, %5 : vector<8x128xf32>
    %478 = arith.negf %477 : vector<8x128xf32>
    %479 = math.exp %478 : vector<8x128xf32>
    %cst_185 = arith.constant 1.000000e+00 : f32
    %480 = vector.broadcast %cst_185 : f32 to vector<8x128xf32>
    %481 = arith.addf %480, %479 : vector<8x128xf32>
    %482 = arith.divf %480, %481 : vector<8x128xf32>
    %483 = vector.extract_strided_slice %482 {offsets = [0, 0], sizes = [8, 32], strides = [1, 1]} : vector<8x128xf32> to vector<8x32xf32>
    %484 = vector.extract_strided_slice %482 {offsets = [0, 32], sizes = [8, 32], strides = [1, 1]} : vector<8x128xf32> to vector<8x32xf32>
    %485 = vector.extract_strided_slice %482 {offsets = [0, 64], sizes = [8, 32], strides = [1, 1]} : vector<8x128xf32> to vector<8x32xf32>
    %cst_186 = arith.constant 2.000000e+00 : f32
    %486 = vector.broadcast %cst_186 : f32 to vector<8x32xf32>
    %487 = arith.mulf %486, %485 : vector<8x32xf32>
    %cst_187 = arith.constant 1.000000e+00 : f32
    %488 = vector.broadcast %cst_187 : f32 to vector<8x32xf32>
    %489 = arith.subf %487, %488 : vector<8x32xf32>
    %490 = vector.extract_strided_slice %482 {offsets = [0, 96], sizes = [8, 32], strides = [1, 1]} : vector<8x128xf32> to vector<8x32xf32>
    %491 = arith.mulf %484, %440 : vector<8x32xf32>
    %492 = arith.mulf %483, %489 : vector<8x32xf32>
    %493 = arith.addf %491, %492 : vector<8x32xf32>
    %494 = math.tanh %493 : vector<8x32xf32>
    %495 = arith.mulf %490, %494 : vector<8x32xf32>
    %cst_188 = arith.constant dense<0.000000e+00> : vector<8x128xf32>
    %496 = tpu.matmul %495, %6, %cst_188 {dimension_numbers = #tpu.dot_dimension_numbers<[1], [0], [0], [1], [0, 0, 1, 1], [], []>} : vector<8x32xf32>, vector<32x128xf32>, vector<8x128xf32> -> vector<8x128xf32>
    %497 = arith.addf %496, %7 : vector<8x128xf32>
    %c6_189 = arith.constant 6 : index
    %c0_190 = arith.constant 0 : index
    %c0_191 = arith.constant 0 : index
    %498 = vector.load %arg12[%c6_189, %c0_190, %c0_191] : memref<8x8x128xf32, #tpu.memory_space<vmem>>, vector<1x8x128xf32>
    %499 = vector.shape_cast %498 : vector<1x8x128xf32> to vector<8x128xf32>
    %500 = vector.shape_cast %497 : vector<8x128xf32> to vector<1x8x128xf32>
    tpu.vector_store %arg12[%c6_189, %c0_190, %c0_191], %500 {strides = array<i32>} : memref<8x8x128xf32, #tpu.memory_space<vmem>>, vector<1x8x128xf32>,
    %cst_192 = arith.constant dense<0xFF800000> : vector<8xf32>
    %501 = vector.multi_reduction <maximumf>, %497, %cst_192 [1] : vector<8x128xf32> to vector<8xf32>
    %502 = vector.shape_cast %501 : vector<8xf32> to vector<8x1xf32>
    %503 = vector.broadcast %502 : vector<8x1xf32> to vector<8x128xf32>
    %504 = arith.cmpf oge, %497, %503 : vector<8x128xf32>
    %c128_i32_193 = arith.constant 128 : i32
    %505 = vector.broadcast %c128_i32_193 : i32 to vector<8x128xi32>
    %506 = arith.select %504, %206, %505 : vector<8x128xi1>, vector<8x128xi32>
    %cst_194 = arith.constant dense<2147483647> : vector<8xi32>
    %507 = vector.multi_reduction <minsi>, %506, %cst_194 [1] : vector<8x128xi32> to vector<8xi32>
    %508 = vector.shape_cast %507 : vector<8xi32> to vector<8x1xi32>
    %509 = vector.broadcast %508 : vector<8x1xi32> to vector<8x128xi32>
    %510 = arith.cmpi eq, %206, %509 : vector<8x128xi32>
    %511 = arith.extui %510 : vector<8x128xi1> to vector<8x128xi32>
    %512 = arith.sitofp %511 : vector<8x128xi32> to vector<8x128xf32>
    %c0_195 = arith.constant 0 : index
    %c0_196 = arith.constant 0 : index
    %513 = vector.load %arg11[%c0_195, %c0_196] : memref<128x32xf32, #tpu.memory_space<vmem>>, vector<128x32xf32>
    %cst_197 = arith.constant dense<0.000000e+00> : vector<8x32xf32>
    %514 = tpu.matmul %512, %513, %cst_197 {dimension_numbers = #tpu.dot_dimension_numbers<[1], [0], [0], [1], [0, 0, 1, 1], [], []>} : vector<8x128xf32>, vector<128x32xf32>, vector<8x32xf32> -> vector<8x32xf32>
    %c6_198 = arith.constant 6 : index
    %515 = memref.load %arg0[%c6_198] : memref<8xi32, #tpu.memory_space<smem>>
    %c0_i32_199 = arith.constant 0 : i32
    %516 = arith.cmpi ne, %515, %c0_i32_199 : i32
    %517 = arith.extui %516 : i1 to i32
    %518 = arith.sitofp %517 : i32 to f32
    %c6_200 = arith.constant 6 : index
    %c0_201 = arith.constant 0 : index
    %c0_202 = arith.constant 0 : index
    %519 = vector.load %arg2[%c6_200, %c0_201, %c0_202] : memref<8x8x32xf32, #tpu.memory_space<vmem>>, vector<1x8x32xf32>
    %520 = vector.shape_cast %519 : vector<1x8x32xf32> to vector<8x32xf32>
    %521 = vector.broadcast %518 : f32 to vector<8x32xf32>
    %522 = arith.mulf %521, %520 : vector<8x32xf32>
    %cst_203 = arith.constant 1.000000e+00 : f32
    %523 = arith.subf %cst_203, %518 : f32
    %524 = vector.broadcast %523 : f32 to vector<8x32xf32>
    %525 = arith.mulf %524, %514 : vector<8x32xf32>
    %526 = arith.addf %522, %525 : vector<8x32xf32>
    %cst_204 = arith.constant dense<0.000000e+00> : vector<8x128xf32>
    %527 = tpu.matmul %526, %3, %cst_204 {dimension_numbers = #tpu.dot_dimension_numbers<[1], [0], [0], [1], [0, 0, 1, 1], [], []>} : vector<8x32xf32>, vector<32x128xf32>, vector<8x128xf32> -> vector<8x128xf32>
    %cst_205 = arith.constant dense<0.000000e+00> : vector<8x128xf32>
    %528 = tpu.matmul %495, %4, %cst_205 {dimension_numbers = #tpu.dot_dimension_numbers<[1], [0], [0], [1], [0, 0, 1, 1], [], []>} : vector<8x32xf32>, vector<32x128xf32>, vector<8x128xf32> -> vector<8x128xf32>
    %529 = arith.addf %527, %528 : vector<8x128xf32>
    %530 = arith.addf %529, %5 : vector<8x128xf32>
    %531 = arith.negf %530 : vector<8x128xf32>
    %532 = math.exp %531 : vector<8x128xf32>
    %cst_206 = arith.constant 1.000000e+00 : f32
    %533 = vector.broadcast %cst_206 : f32 to vector<8x128xf32>
    %534 = arith.addf %533, %532 : vector<8x128xf32>
    %535 = arith.divf %533, %534 : vector<8x128xf32>
    %536 = vector.extract_strided_slice %535 {offsets = [0, 0], sizes = [8, 32], strides = [1, 1]} : vector<8x128xf32> to vector<8x32xf32>
    %537 = vector.extract_strided_slice %535 {offsets = [0, 32], sizes = [8, 32], strides = [1, 1]} : vector<8x128xf32> to vector<8x32xf32>
    %538 = vector.extract_strided_slice %535 {offsets = [0, 64], sizes = [8, 32], strides = [1, 1]} : vector<8x128xf32> to vector<8x32xf32>
    %cst_207 = arith.constant 2.000000e+00 : f32
    %539 = vector.broadcast %cst_207 : f32 to vector<8x32xf32>
    %540 = arith.mulf %539, %538 : vector<8x32xf32>
    %cst_208 = arith.constant 1.000000e+00 : f32
    %541 = vector.broadcast %cst_208 : f32 to vector<8x32xf32>
    %542 = arith.subf %540, %541 : vector<8x32xf32>
    %543 = vector.extract_strided_slice %535 {offsets = [0, 96], sizes = [8, 32], strides = [1, 1]} : vector<8x128xf32> to vector<8x32xf32>
    %544 = arith.mulf %537, %493 : vector<8x32xf32>
    %545 = arith.mulf %536, %542 : vector<8x32xf32>
    %546 = arith.addf %544, %545 : vector<8x32xf32>
    %547 = math.tanh %546 : vector<8x32xf32>
    %548 = arith.mulf %543, %547 : vector<8x32xf32>
    %cst_209 = arith.constant dense<0.000000e+00> : vector<8x128xf32>
    %549 = tpu.matmul %548, %6, %cst_209 {dimension_numbers = #tpu.dot_dimension_numbers<[1], [0], [0], [1], [0, 0, 1, 1], [], []>} : vector<8x32xf32>, vector<32x128xf32>, vector<8x128xf32> -> vector<8x128xf32>
    %550 = arith.addf %549, %7 : vector<8x128xf32>
    %c7_210 = arith.constant 7 : index
    %c0_211 = arith.constant 0 : index
    %c0_212 = arith.constant 0 : index
    %551 = vector.load %arg12[%c7_210, %c0_211, %c0_212] : memref<8x8x128xf32, #tpu.memory_space<vmem>>, vector<1x8x128xf32>
    %552 = vector.shape_cast %551 : vector<1x8x128xf32> to vector<8x128xf32>
    %553 = vector.shape_cast %550 : vector<8x128xf32> to vector<1x8x128xf32>
    tpu.vector_store %arg12[%c7_210, %c0_211, %c0_212], %553 {strides = array<i32>} : memref<8x8x128xf32, #tpu.memory_space<vmem>>, vector<1x8x128xf32>,
    return
  }
}

</mosaic_0001>

<llo_original>
// kernel: seq2seq_forward.1
$region0: #{seq2seq_forward.1}
  #allocation0 [shape = 'u32[]', space=smem, size = 0x4, offset = 0x4, fixed_abs, tag = 'smem constant byte address 0x4 - core index']
  #allocation1 [shape = 'u32[144,128]{1,0:T(1,128)}', space=vmem, size = 0x12000, scoped, tag = 'internal scratch']
  %s0 = inlined_call_operand.vmem [shape: s32[8], index: 0, kind: input, shape index: {}]
  %s1 = inlined_call_operand.vmem [shape: f32[8,8,32], index: 1, kind: input, shape index: {}]
  %s2 = inlined_call_operand.vmem [shape: f32[8,8,32], index: 2, kind: input, shape index: {}]
  %s3 = inlined_call_operand.vmem [shape: f32[32,128], index: 3, kind: input, shape index: {}]
  %s4 = inlined_call_operand.vmem [shape: f32[32,128], index: 4, kind: input, shape index: {}]
  %s5 = inlined_call_operand.vmem [shape: f32[8,128], index: 5, kind: input, shape index: {}]
  %s6 = inlined_call_operand.vmem [shape: f32[32,128], index: 6, kind: input, shape index: {}]
  %s7 = inlined_call_operand.vmem [shape: f32[32,128], index: 7, kind: input, shape index: {}]
  %s8 = inlined_call_operand.vmem [shape: f32[8,128], index: 8, kind: input, shape index: {}]
  %s9 = inlined_call_operand.vmem [shape: f32[32,128], index: 9, kind: input, shape index: {}]
  %s10 = inlined_call_operand.vmem [shape: f32[8,128], index: 10, kind: input, shape index: {}]
  %s11 = inlined_call_operand.vmem [shape: f32[128,32], index: 11, kind: input, shape index: {}]
  %s12 = inlined_call_operand.hbm [shape: f32[8,8,128], index: 12, kind: output, shape index: {}]
  %s13 = sld [smem:[#allocation0]]
  $region62: #{seq2seq_forward.1} parent=0
    _
  %s15 = ssub.s32 1, %s13
  %s16 = scalar_select 0, %s15, %s13
  $region1: #{seq2seq_forward.1} parent=0
    #allocation2 [shape = 'u8[512]{0}', space=smem, size = 0x200, scoped, tag = 'input window, operand 0, single buffered']
    #allocation3 [shape = 's32[1]{0}', space=sflag, size = 0x4, scoped, tag = 'scoped memory for seq2seq_forward.1']
    #allocation4 [shape = 's32[1]{0}', space=sflag, size = 0x4, scoped, tag = 'scoped memory for seq2seq_forward.1']
    #allocation5 [shape = 'u8[32768]{0}', space=vmem, size = 0x8000, scoped, tag = 'output window, operand 0, single buffered']
    %17 = vsyncpa [#allocation4], 0
    %18 = vsyncpa [#allocation3], 0
    // Predicated region
    $region2: #{seq2seq_forward.1} parent=1 // pred_check
      _
    $region3: #{seq2seq_forward.1} parent=1 // pred_check_branch
      %20 = sbr.rel (0) target = $region5
    $region4: #{seq2seq_forward.1} parent=1 // pred_region
      %s22 = ssub.s32 16, 16
      %23 = vsyncadd [#allocation4], %s22
      %s25 = sshll.u32 %s0, 4
      %s26 = int_to_ptr.vmem [resolvable:$true] %s25
      %28 = dma.vmem_to_smem %s26, 16, [#allocation2], [#allocation4]
    $region5: #{seq2seq_forward.1} parent=1 // pred_fallthru
      _
    // Predicated region
    $region6: #{seq2seq_forward.1} parent=1 // pred_check
      _
    $region7: #{seq2seq_forward.1} parent=1 // pred_check_branch
      %30 = sbr.rel (0) target = $region9
    $region8: #{seq2seq_forward.1} parent=1 // pred_region
      _
    $region9: #{seq2seq_forward.1} parent=1 // pred_fallthru
      _
    // Predicated region
    $region10: #{seq2seq_forward.1} parent=1 // pred_check
      _
    $region11: #{seq2seq_forward.1} parent=1 // pred_check_branch
      %32 = sbr.rel (0) target = $region13
    $region12: #{seq2seq_forward.1} parent=1 // pred_region
      _
    $region13: #{seq2seq_forward.1} parent=1 // pred_fallthru
      _
    // Predicated region
    $region14: #{seq2seq_forward.1} parent=1 // pred_check
      _
    $region15: #{seq2seq_forward.1} parent=1 // pred_check_branch
      %34 = sbr.rel (0) target = $region17
    $region16: #{seq2seq_forward.1} parent=1 // pred_region
      _
    $region17: #{seq2seq_forward.1} parent=1 // pred_fallthru
      _
    // Predicated region
    $region18: #{seq2seq_forward.1} parent=1 // pred_check
      _
    $region19: #{seq2seq_forward.1} parent=1 // pred_check_branch
      %36 = sbr.rel (0) target = $region21
    $region20: #{seq2seq_forward.1} parent=1 // pred_region
      _
    $region21: #{seq2seq_forward.1} parent=1 // pred_fallthru
      _
    // Predicated region
    $region22: #{seq2seq_forward.1} parent=1 // pred_check
      _
    $region23: #{seq2seq_forward.1} parent=1 // pred_check_branch
      %38 = sbr.rel (0) target = $region25
    $region24: #{seq2seq_forward.1} parent=1 // pred_region
      _
    $region25: #{seq2seq_forward.1} parent=1 // pred_fallthru
      _
    // Predicated region
    $region26: #{seq2seq_forward.1} parent=1 // pred_check
      _
    $region27: #{seq2seq_forward.1} parent=1 // pred_check_branch
      %40 = sbr.rel (0) target = $region29
    $region28: #{seq2seq_forward.1} parent=1 // pred_region
      _
    $region29: #{seq2seq_forward.1} parent=1 // pred_fallthru
      _
    // Predicated region
    $region30: #{seq2seq_forward.1} parent=1 // pred_check
      _
    $region31: #{seq2seq_forward.1} parent=1 // pred_check_branch
      %42 = sbr.rel (0) target = $region33
    $region32: #{seq2seq_forward.1} parent=1 // pred_region
      _
    $region33: #{seq2seq_forward.1} parent=1 // pred_fallthru
      _
    // Predicated region
    $region34: #{seq2seq_forward.1} parent=1 // pred_check
      _
    $region35: #{seq2seq_forward.1} parent=1 // pred_check_branch
      %44 = sbr.rel (0) target = $region37
    $region36: #{seq2seq_forward.1} parent=1 // pred_region
      _
    $region37: #{seq2seq_forward.1} parent=1 // pred_fallthru
      _
    // Predicated region
    $region38: #{seq2seq_forward.1} parent=1 // pred_check
      _
    $region39: #{seq2seq_forward.1} parent=1 // pred_check_branch
      %46 = sbr.rel (0) target = $region41
    $region40: #{seq2seq_forward.1} parent=1 // pred_region
      _
    $region41: #{seq2seq_forward.1} parent=1 // pred_fallthru
      _
    // Predicated region
    $region42: #{seq2seq_forward.1} parent=1 // pred_check
      _
    $region43: #{seq2seq_forward.1} parent=1 // pred_check_branch
      %48 = sbr.rel (0) target = $region45
    $region44: #{seq2seq_forward.1} parent=1 // pred_region
      _
    $region45: #{seq2seq_forward.1} parent=1 // pred_fallthru
      _
    // Predicated region
    $region46: #{seq2seq_forward.1} parent=1 // pred_check
      _
    $region47: #{seq2seq_forward.1} parent=1 // pred_check_branch
      %50 = sbr.rel (0) target = $region49
    $region48: #{seq2seq_forward.1} parent=1 // pred_region
      _
    $region49: #{seq2seq_forward.1} parent=1 // pred_fallthru
      _
    // Predicated region
    $region50: #{seq2seq_forward.1} parent=1 // pred_check
      _
    $region51: #{seq2seq_forward.1} parent=1 // pred_check_branch
      %52 = sbr.rel (0) target = $region53
    $region52: #{seq2seq_forward.1} parent=1 // pred_region
      %53 = dma.done [#allocation4], 16
    $region53: #{seq2seq_forward.1} parent=1 // pred_fallthru
      _
    %54 = sfence
    %v55 = vld [vmem:[%s3] sm:$0xff]
    %v56 = vld [vmem:[%s3 + $0x8] sm:$0xff]
    %v57 = vld [vmem:[%s3 + $0x10] sm:$0xff]
    %v58 = vld [vmem:[%s3 + $0x18] sm:$0xff]
    %v59 = vld [vmem:[%s4] sm:$0xff]
    %v60 = vld [vmem:[%s4 + $0x8] sm:$0xff]
    %v61 = vld [vmem:[%s4 + $0x10] sm:$0xff]
    %v62 = vld [vmem:[%s4 + $0x18] sm:$0xff]
    %v63 = vld [vmem:[%s5] sm:$0xff]
    %v64 = vld [vmem:[%s6] sm:$0xff]
    %v65 = vld [vmem:[%s6 + $0x8] sm:$0xff]
    %v66 = vld [vmem:[%s6 + $0x10] sm:$0xff]
    %v67 = vld [vmem:[%s6 + $0x18] sm:$0xff]
    %v68 = vld [vmem:[%s7] sm:$0xff]
    %v69 = vld [vmem:[%s7 + $0x8] sm:$0xff]
    %v70 = vld [vmem:[%s7 + $0x10] sm:$0xff]
    %v71 = vld [vmem:[%s7 + $0x18] sm:$0xff]
    %v72 = vld [vmem:[%s8] sm:$0xff]
    %v73 = vld [vmem:[%s9] sm:$0xff]
    %v74 = vld [vmem:[%s9 + $0x8] sm:$0xff]
    %v75 = vld [vmem:[%s9 + $0x10] sm:$0xff]
    %v76 = vld [vmem:[%s9 + $0x18] sm:$0xff]
    %v77 = vld [vmem:[%s10] sm:$0xff]
    %v78 = vld [vmem:[%s1] sm:$0xff]
    %vm79 = vcmask 261120
    %v81 = vsel %vm79, 0.0, 0
    %83 = vmatprep.subr.mxu0 0.0
    %84 = vmatpush1.msra.mxu0 %v59
    %85 = vmatprep.subr.mxu0 0.0
    %86 = vmatpush1.msra.mxu0 %v60
    %87 = vmatprep.subr.mxu0 0.0
    %88 = vmatpush1.msra.mxu0 %v61
    %89 = vmatprep.subr.mxu0 0.0
    %90 = vmatpush1.msra.mxu0 %v62
    %91 = vmatprep.subr.mxu0 0.0
    %92 = vmatpush1.msra.mxu0 0.0
    %93 = vmatprep.subr.mxu0 0.0
    %94 = vmatpush1.msra.mxu0 0.0
    %95 = vmatprep.subr.mxu0 0.0
    %96 = vmatpush1.msra.mxu0 0.0
    %97 = vmatprep.subr.mxu0 0.0
    %98 = vmatpush1.msra.mxu0 0.0
    %99 = vmatprep.subr.mxu0 0.0
    %100 = vmatpush1.msra.mxu0 0.0
    %101 = vmatprep.subr.mxu0 0.0
    %102 = vmatpush1.msra.mxu0 0.0
    %103 = vmatprep.subr.mxu0 0.0
    %104 = vmatpush1.msra.mxu0 0.0
    %105 = vmatprep.subr.mxu0 0.0
    %106 = vmatpush1.msra.mxu0 0.0
    %107 = vmatprep.subr.mxu0 0.0
    %108 = vmatpush1.msra.mxu0 0.0
    %109 = vmatprep.subr.mxu0 0.0
    %110 = vmatpush1.msra.mxu0 0.0
    %111 = vmatprep.subr.mxu0 0.0
    %112 = vmatpush1.msra.mxu0 0.0
    %113 = vmatprep.subr.mxu0 0.0
    %114 = vmatpush1.msra.mxu0 0.0
    %115 = vmatprep.subr.mxu0 0.0
    %116 = vmatpush1.msra.mxu0 0.0
    %117 = vmatprep.subr.mxu0 0.0
    %118 = vmatpush1.msra.mxu0 0.0
    %119 = vmatprep.subr.mxu0 0.0
    %120 = vmatpush1.msra.mxu0 0.0
    %121 = vmatprep.subr.mxu0 0.0
    %122 = vmatpush1.msra.mxu0 0.0
    %123 = vmatprep.subr.mxu0 0.0
    %124 = vmatpush1.msra.mxu0 0.0
    %125 = vmatprep.subr.mxu0 0.0
    %126 = vmatpush1.msra.mxu0 0.0
    %127 = vmatprep.subr.mxu0 0.0
    %128 = vmatpush1.msra.mxu0 0.0
    %129 = vmatprep.subr.mxu0 0.0
    %130 = vmatpush1.msra.mxu0 0.0
    %131 = vmatprep.subr.mxu0 0.0
    %132 = vmatpush1.msra.mxu0 0.0
    %133 = vmatprep.subr.mxu0 0.0
    %134 = vmatpush1.msra.mxu0 0.0
    %135 = vmatprep.subr.mxu0 0.0
    %136 = vmatpush1.msra.mxu0 0.0
    %137 = vmatprep.subr.mxu0 0.0
    %138 = vmatpush1.msra.mxu0 0.0
    %139 = vmatprep.subr.mxu0 0.0
    %140 = vmatpush1.msra.mxu0 0.0
    %141 = vmatprep.subr.mxu0 0.0
    %142 = vmatpush1.msra.mxu0 0.0
    %143 = vmatprep.subr.mxu0 0.0
    %144 = vmatpush1.msra.mxu0 0.0
    %145 = vmatprep.subr.mxu0 0.0
    %146 = vmatpush1.msra.mxu0 0.0
    %147 = vmatprep.mubr.f32.mxu0 0.0
    %148 = vmatmul.mubr.f32.gmra.mrb[0].mxu0 %v81
    %v149 = vpop.f32.mrb[0].mxu0
    %v150 = vadd.f32 0.0, %v149
    %v151 = vpop.f32.mrb[0].mxu0
    %152 = vdwg.mxu0
    %v154 = vsel %vm79, %v78, 0
    %156 = vmatprep.subr.mxu0 0.0
    %157 = vmatpush1.msra.mxu0 %v55
    %158 = vmatprep.subr.mxu0 0.0
    %159 = vmatpush1.msra.mxu0 %v56
    %160 = vmatprep.subr.mxu0 0.0
    %161 = vmatpush1.msra.mxu0 %v57
    %162 = vmatprep.subr.mxu0 0.0
    %163 = vmatpush1.msra.mxu0 %v58
    %164 = vmatprep.subr.mxu0 0.0
    %165 = vmatpush1.msra.mxu0 0.0
    %166 = vmatprep.subr.mxu0 0.0
    %167 = vmatpush1.msra.mxu0 0.0
    %168 = vmatprep.subr.mxu0 0.0
    %169 = vmatpush1.msra.mxu0 0.0
    %170 = vmatprep.subr.mxu0 0.0
    %171 = vmatpush1.msra.mxu0 0.0
    %172 = vmatprep.subr.mxu0 0.0
    %173 = vmatpush1.msra.mxu0 0.0
    %174 = vmatprep.subr.mxu0 0.0
    %175 = vmatpush1.msra.mxu0 0.0
    %176 = vmatprep.subr.mxu0 0.0
    %177 = vmatpush1.msra.mxu0 0.0
    %178 = vmatprep.subr.mxu0 0.0
    %179 = vmatpush1.msra.mxu0 0.0
    %180 = vmatprep.subr.mxu0 0.0
    %181 = vmatpush1.msra.mxu0 0.0
    %182 = vmatprep.subr.mxu0 0.0
    %183 = vmatpush1.msra.mxu0 0.0
    %184 = vmatprep.subr.mxu0 0.0
    %185 = vmatpush1.msra.mxu0 0.0
    %186 = vmatprep.subr.mxu0 0.0
    %187 = vmatpush1.msra.mxu0 0.0
    %188 = vmatprep.subr.mxu0 0.0
    %189 = vmatpush1.msra.mxu0 0.0
    %190 = vmatprep.subr.mxu0 0.0
    %191 = vmatpush1.msra.mxu0 0.0
    %192 = vmatprep.subr.mxu0 0.0
    %193 = vmatpush1.msra.mxu0 0.0
    %194 = vmatprep.subr.mxu0 0.0
    %195 = vmatpush1.msra.mxu0 0.0
    %196 = vmatprep.subr.mxu0 0.0
    %197 = vmatpush1.msra.mxu0 0.0
    %198 = vmatprep.subr.mxu0 0.0
    %199 = vmatpush1.msra.mxu0 0.0
    %200 = vmatprep.subr.mxu0 0.0
    %201 = vmatpush1.msra.mxu0 0.0
    %202 = vmatprep.subr.mxu0 0.0
    %203 = vmatpush1.msra.mxu0 0.0
    %204 = vmatprep.subr.mxu0 0.0
    %205 = vmatpush1.msra.mxu0 0.0
    %206 = vmatprep.subr.mxu0 0.0
    %207 = vmatpush1.msra.mxu0 0.0
    %208 = vmatprep.subr.mxu0 0.0
    %209 = vmatpush1.msra.mxu0 0.0
    %210 = vmatprep.subr.mxu0 0.0
    %211 = vmatpush1.msra.mxu0 0.0
    %212 = vmatprep.subr.mxu0 0.0
    %213 = vmatpush1.msra.mxu0 0.0
    %214 = vmatprep.subr.mxu0 0.0
    %215 = vmatpush1.msra.mxu0 0.0
    %216 = vmatprep.subr.mxu0 0.0
    %217 = vmatpush1.msra.mxu0 0.0
    %218 = vmatprep.subr.mxu0 0.0
    %219 = vmatpush1.msra.mxu0 0.0
    %220 = vmatprep.mubr.f32.mxu0 0.0
    %221 = vmatmul.mubr.f32.gmra.mrb[0].mxu0 %v154
    %v222 = vpop.f32.mrb[0].mxu0
    %v223 = vadd.f32 %v150, %v222
    %v224 = vpop.f32.mrb[0].mxu0
    %225 = vdwg.mxu0
    %v226 = vadd.f32 %v223, %v63
    %v227 = vxor.u32 %v226, 2147483648
    %v228 = vmul.f32 %v227, 1.442695
    %v229 = vpow.pop %v228
    %v230 = vadd.f32 %v229, 1.0
    %v231 = vrcp.pop %v230
    %v232 = vmul.f32 1.0, %v231
    %v233 = vmul.f32 %v232, 2.0
    %v234 = vsub.f32 %v233, 1.0
    %v235 = vmul.f32 %v232, 0.0
    %237 = vrot.lane.b32.xlu0 %v234, 64
    %v238 = vpop.permute.xlu0 %237
    %v240 = vmul.f32 %v232, %v238
    %242 = vrot.lane.b32.xlu0 %v240, 32
    %v243 = vpop.permute.xlu0 %242
    %v245 = vadd.f32 %v235, %v243
    %v246 = vtanh.pop %v245
    %248 = vrot.lane.b32.xlu0 %v246, 64
    %v249 = vpop.permute.xlu0 %248
    %v251 = vmul.f32 %v232, %v249
    %s252 = scalar_lea.vmem %s1, 8
    %v253 = vld [vmem:[%s252] sm:$0xff]
    %255 = vrot.lane.b32.xlu0 %v251, 32
    %v256 = vpop.permute.xlu0 %255
    %v257 = vsel %vm79, %v256, 0
    %259 = vmatprep.subr.mxu0 0.0
    %260 = vmatpush1.msra.mxu0 %v59
    %261 = vmatprep.subr.mxu0 0.0
    %262 = vmatpush1.msra.mxu0 %v60
    %263 = vmatprep.subr.mxu0 0.0
    %264 = vmatpush1.msra.mxu0 %v61
    %265 = vmatprep.subr.mxu0 0.0
    %266 = vmatpush1.msra.mxu0 %v62
    %267 = vmatprep.subr.mxu0 0.0
    %268 = vmatpush1.msra.mxu0 0.0
    %269 = vmatprep.subr.mxu0 0.0
    %270 = vmatpush1.msra.mxu0 0.0
    %271 = vmatprep.subr.mxu0 0.0
    %272 = vmatpush1.msra.mxu0 0.0
    %273 = vmatprep.subr.mxu0 0.0
    %274 = vmatpush1.msra.mxu0 0.0
    %275 = vmatprep.subr.mxu0 0.0
    %276 = vmatpush1.msra.mxu0 0.0
    %277 = vmatprep.subr.mxu0 0.0
    %278 = vmatpush1.msra.mxu0 0.0
    %279 = vmatprep.subr.mxu0 0.0
    %280 = vmatpush1.msra.mxu0 0.0
    %281 = vmatprep.subr.mxu0 0.0
    %282 = vmatpush1.msra.mxu0 0.0
    %283 = vmatprep.subr.mxu0 0.0
    %284 = vmatpush1.msra.mxu0 0.0
    %285 = vmatprep.subr.mxu0 0.0
    %286 = vmatpush1.msra.mxu0 0.0
    %287 = vmatprep.subr.mxu0 0.0
    %288 = vmatpush1.msra.mxu0 0.0
    %289 = vmatprep.subr.mxu0 0.0
    %290 = vmatpush1.msra.mxu0 0.0
    %291 = vmatprep.subr.mxu0 0.0
    %292 = vmatpush1.msra.mxu0 0.0
    %293 = vmatprep.subr.mxu0 0.0
    %294 = vmatpush1.msra.mxu0 0.0
    %295 = vmatprep.subr.mxu0 0.0
    %296 = vmatpush1.msra.mxu0 0.0
    %297 = vmatprep.subr.mxu0 0.0
    %298 = vmatpush1.msra.mxu0 0.0
    %299 = vmatprep.subr.mxu0 0.0
    %300 = vmatpush1.msra.mxu0 0.0
    %301 = vmatprep.subr.mxu0 0.0
    %302 = vmatpush1.msra.mxu0 0.0
    %303 = vmatprep.subr.mxu0 0.0
    %304 = vmatpush1.msra.mxu0 0.0
    %305 = vmatprep.subr.mxu0 0.0
    %306 = vmatpush1.msra.mxu0 0.0
    %307 = vmatprep.subr.mxu0 0.0
    %308 = vmatpush1.msra.mxu0 0.0
    %309 = vmatprep.subr.mxu0 0.0
    %310 = vmatpush1.msra.mxu0 0.0
    %311 = vmatprep.subr.mxu0 0.0
    %312 = vmatpush1.msra.mxu0 0.0
    %313 = vmatprep.subr.mxu0 0.0
    %314 = vmatpush1.msra.mxu0 0.0
    %315 = vmatprep.subr.mxu0 0.0
    %316 = vmatpush1.msra.mxu0 0.0
    %317 = vmatprep.subr.mxu0 0.0
    %318 = vmatpush1.msra.mxu0 0.0
    %319 = vmatprep.subr.mxu0 0.0
    %320 = vmatpush1.msra.mxu0 0.0
    %321 = vmatprep.subr.mxu0 0.0
    %322 = vmatpush1.msra.mxu0 0.0
    %323 = vmatprep.mubr.f32.mxu0 0.0
    %324 = vmatmul.mubr.f32.gmra.mrb[0].mxu0 %v257
    %v325 = vpop.f32.mrb[0].mxu0
    %v326 = vadd.f32 0.0, %v325
    %v327 = vpop.f32.mrb[0].mxu0
    %328 = vdwg.mxu0
    %v330 = vsel %vm79, %v253, 0
    %332 = vmatprep.subr.mxu0 0.0
    %333 = vmatpush1.msra.mxu0 %v55
    %334 = vmatprep.subr.mxu0 0.0
    %335 = vmatpush1.msra.mxu0 %v56
    %336 = vmatprep.subr.mxu0 0.0
    %337 = vmatpush1.msra.mxu0 %v57
    %338 = vmatprep.subr.mxu0 0.0
    %339 = vmatpush1.msra.mxu0 %v58
    %340 = vmatprep.subr.mxu0 0.0
    %341 = vmatpush1.msra.mxu0 0.0
    %342 = vmatprep.subr.mxu0 0.0
    %343 = vmatpush1.msra.mxu0 0.0
    %344 = vmatprep.subr.mxu0 0.0
    %345 = vmatpush1.msra.mxu0 0.0
    %346 = vmatprep.subr.mxu0 0.0
    %347 = vmatpush1.msra.mxu0 0.0
    %348 = vmatprep.subr.mxu0 0.0
    %349 = vmatpush1.msra.mxu0 0.0
    %350 = vmatprep.subr.mxu0 0.0
    %351 = vmatpush1.msra.mxu0 0.0
    %352 = vmatprep.subr.mxu0 0.0
    %353 = vmatpush1.msra.mxu0 0.0
    %354 = vmatprep.subr.mxu0 0.0
    %355 = vmatpush1.msra.mxu0 0.0
    %356 = vmatprep.subr.mxu0 0.0
    %357 = vmatpush1.msra.mxu0 0.0
    %358 = vmatprep.subr.mxu0 0.0
    %359 = vmatpush1.msra.mxu0 0.0
    %360 = vmatprep.subr.mxu0 0.0
    %361 = vmatpush1.msra.mxu0 0.0
    %362 = vmatprep.subr.mxu0 0.0
    %363 = vmatpush1.msra.mxu0 0.0
    %364 = vmatprep.subr.mxu0 0.0
    %365 = vmatpush1.msra.mxu0 0.0
    %366 = vmatprep.subr.mxu0 0.0
    %367 = vmatpush1.msra.mxu0 0.0
    %368 = vmatprep.subr.mxu0 0.0
    %369 = vmatpush1.msra.mxu0 0.0
    %370 = vmatprep.subr.mxu0 0.0
    %371 = vmatpush1.msra.mxu0 0.0
    %372 = vmatprep.subr.mxu0 0.0
    %373 = vmatpush1.msra.mxu0 0.0
    %374 = vmatprep.subr.mxu0 0.0
    %375 = vmatpush1.msra.mxu0 0.0
    %376 = vmatprep.subr.mxu0 0.0
    %377 = vmatpush1.msra.mxu0 0.0
    %378 = vmatprep.subr.mxu0 0.0
    %379 = vmatpush1.msra.mxu0 0.0
    %380 = vmatprep.subr.mxu0 0.0
    %381 = vmatpush1.msra.mxu0 0.0
    %382 = vmatprep.subr.mxu0 0.0
    %383 = vmatpush1.msra.mxu0 0.0
    %384 = vmatprep.subr.mxu0 0.0
    %385 = vmatpush1.msra.mxu0 0.0
    %386 = vmatprep.subr.mxu0 0.0
    %387 = vmatpush1.msra.mxu0 0.0
    %388 = vmatprep.subr.mxu0 0.0
    %389 = vmatpush1.msra.mxu0 0.0
    %390 = vmatprep.subr.mxu0 0.0
    %391 = vmatpush1.msra.mxu0 0.0
    %392 = vmatprep.subr.mxu0 0.0
    %393 = vmatpush1.msra.mxu0 0.0
    %394 = vmatprep.subr.mxu0 0.0
    %395 = vmatpush1.msra.mxu0 0.0
    %396 = vmatprep.mubr.f32.mxu0 0.0
    %397 = vmatmul.mubr.f32.gmra.mrb[0].mxu0 %v330
    %v398 = vpop.f32.mrb[0].mxu0
    %v399 = vadd.f32 %v326, %v398
    %v400 = vpop.f32.mrb[0].mxu0
    %401 = vdwg.mxu0
    %v402 = vadd.f32 %v399, %v63
    %v403 = vxor.u32 %v402, 2147483648
    %v404 = vmul.f32 %v403, 1.442695
    %v405 = vpow.pop %v404
    %v406 = vadd.f32 %v405, 1.0
    %v407 = vrcp.pop %v406
    %v408 = vmul.f32 1.0, %v407
    %v409 = vmul.f32 %v408, 2.0
    %v410 = vsub.f32 %v409, 1.0
    %v411 = vmul.f32 %v408, %v245
    %413 = vrot.lane.b32.xlu0 %v410, 64
    %v414 = vpop.permute.xlu0 %413
    %v416 = vmul.f32 %v408, %v414
    %418 = vrot.lane.b32.xlu0 %v416, 32
    %v419 = vpop.permute.xlu0 %418
    %v421 = vadd.f32 %v411, %v419
    %v422 = vtanh.pop %v421
    %424 = vrot.lane.b32.xlu0 %v422, 64
    %v425 = vpop.permute.xlu0 %424
    %v427 = vmul.f32 %v408, %v425
    %s428 = scalar_lea.vmem %s1, 16
    %v429 = vld [vmem:[%s428] sm:$0xff]
    %431 = vrot.lane.b32.xlu0 %v427, 32
    %v432 = vpop.permute.xlu0 %431
    %v433 = vsel %vm79, %v432, 0
    %435 = vmatprep.subr.mxu0 0.0
    %436 = vmatpush1.msra.mxu0 %v59
    %437 = vmatprep.subr.mxu0 0.0
    %438 = vmatpush1.msra.mxu0 %v60
    %439 = vmatprep.subr.mxu0 0.0
    %440 = vmatpush1.msra.mxu0 %v61
    %441 = vmatprep.subr.mxu0 0.0
    %442 = vmatpush1.msra.mxu0 %v62
    %443 = vmatprep.subr.mxu0 0.0
    %444 = vmatpush1.msra.mxu0 0.0
    %445 = vmatprep.subr.mxu0 0.0
    %446 = vmatpush1.msra.mxu0 0.0
    %447 = vmatprep.subr.mxu0 0.0
    %448 = vmatpush1.msra.mxu0 0.0
    %449 = vmatprep.subr.mxu0 0.0
    %450 = vmatpush1.msra.mxu0 0.0
    %451 = vmatprep.subr.mxu0 0.0
    %452 = vmatpush1.msra.mxu0 0.0
    %453 = vmatprep.subr.mxu0 0.0
    %454 = vmatpush1.msra.mxu0 0.0
    %455 = vmatprep.subr.mxu0 0.0
    %456 = vmatpush1.msra.mxu0 0.0
    %457 = vmatprep.subr.mxu0 0.0
    %458 = vmatpush1.msra.mxu0 0.0
    %459 = vmatprep.subr.mxu0 0.0
    %460 = vmatpush1.msra.mxu0 0.0
    %461 = vmatprep.subr.mxu0 0.0
    %462 = vmatpush1.msra.mxu0 0.0
    %463 = vmatprep.subr.mxu0 0.0
    %464 = vmatpush1.msra.mxu0 0.0
    %465 = vmatprep.subr.mxu0 0.0
    %466 = vmatpush1.msra.mxu0 0.0
    %467 = vmatprep.subr.mxu0 0.0
    %468 = vmatpush1.msra.mxu0 0.0
    %469 = vmatprep.subr.mxu0 0.0
    %470 = vmatpush1.msra.mxu0 0.0
    %471 = vmatprep.subr.mxu0 0.0
    %472 = vmatpush1.msra.mxu0 0.0
    %473 = vmatprep.subr.mxu0 0.0
    %474 = vmatpush1.msra.mxu0 0.0
    %475 = vmatprep.subr.mxu0 0.0
    %476 = vmatpush1.msra.mxu0 0.0
    %477 = vmatprep.subr.mxu0 0.0
    %478 = vmatpush1.msra.mxu0 0.0
    %479 = vmatprep.subr.mxu0 0.0
    %480 = vmatpush1.msra.mxu0 0.0
    %481 = vmatprep.subr.mxu0 0.0
    %482 = vmatpush1.msra.mxu0 0.0
    %483 = vmatprep.subr.mxu0 0.0
    %484 = vmatpush1.msra.mxu0 0.0
    %485 = vmatprep.subr.mxu0 0.0
    %486 = vmatpush1.msra.mxu0 0.0
    %487 = vmatprep.subr.mxu0 0.0
    %488 = vmatpush1.msra.mxu0 0.0
    %489 = vmatprep.subr.mxu0 0.0
    %490 = vmatpush1.msra.mxu0 0.0
    %491 = vmatprep.subr.mxu0 0.0
    %492 = vmatpush1.msra.mxu0 0.0
    %493 = vmatprep.subr.mxu0 0.0
    %494 = vmatpush1.msra.mxu0 0.0
    %495 = vmatprep.subr.mxu0 0.0
    %496 = vmatpush1.msra.mxu0 0.0
    %497 = vmatprep.subr.mxu0 0.0
    %498 = vmatpush1.msra.mxu0 0.0
    %499 = vmatprep.mubr.f32.mxu0 0.0
    %500 = vmatmul.mubr.f32.gmra.mrb[0].mxu0 %v433
    %v501 = vpop.f32.mrb[0].mxu0
    %v502 = vadd.f32 0.0, %v501
    %v503 = vpop.f32.mrb[0].mxu0
    %504 = vdwg.mxu0
    %v506 = vsel %vm79, %v429, 0
    %508 = vmatprep.subr.mxu0 0.0
    %509 = vmatpush1.msra.mxu0 %v55
    %510 = vmatprep.subr.mxu0 0.0
    %511 = vmatpush1.msra.mxu0 %v56
    %512 = vmatprep.subr.mxu0 0.0
    %513 = vmatpush1.msra.mxu0 %v57
    %514 = vmatprep.subr.mxu0 0.0
    %515 = vmatpush1.msra.mxu0 %v58
    %516 = vmatprep.subr.mxu0 0.0
    %517 = vmatpush1.msra.mxu0 0.0
    %518 = vmatprep.subr.mxu0 0.0
    %519 = vmatpush1.msra.mxu0 0.0
    %520 = vmatprep.subr.mxu0 0.0
    %521 = vmatpush1.msra.mxu0 0.0
    %522 = vmatprep.subr.mxu0 0.0
    %523 = vmatpush1.msra.mxu0 0.0
    %524 = vmatprep.subr.mxu0 0.0
    %525 = vmatpush1.msra.mxu0 0.0
    %526 = vmatprep.subr.mxu0 0.0
    %527 = vmatpush1.msra.mxu0 0.0
    %528 = vmatprep.subr.mxu0 0.0
    %529 = vmatpush1.msra.mxu0 0.0
    %530 = vmatprep.subr.mxu0 0.0
    %531 = vmatpush1.msra.mxu0 0.0
    %532 = vmatprep.subr.mxu0 0.0
    %533 = vmatpush1.msra.mxu0 0.0
    %534 = vmatprep.subr.mxu0 0.0
    %535 = vmatpush1.msra.mxu0 0.0
    %536 = vmatprep.subr.mxu0 0.0
    %537 = vmatpush1.msra.mxu0 0.0
    %538 = vmatprep.subr.mxu0 0.0
    %539 = vmatpush1.msra.mxu0 0.0
    %540 = vmatprep.subr.mxu0 0.0
    %541 = vmatpush1.msra.mxu0 0.0
    %542 = vmatprep.subr.mxu0 0.0
    %543 = vmatpush1.msra.mxu0 0.0
    %544 = vmatprep.subr.mxu0 0.0
    %545 = vmatpush1.msra.mxu0 0.0
    %546 = vmatprep.subr.mxu0 0.0
    %547 = vmatpush1.msra.mxu0 0.0
    %548 = vmatprep.subr.mxu0 0.0
    %549 = vmatpush1.msra.mxu0 0.0
    %550 = vmatprep.subr.mxu0 0.0
    %551 = vmatpush1.msra.mxu0 0.0
    %552 = vmatprep.subr.mxu0 0.0
    %553 = vmatpush1.msra.mxu0 0.0
    %554 = vmatprep.subr.mxu0 0.0
    %555 = vmatpush1.msra.mxu0 0.0
    %556 = vmatprep.subr.mxu0 0.0
    %557 = vmatpush1.msra.mxu0 0.0
    %558 = vmatprep.subr.mxu0 0.0
    %559 = vmatpush1.msra.mxu0 0.0
    %560 = vmatprep.subr.mxu0 0.0
    %561 = vmatpush1.msra.mxu0 0.0
    %562 = vmatprep.subr.mxu0 0.0
    %563 = vmatpush1.msra.mxu0 0.0
    %564 = vmatprep.subr.mxu0 0.0
    %565 = vmatpush1.msra.mxu0 0.0
    %566 = vmatprep.subr.mxu0 0.0
    %567 = vmatpush1.msra.mxu0 0.0
    %568 = vmatprep.subr.mxu0 0.0
    %569 = vmatpush1.msra.mxu0 0.0
    %570 = vmatprep.subr.mxu0 0.0
    %571 = vmatpush1.msra.mxu0 0.0
    %572 = vmatprep.mubr.f32.mxu0 0.0
    %573 = vmatmul.mubr.f32.gmra.mrb[0].mxu0 %v506
    %v574 = vpop.f32.mrb[0].mxu0
    %v575 = vadd.f32 %v502, %v574
    %v576 = vpop.f32.mrb[0].mxu0
    %577 = vdwg.mxu0
    %v578 = vadd.f32 %v575, %v63
    %v579 = vxor.u32 %v578, 2147483648
    %v580 = vmul.f32 %v579, 1.442695
    %v581 = vpow.pop %v580
    %v582 = vadd.f32 %v581, 1.0
    %v583 = vrcp.pop %v582
    %v584 = vmul.f32 1.0, %v583
    %v585 = vmul.f32 %v584, 2.0
    %v586 = vsub.f32 %v585, 1.0
    %v587 = vmul.f32 %v584, %v421
    %589 = vrot.lane.b32.xlu0 %v586, 64
    %v590 = vpop.permute.xlu0 %589
    %v592 = vmul.f32 %v584, %v590
    %594 = vrot.lane.b32.xlu0 %v592, 32
    %v595 = vpop.permute.xlu0 %594
    %v597 = vadd.f32 %v587, %v595
    %v598 = vtanh.pop %v597
    %600 = vrot.lane.b32.xlu0 %v598, 64
    %v601 = vpop.permute.xlu0 %600
    %v603 = vmul.f32 %v584, %v601
    %s604 = scalar_lea.vmem %s1, 24
    %v605 = vld [vmem:[%s604] sm:$0xff]
    %607 = vrot.lane.b32.xlu0 %v603, 32
    %v608 = vpop.permute.xlu0 %607
    %v609 = vsel %vm79, %v608, 0
    %611 = vmatprep.subr.mxu0 0.0
    %612 = vmatpush1.msra.mxu0 %v59
    %613 = vmatprep.subr.mxu0 0.0
    %614 = vmatpush1.msra.mxu0 %v60
    %615 = vmatprep.subr.mxu0 0.0
    %616 = vmatpush1.msra.mxu0 %v61
    %617 = vmatprep.subr.mxu0 0.0
    %618 = vmatpush1.msra.mxu0 %v62
    %619 = vmatprep.subr.mxu0 0.0
    %620 = vmatpush1.msra.mxu0 0.0
    %621 = vmatprep.subr.mxu0 0.0
    %622 = vmatpush1.msra.mxu0 0.0
    %623 = vmatprep.subr.mxu0 0.0
    %624 = vmatpush1.msra.mxu0 0.0
    %625 = vmatprep.subr.mxu0 0.0
    %626 = vmatpush1.msra.mxu0 0.0
    %627 = vmatprep.subr.mxu0 0.0
    %628 = vmatpush1.msra.mxu0 0.0
    %629 = vmatprep.subr.mxu0 0.0
    %630 = vmatpush1.msra.mxu0 0.0
    %631 = vmatprep.subr.mxu0 0.0
    %632 = vmatpush1.msra.mxu0 0.0
    %633 = vmatprep.subr.mxu0 0.0
    %634 = vmatpush1.msra.mxu0 0.0
    %635 = vmatprep.subr.mxu0 0.0
    %636 = vmatpush1.msra.mxu0 0.0
    %637 = vmatprep.subr.mxu0 0.0
    %638 = vmatpush1.msra.mxu0 0.0
    %639 = vmatprep.subr.mxu0 0.0
    %640 = vmatpush1.msra.mxu0 0.0
    %641 = vmatprep.subr.mxu0 0.0
    %642 = vmatpush1.msra.mxu0 0.0
    %643 = vmatprep.subr.mxu0 0.0
    %644 = vmatpush1.msra.mxu0 0.0
    %645 = vmatprep.subr.mxu0 0.0
    %646 = vmatpush1.msra.mxu0 0.0
    %647 = vmatprep.subr.mxu0 0.0
    %648 = vmatpush1.msra.mxu0 0.0
    %649 = vmatprep.subr.mxu0 0.0
    %650 = vmatpush1.msra.mxu0 0.0
    %651 = vmatprep.subr.mxu0 0.0
    %652 = vmatpush1.msra.mxu0 0.0
    %653 = vmatprep.subr.mxu0 0.0
    %654 = vmatpush1.msra.mxu0 0.0
    %655 = vmatprep.subr.mxu0 0.0
    %656 = vmatpush1.msra.mxu0 0.0
    %657 = vmatprep.subr.mxu0 0.0
    %658 = vmatpush1.msra.mxu0 0.0
    %659 = vmatprep.subr.mxu0 0.0
    %660 = vmatpush1.msra.mxu0 0.0
    %661 = vmatprep.subr.mxu0 0.0
    %662 = vmatpush1.msra.mxu0 0.0
    %663 = vmatprep.subr.mxu0 0.0
    %664 = vmatpush1.msra.mxu0 0.0
    %665 = vmatprep.subr.mxu0 0.0
    %666 = vmatpush1.msra.mxu0 0.0
    %667 = vmatprep.subr.mxu0 0.0
    %668 = vmatpush1.msra.mxu0 0.0
    %669 = vmatprep.subr.mxu0 0.0
    %670 = vmatpush1.msra.mxu0 0.0
    %671 = vmatprep.subr.mxu0 0.0
    %672 = vmatpush1.msra.mxu0 0.0
    %673 = vmatprep.subr.mxu0 0.0
    %674 = vmatpush1.msra.mxu0 0.0
    %675 = vmatprep.mubr.f32.mxu0 0.0
    %676 = vmatmul.mubr.f32.gmra.mrb[0].mxu0 %v609
    %v677 = vpop.f32.mrb[0].mxu0
    %v678 = vadd.f32 0.0, %v677
    %v679 = vpop.f32.mrb[0].mxu0
    %680 = vdwg.mxu0
    %v682 = vsel %vm79, %v605, 0
    %684 = vmatprep.subr.mxu0 0.0
    %685 = vmatpush1.msra.mxu0 %v55
    %686 = vmatprep.subr.mxu0 0.0
    %687 = vmatpush1.msra.mxu0 %v56
    %688 = vmatprep.subr.mxu0 0.0
    %689 = vmatpush1.msra.mxu0 %v57
    %690 = vmatprep.subr.mxu0 0.0
    %691 = vmatpush1.msra.mxu0 %v58
    %692 = vmatprep.subr.mxu0 0.0
    %693 = vmatpush1.msra.mxu0 0.0
    %694 = vmatprep.subr.mxu0 0.0
    %695 = vmatpush1.msra.mxu0 0.0
    %696 = vmatprep.subr.mxu0 0.0
    %697 = vmatpush1.msra.mxu0 0.0
    %698 = vmatprep.subr.mxu0 0.0
    %699 = vmatpush1.msra.mxu0 0.0
    %700 = vmatprep.subr.mxu0 0.0
    %701 = vmatpush1.msra.mxu0 0.0
    %702 = vmatprep.subr.mxu0 0.0
    %703 = vmatpush1.msra.mxu0 0.0
    %704 = vmatprep.subr.mxu0 0.0
    %705 = vmatpush1.msra.mxu0 0.0
    %706 = vmatprep.subr.mxu0 0.0
    %707 = vmatpush1.msra.mxu0 0.0
    %708 = vmatprep.subr.mxu0 0.0
    %709 = vmatpush1.msra.mxu0 0.0
    %710 = vmatprep.subr.mxu0 0.0
    %711 = vmatpush1.msra.mxu0 0.0
    %712 = vmatprep.subr.mxu0 0.0
    %713 = vmatpush1.msra.mxu0 0.0
    %714 = vmatprep.subr.mxu0 0.0
    %715 = vmatpush1.msra.mxu0 0.0
    %716 = vmatprep.subr.mxu0 0.0
    %717 = vmatpush1.msra.mxu0 0.0
    %718 = vmatprep.subr.mxu0 0.0
    %719 = vmatpush1.msra.mxu0 0.0
    %720 = vmatprep.subr.mxu0 0.0
    %721 = vmatpush1.msra.mxu0 0.0
    %722 = vmatprep.subr.mxu0 0.0
    %723 = vmatpush1.msra.mxu0 0.0
    %724 = vmatprep.subr.mxu0 0.0
    %725 = vmatpush1.msra.mxu0 0.0
    %726 = vmatprep.subr.mxu0 0.0
    %727 = vmatpush1.msra.mxu0 0.0
    %728 = vmatprep.subr.mxu0 0.0
    %729 = vmatpush1.msra.mxu0 0.0
    %730 = vmatprep.subr.mxu0 0.0
    %731 = vmatpush1.msra.mxu0 0.0
    %732 = vmatprep.subr.mxu0 0.0
    %733 = vmatpush1.msra.mxu0 0.0
    %734 = vmatprep.subr.mxu0 0.0
    %735 = vmatpush1.msra.mxu0 0.0
    %736 = vmatprep.subr.mxu0 0.0
    %737 = vmatpush1.msra.mxu0 0.0
    %738 = vmatprep.subr.mxu0 0.0
    %739 = vmatpush1.msra.mxu0 0.0
    %740 = vmatprep.subr.mxu0 0.0
    %741 = vmatpush1.msra.mxu0 0.0
    %742 = vmatprep.subr.mxu0 0.0
    %743 = vmatpush1.msra.mxu0 0.0
    %744 = vmatprep.subr.mxu0 0.0
    %745 = vmatpush1.msra.mxu0 0.0
    %746 = vmatprep.subr.mxu0 0.0
    %747 = vmatpush1.msra.mxu0 0.0
    %748 = vmatprep.mubr.f32.mxu0 0.0
    %749 = vmatmul.mubr.f32.gmra.mrb[0].mxu0 %v682
    %v750 = vpop.f32.mrb[0].mxu0
    %v751 = vadd.f32 %v678, %v750
    %v752 = vpop.f32.mrb[0].mxu0
    %753 = vdwg.mxu0
    %v754 = vadd.f32 %v751, %v63
    %v755 = vxor.u32 %v754, 2147483648
    %v756 = vmul.f32 %v755, 1.442695
    %v757 = vpow.pop %v756
    %v758 = vadd.f32 %v757, 1.0
    %v759 = vrcp.pop %v758
    %v760 = vmul.f32 1.0, %v759
    %v761 = vmul.f32 %v760, 2.0
    %v762 = vsub.f32 %v761, 1.0
    %v763 = vmul.f32 %v760, %v597
    %765 = vrot.lane.b32.xlu0 %v762, 64
    %v766 = vpop.permute.xlu0 %765
    %v768 = vmul.f32 %v760, %v766
    %770 = vrot.lane.b32.xlu0 %v768, 32
    %v771 = vpop.permute.xlu0 %770
    %v773 = vadd.f32 %v763, %v771
    %v774 = vtanh.pop %v773
    %776 = vrot.lane.b32.xlu0 %v774, 64
    %v777 = vpop.permute.xlu0 %776
    %v779 = vmul.f32 %v760, %v777
    %s780 = scalar_lea.vmem %s1, 32
    %v781 = vld [vmem:[%s780] sm:$0xff]
    %783 = vrot.lane.b32.xlu0 %v779, 32
    %v784 = vpop.permute.xlu0 %783
    %v785 = vsel %vm79, %v784, 0
    %787 = vmatprep.subr.mxu0 0.0
    %788 = vmatpush1.msra.mxu0 %v59
    %789 = vmatprep.subr.mxu0 0.0
    %790 = vmatpush1.msra.mxu0 %v60
    %791 = vmatprep.subr.mxu0 0.0
    %792 = vmatpush1.msra.mxu0 %v61
    %793 = vmatprep.subr.mxu0 0.0
    %794 = vmatpush1.msra.mxu0 %v62
    %795 = vmatprep.subr.mxu0 0.0
    %796 = vmatpush1.msra.mxu0 0.0
    %797 = vmatprep.subr.mxu0 0.0
    %798 = vmatpush1.msra.mxu0 0.0
    %799 = vmatprep.subr.mxu0 0.0
    %800 = vmatpush1.msra.mxu0 0.0
    %801 = vmatprep.subr.mxu0 0.0
    %802 = vmatpush1.msra.mxu0 0.0
    %803 = vmatprep.subr.mxu0 0.0
    %804 = vmatpush1.msra.mxu0 0.0
    %805 = vmatprep.subr.mxu0 0.0
    %806 = vmatpush1.msra.mxu0 0.0
    %807 = vmatprep.subr.mxu0 0.0
    %808 = vmatpush1.msra.mxu0 0.0
    %809 = vmatprep.subr.mxu0 0.0
    %810 = vmatpush1.msra.mxu0 0.0
    %811 = vmatprep.subr.mxu0 0.0
    %812 = vmatpush1.msra.mxu0 0.0
    %813 = vmatprep.subr.mxu0 0.0
    %814 = vmatpush1.msra.mxu0 0.0
    %815 = vmatprep.subr.mxu0 0.0
    %816 = vmatpush1.msra.mxu0 0.0
    %817 = vmatprep.subr.mxu0 0.0
    %818 = vmatpush1.msra.mxu0 0.0
    %819 = vmatprep.subr.mxu0 0.0
    %820 = vmatpush1.msra.mxu0 0.0
    %821 = vmatprep.subr.mxu0 0.0
    %822 = vmatpush1.msra.mxu0 0.0
    %823 = vmatprep.subr.mxu0 0.0
    %824 = vmatpush1.msra.mxu0 0.0
    %825 = vmatprep.subr.mxu0 0.0
    %826 = vmatpush1.msra.mxu0 0.0
    %827 = vmatprep.subr.mxu0 0.0
    %828 = vmatpush1.msra.mxu0 0.0
    %829 = vmatprep.subr.mxu0 0.0
    %830 = vmatpush1.msra.mxu0 0.0
    %831 = vmatprep.subr.mxu0 0.0
    %832 = vmatpush1.msra.mxu0 0.0
    %833 = vmatprep.subr.mxu0 0.0
    %834 = vmatpush1.msra.mxu0 0.0
    %835 = vmatprep.subr.mxu0 0.0
    %836 = vmatpush1.msra.mxu0 0.0
    %837 = vmatprep.subr.mxu0 0.0
    %838 = vmatpush1.msra.mxu0 0.0
    %839 = vmatprep.subr.mxu0 0.0
    %840 = vmatpush1.msra.mxu0 0.0
    %841 = vmatprep.subr.mxu0 0.0
    %842 = vmatpush1.msra.mxu0 0.0
    %843 = vmatprep.subr.mxu0 0.0
    %844 = vmatpush1.msra.mxu0 0.0
    %845 = vmatprep.subr.mxu0 0.0
    %846 = vmatpush1.msra.mxu0 0.0
    %847 = vmatprep.subr.mxu0 0.0
    %848 = vmatpush1.msra.mxu0 0.0
    %849 = vmatprep.subr.mxu0 0.0
    %850 = vmatpush1.msra.mxu0 0.0
    %851 = vmatprep.mubr.f32.mxu0 0.0
    %852 = vmatmul.mubr.f32.gmra.mrb[0].mxu0 %v785
    %v853 = vpop.f32.mrb[0].mxu0
    %v854 = vadd.f32 0.0, %v853
    %v855 = vpop.f32.mrb[0].mxu0
    %856 = vdwg.mxu0
    %v858 = vsel %vm79, %v781, 0
    %860 = vmatprep.subr.mxu0 0.0
    %861 = vmatpush1.msra.mxu0 %v55
    %862 = vmatprep.subr.mxu0 0.0
    %863 = vmatpush1.msra.mxu0 %v56
    %864 = vmatprep.subr.mxu0 0.0
    %865 = vmatpush1.msra.mxu0 %v57
    %866 = vmatprep.subr.mxu0 0.0
    %867 = vmatpush1.msra.mxu0 %v58
    %868 = vmatprep.subr.mxu0 0.0
    %869 = vmatpush1.msra.mxu0 0.0
    %870 = vmatprep.subr.mxu0 0.0
    %871 = vmatpush1.msra.mxu0 0.0
    %872 = vmatprep.subr.mxu0 0.0
    %873 = vmatpush1.msra.mxu0 0.0
    %874 = vmatprep.subr.mxu0 0.0
    %875 = vmatpush1.msra.mxu0 0.0
    %876 = vmatprep.subr.mxu0 0.0
    %877 = vmatpush1.msra.mxu0 0.0
    %878 = vmatprep.subr.mxu0 0.0
    %879 = vmatpush1.msra.mxu0 0.0
    %880 = vmatprep.subr.mxu0 0.0
    %881 = vmatpush1.msra.mxu0 0.0
    %882 = vmatprep.subr.mxu0 0.0
    %883 = vmatpush1.msra.mxu0 0.0
    %884 = vmatprep.subr.mxu0 0.0
    %885 = vmatpush1.msra.mxu0 0.0
    %886 = vmatprep.subr.mxu0 0.0
    %887 = vmatpush1.msra.mxu0 0.0
    %888 = vmatprep.subr.mxu0 0.0
    %889 = vmatpush1.msra.mxu0 0.0
    %890 = vmatprep.subr.mxu0 0.0
    %891 = vmatpush1.msra.mxu0 0.0
    %892 = vmatprep.subr.mxu0 0.0
    %893 = vmatpush1.msra.mxu0 0.0
    %894 = vmatprep.subr.mxu0 0.0
    %895 = vmatpush1.msra.mxu0 0.0
    %896 = vmatprep.subr.mxu0 0.0
    %897 = vmatpush1.msra.mxu0 0.0
    %898 = vmatprep.subr.mxu0 0.0
    %899 = vmatpush1.msra.mxu0 0.0
    %900 = vmatprep.subr.mxu0 0.0
    %901 = vmatpush1.msra.mxu0 0.0
    %902 = vmatprep.subr.mxu0 0.0
    %903 = vmatpush1.msra.mxu0 0.0
    %904 = vmatprep.subr.mxu0 0.0
    %905 = vmatpush1.msra.mxu0 0.0
    %906 = vmatprep.subr.mxu0 0.0
    %907 = vmatpush1.msra.mxu0 0.0
    %908 = vmatprep.subr.mxu0 0.0
    %909 = vmatpush1.msra.mxu0 0.0
    %910 = vmatprep.subr.mxu0 0.0
    %911 = vmatpush1.msra.mxu0 0.0
    %912 = vmatprep.subr.mxu0 0.0
    %913 = vmatpush1.msra.mxu0 0.0
    %914 = vmatprep.subr.mxu0 0.0
    %915 = vmatpush1.msra.mxu0 0.0
    %916 = vmatprep.subr.mxu0 0.0
    %917 = vmatpush1.msra.mxu0 0.0
    %918 = vmatprep.subr.mxu0 0.0
    %919 = vmatpush1.msra.mxu0 0.0
    %920 = vmatprep.subr.mxu0 0.0
    %921 = vmatpush1.msra.mxu0 0.0
    %922 = vmatprep.subr.mxu0 0.0
    %923 = vmatpush1.msra.mxu0 0.0
    %924 = vmatprep.mubr.f32.mxu0 0.0
    %925 = vmatmul.mubr.f32.gmra.mrb[0].mxu0 %v858
    %v926 = vpop.f32.mrb[0].mxu0
    %v927 = vadd.f32 %v854, %v926
    %v928 = vpop.f32.mrb[0].mxu0
    %929 = vdwg.mxu0
    %v930 = vadd.f32 %v927, %v63
    %v931 = vxor.u32 %v930, 2147483648
    %v932 = vmul.f32 %v931, 1.442695
    %v933 = vpow.pop %v932
    %v934 = vadd.f32 %v933, 1.0
    %v935 = vrcp.pop %v934
    %v936 = vmul.f32 1.0, %v935
    %v937 = vmul.f32 %v936, 2.0
    %v938 = vsub.f32 %v937, 1.0
    %v939 = vmul.f32 %v936, %v773
    %941 = vrot.lane.b32.xlu0 %v938, 64
    %v942 = vpop.permute.xlu0 %941
    %v944 = vmul.f32 %v936, %v942
    %946 = vrot.lane.b32.xlu0 %v944, 32
    %v947 = vpop.permute.xlu0 %946
    %v949 = vadd.f32 %v939, %v947
    %v950 = vtanh.pop %v949
    %952 = vrot.lane.b32.xlu0 %v950, 64
    %v953 = vpop.permute.xlu0 %952
    %v955 = vmul.f32 %v936, %v953
    %s956 = scalar_lea.vmem %s1, 40
    %v957 = vld [vmem:[%s956] sm:$0xff]
    %959 = vrot.lane.b32.xlu0 %v955, 32
    %v960 = vpop.permute.xlu0 %959
    %v961 = vsel %vm79, %v960, 0
    %963 = vmatprep.subr.mxu0 0.0
    %964 = vmatpush1.msra.mxu0 %v59
    %965 = vmatprep.subr.mxu0 0.0
    %966 = vmatpush1.msra.mxu0 %v60
    %967 = vmatprep.subr.mxu0 0.0
    %968 = vmatpush1.msra.mxu0 %v61
    %969 = vmatprep.subr.mxu0 0.0
    %970 = vmatpush1.msra.mxu0 %v62
    %971 = vmatprep.subr.mxu0 0.0
    %972 = vmatpush1.msra.mxu0 0.0
    %973 = vmatprep.subr.mxu0 0.0
    %974 = vmatpush1.msra.mxu0 0.0
    %975 = vmatprep.subr.mxu0 0.0
    %976 = vmatpush1.msra.mxu0 0.0
    %977 = vmatprep.subr.mxu0 0.0
    %978 = vmatpush1.msra.mxu0 0.0
    %979 = vmatprep.subr.mxu0 0.0
    %980 = vmatpush1.msra.mxu0 0.0
    %981 = vmatprep.subr.mxu0 0.0
    %982 = vmatpush1.msra.mxu0 0.0
    %983 = vmatprep.subr.mxu0 0.0
    %984 = vmatpush1.msra.mxu0 0.0
    %985 = vmatprep.subr.mxu0 0.0
    %986 = vmatpush1.msra.mxu0 0.0
    %987 = vmatprep.subr.mxu0 0.0
    %988 = vmatpush1.msra.mxu0 0.0
    %989 = vmatprep.subr.mxu0 0.0
    %990 = vmatpush1.msra.mxu0 0.0
    %991 = vmatprep.subr.mxu0 0.0
    %992 = vmatpush1.msra.mxu0 0.0
    %993 = vmatprep.subr.mxu0 0.0
    %994 = vmatpush1.msra.mxu0 0.0
    %995 = vmatprep.subr.mxu0 0.0
    %996 = vmatpush1.msra.mxu0 0.0
    %997 = vmatprep.subr.mxu0 0.0
    %998 = vmatpush1.msra.mxu0 0.0
    %999 = vmatprep.subr.mxu0 0.0
    %1000 = vmatpush1.msra.mxu0 0.0
    %1001 = vmatprep.subr.mxu0 0.0
    %1002 = vmatpush1.msra.mxu0 0.0
    %1003 = vmatprep.subr.mxu0 0.0
    %1004 = vmatpush1.msra.mxu0 0.0
    %1005 = vmatprep.subr.mxu0 0.0
    %1006 = vmatpush1.msra.mxu0 0.0
    %1007 = vmatprep.subr.mxu0 0.0
    %1008 = vmatpush1.msra.mxu0 0.0
    %1009 = vmatprep.subr.mxu0 0.0
    %1010 = vmatpush1.msra.mxu0 0.0
    %1011 = vmatprep.subr.mxu0 0.0
    %1012 = vmatpush1.msra.mxu0 0.0
    %1013 = vmatprep.subr.mxu0 0.0
    %1014 = vmatpush1.msra.mxu0 0.0
    %1015 = vmatprep.subr.mxu0 0.0
    %1016 = vmatpush1.msra.mxu0 0.0
    %1017 = vmatprep.subr.mxu0 0.0
    %1018 = vmatpush1.msra.mxu0 0.0
    %1019 = vmatprep.subr.mxu0 0.0
    %1020 = vmatpush1.msra.mxu0 0.0
    %1021 = vmatprep.subr.mxu0 0.0
    %1022 = vmatpush1.msra.mxu0 0.0
    %1023 = vmatprep.subr.mxu0 0.0
    %1024 = vmatpush1.msra.mxu0 0.0
    %1025 = vmatprep.subr.mxu0 0.0
    %1026 = vmatpush1.msra.mxu0 0.0
    %1027 = vmatprep.mubr.f32.mxu0 0.0
    %1028 = vmatmul.mubr.f32.gmra.mrb[0].mxu0 %v961
    %v1029 = vpop.f32.mrb[0].mxu0
    %v1030 = vadd.f32 0.0, %v1029
    %v1031 = vpop.f32.mrb[0].mxu0
    %1032 = vdwg.mxu0
    %v1034 = vsel %vm79, %v957, 0
    %1036 = vmatprep.subr.mxu0 0.0
    %1037 = vmatpush1.msra.mxu0 %v55
    %1038 = vmatprep.subr.mxu0 0.0
    %1039 = vmatpush1.msra.mxu0 %v56
    %1040 = vmatprep.subr.mxu0 0.0
    %1041 = vmatpush1.msra.mxu0 %v57
    %1042 = vmatprep.subr.mxu0 0.0
    %1043 = vmatpush1.msra.mxu0 %v58
    %1044 = vmatprep.subr.mxu0 0.0
    %1045 = vmatpush1.msra.mxu0 0.0
    %1046 = vmatprep.subr.mxu0 0.0
    %1047 = vmatpush1.msra.mxu0 0.0
    %1048 = vmatprep.subr.mxu0 0.0
    %1049 = vmatpush1.msra.mxu0 0.0
    %1050 = vmatprep.subr.mxu0 0.0
    %1051 = vmatpush1.msra.mxu0 0.0
    %1052 = vmatprep.subr.mxu0 0.0
    %1053 = vmatpush1.msra.mxu0 0.0
    %1054 = vmatprep.subr.mxu0 0.0
    %1055 = vmatpush1.msra.mxu0 0.0
    %1056 = vmatprep.subr.mxu0 0.0
    %1057 = vmatpush1.msra.mxu0 0.0
    %1058 = vmatprep.subr.mxu0 0.0
    %1059 = vmatpush1.msra.mxu0 0.0
    %1060 = vmatprep.subr.mxu0 0.0
    %1061 = vmatpush1.msra.mxu0 0.0
    %1062 = vmatprep.subr.mxu0 0.0
    %1063 = vmatpush1.msra.mxu0 0.0
    %1064 = vmatprep.subr.mxu0 0.0
    %1065 = vmatpush1.msra.mxu0 0.0
    %1066 = vmatprep.subr.mxu0 0.0
    %1067 = vmatpush1.msra.mxu0 0.0
    %1068 = vmatprep.subr.mxu0 0.0
    %1069 = vmatpush1.msra.mxu0 0.0
    %1070 = vmatprep.subr.mxu0 0.0
    %1071 = vmatpush1.msra.mxu0 0.0
    %1072 = vmatprep.subr.mxu0 0.0
    %1073 = vmatpush1.msra.mxu0 0.0
    %1074 = vmatprep.subr.mxu0 0.0
    %1075 = vmatpush1.msra.mxu0 0.0
    %1076 = vmatprep.subr.mxu0 0.0
    %1077 = vmatpush1.msra.mxu0 0.0
    %1078 = vmatprep.subr.mxu0 0.0
    %1079 = vmatpush1.msra.mxu0 0.0
    %1080 = vmatprep.subr.mxu0 0.0
    %1081 = vmatpush1.msra.mxu0 0.0
    %1082 = vmatprep.subr.mxu0 0.0
    %1083 = vmatpush1.msra.mxu0 0.0
    %1084 = vmatprep.subr.mxu0 0.0
    %1085 = vmatpush1.msra.mxu0 0.0
    %1086 = vmatprep.subr.mxu0 0.0
    %1087 = vmatpush1.msra.mxu0 0.0
    %1088 = vmatprep.subr.mxu0 0.0
    %1089 = vmatpush1.msra.mxu0 0.0
    %1090 = vmatprep.subr.mxu0 0.0
    %1091 = vmatpush1.msra.mxu0 0.0
    %1092 = vmatprep.subr.mxu0 0.0
    %1093 = vmatpush1.msra.mxu0 0.0
    %1094 = vmatprep.subr.mxu0 0.0
    %1095 = vmatpush1.msra.mxu0 0.0
    %1096 = vmatprep.subr.mxu0 0.0
    %1097 = vmatpush1.msra.mxu0 0.0
    %1098 = vmatprep.subr.mxu0 0.0
    %1099 = vmatpush1.msra.mxu0 0.0
    %1100 = vmatprep.mubr.f32.mxu0 0.0
    %1101 = vmatmul.mubr.f32.gmra.mrb[0].mxu0 %v1034
    %v1102 = vpop.f32.mrb[0].mxu0
    %v1103 = vadd.f32 %v1030, %v1102
    %v1104 = vpop.f32.mrb[0].mxu0
    %1105 = vdwg.mxu0
    %v1106 = vadd.f32 %v1103, %v63
    %v1107 = vxor.u32 %v1106, 2147483648
    %v1108 = vmul.f32 %v1107, 1.442695
    %v1109 = vpow.pop %v1108
    %v1110 = vadd.f32 %v1109, 1.0
    %v1111 = vrcp.pop %v1110
    %v1112 = vmul.f32 1.0, %v1111
    %v1113 = vmul.f32 %v1112, 2.0
    %v1114 = vsub.f32 %v1113, 1.0
    %v1115 = vmul.f32 %v1112, %v949
    %1117 = vrot.lane.b32.xlu0 %v1114, 64
    %v1118 = vpop.permute.xlu0 %1117
    %v1120 = vmul.f32 %v1112, %v1118
    %1122 = vrot.lane.b32.xlu0 %v1120, 32
    %v1123 = vpop.permute.xlu0 %1122
    %v1125 = vadd.f32 %v1115, %v1123
    %v1126 = vtanh.pop %v1125
    %1128 = vrot.lane.b32.xlu0 %v1126, 64
    %v1129 = vpop.permute.xlu0 %1128
    %v1131 = vmul.f32 %v1112, %v1129
    %s1132 = scalar_lea.vmem %s1, 48
    %v1133 = vld [vmem:[%s1132] sm:$0xff]
    %1135 = vrot.lane.b32.xlu0 %v1131, 32
    %v1136 = vpop.permute.xlu0 %1135
    %v1137 = vsel %vm79, %v1136, 0
    %1139 = vmatprep.subr.mxu0 0.0
    %1140 = vmatpush1.msra.mxu0 %v59
    %1141 = vmatprep.subr.mxu0 0.0
    %1142 = vmatpush1.msra.mxu0 %v60
    %1143 = vmatprep.subr.mxu0 0.0
    %1144 = vmatpush1.msra.mxu0 %v61
    %1145 = vmatprep.subr.mxu0 0.0
    %1146 = vmatpush1.msra.mxu0 %v62
    %1147 = vmatprep.subr.mxu0 0.0
    %1148 = vmatpush1.msra.mxu0 0.0
    %1149 = vmatprep.subr.mxu0 0.0
    %1150 = vmatpush1.msra.mxu0 0.0
    %1151 = vmatprep.subr.mxu0 0.0
    %1152 = vmatpush1.msra.mxu0 0.0
    %1153 = vmatprep.subr.mxu0 0.0
    %1154 = vmatpush1.msra.mxu0 0.0
    %1155 = vmatprep.subr.mxu0 0.0
    %1156 = vmatpush1.msra.mxu0 0.0
    %1157 = vmatprep.subr.mxu0 0.0
    %1158 = vmatpush1.msra.mxu0 0.0
    %1159 = vmatprep.subr.mxu0 0.0
    %1160 = vmatpush1.msra.mxu0 0.0
    %1161 = vmatprep.subr.mxu0 0.0
    %1162 = vmatpush1.msra.mxu0 0.0
    %1163 = vmatprep.subr.mxu0 0.0
    %1164 = vmatpush1.msra.mxu0 0.0
    %1165 = vmatprep.subr.mxu0 0.0
    %1166 = vmatpush1.msra.mxu0 0.0
    %1167 = vmatprep.subr.mxu0 0.0
    %1168 = vmatpush1.msra.mxu0 0.0
    %1169 = vmatprep.subr.mxu0 0.0
    %1170 = vmatpush1.msra.mxu0 0.0
    %1171 = vmatprep.subr.mxu0 0.0
    %1172 = vmatpush1.msra.mxu0 0.0
    %1173 = vmatprep.subr.mxu0 0.0
    %1174 = vmatpush1.msra.mxu0 0.0
    %1175 = vmatprep.subr.mxu0 0.0
    %1176 = vmatpush1.msra.mxu0 0.0
    %1177 = vmatprep.subr.mxu0 0.0
    %1178 = vmatpush1.msra.mxu0 0.0
    %1179 = vmatprep.subr.mxu0 0.0
    %1180 = vmatpush1.msra.mxu0 0.0
    %1181 = vmatprep.subr.mxu0 0.0
    %1182 = vmatpush1.msra.mxu0 0.0
    %1183 = vmatprep.subr.mxu0 0.0
    %1184 = vmatpush1.msra.mxu0 0.0
    %1185 = vmatprep.subr.mxu0 0.0
    %1186 = vmatpush1.msra.mxu0 0.0
    %1187 = vmatprep.subr.mxu0 0.0
    %1188 = vmatpush1.msra.mxu0 0.0
    %1189 = vmatprep.subr.mxu0 0.0
    %1190 = vmatpush1.msra.mxu0 0.0
    %1191 = vmatprep.subr.mxu0 0.0
    %1192 = vmatpush1.msra.mxu0 0.0
    %1193 = vmatprep.subr.mxu0 0.0
    %1194 = vmatpush1.msra.mxu0 0.0
    %1195 = vmatprep.subr.mxu0 0.0
    %1196 = vmatpush1.msra.mxu0 0.0
    %1197 = vmatprep.subr.mxu0 0.0
    %1198 = vmatpush1.msra.mxu0 0.0
    %1199 = vmatprep.subr.mxu0 0.0
    %1200 = vmatpush1.msra.mxu0 0.0
    %1201 = vmatprep.subr.mxu0 0.0
    %1202 = vmatpush1.msra.mxu0 0.0
    %1203 = vmatprep.mubr.f32.mxu0 0.0
    %1204 = vmatmul.mubr.f32.gmra.mrb[0].mxu0 %v1137
    %v1205 = vpop.f32.mrb[0].mxu0
    %v1206 = vadd.f32 0.0, %v1205
    %v1207 = vpop.f32.mrb[0].mxu0
    %1208 = vdwg.mxu0
    %v1210 = vsel %vm79, %v1133, 0
    %1212 = vmatprep.subr.mxu0 0.0
    %1213 = vmatpush1.msra.mxu0 %v55
    %1214 = vmatprep.subr.mxu0 0.0
    %1215 = vmatpush1.msra.mxu0 %v56
    %1216 = vmatprep.subr.mxu0 0.0
    %1217 = vmatpush1.msra.mxu0 %v57
    %1218 = vmatprep.subr.mxu0 0.0
    %1219 = vmatpush1.msra.mxu0 %v58
    %1220 = vmatprep.subr.mxu0 0.0
    %1221 = vmatpush1.msra.mxu0 0.0
    %1222 = vmatprep.subr.mxu0 0.0
    %1223 = vmatpush1.msra.mxu0 0.0
    %1224 = vmatprep.subr.mxu0 0.0
    %1225 = vmatpush1.msra.mxu0 0.0
    %1226 = vmatprep.subr.mxu0 0.0
    %1227 = vmatpush1.msra.mxu0 0.0
    %1228 = vmatprep.subr.mxu0 0.0
    %1229 = vmatpush1.msra.mxu0 0.0
    %1230 = vmatprep.subr.mxu0 0.0
    %1231 = vmatpush1.msra.mxu0 0.0
    %1232 = vmatprep.subr.mxu0 0.0
    %1233 = vmatpush1.msra.mxu0 0.0
    %1234 = vmatprep.subr.mxu0 0.0
    %1235 = vmatpush1.msra.mxu0 0.0
    %1236 = vmatprep.subr.mxu0 0.0
    %1237 = vmatpush1.msra.mxu0 0.0
    %1238 = vmatprep.subr.mxu0 0.0
    %1239 = vmatpush1.msra.mxu0 0.0
    %1240 = vmatprep.subr.mxu0 0.0
    %1241 = vmatpush1.msra.mxu0 0.0
    %1242 = vmatprep.subr.mxu0 0.0
    %1243 = vmatpush1.msra.mxu0 0.0
    %1244 = vmatprep.subr.mxu0 0.0
    %1245 = vmatpush1.msra.mxu0 0.0
    %1246 = vmatprep.subr.mxu0 0.0
    %1247 = vmatpush1.msra.mxu0 0.0
    %1248 = vmatprep.subr.mxu0 0.0
    %1249 = vmatpush1.msra.mxu0 0.0
    %1250 = vmatprep.subr.mxu0 0.0
    %1251 = vmatpush1.msra.mxu0 0.0
    %1252 = vmatprep.subr.mxu0 0.0
    %1253 = vmatpush1.msra.mxu0 0.0
    %1254 = vmatprep.subr.mxu0 0.0
    %1255 = vmatpush1.msra.mxu0 0.0
    %1256 = vmatprep.subr.mxu0 0.0
    %1257 = vmatpush1.msra.mxu0 0.0
    %1258 = vmatprep.subr.mxu0 0.0
    %1259 = vmatpush1.msra.mxu0 0.0
    %1260 = vmatprep.subr.mxu0 0.0
    %1261 = vmatpush1.msra.mxu0 0.0
    %1262 = vmatprep.subr.mxu0 0.0
    %1263 = vmatpush1.msra.mxu0 0.0
    %1264 = vmatprep.subr.mxu0 0.0
    %1265 = vmatpush1.msra.mxu0 0.0
    %1266 = vmatprep.subr.mxu0 0.0
    %1267 = vmatpush1.msra.mxu0 0.0
    %1268 = vmatprep.subr.mxu0 0.0
    %1269 = vmatpush1.msra.mxu0 0.0
    %1270 = vmatprep.subr.mxu0 0.0
    %1271 = vmatpush1.msra.mxu0 0.0
    %1272 = vmatprep.subr.mxu0 0.0
    %1273 = vmatpush1.msra.mxu0 0.0
    %1274 = vmatprep.subr.mxu0 0.0
    %1275 = vmatpush1.msra.mxu0 0.0
    %1276 = vmatprep.mubr.f32.mxu0 0.0
    %1277 = vmatmul.mubr.f32.gmra.mrb[0].mxu0 %v1210
    %v1278 = vpop.f32.mrb[0].mxu0
    %v1279 = vadd.f32 %v1206, %v1278
    %v1280 = vpop.f32.mrb[0].mxu0
    %1281 = vdwg.mxu0
    %v1282 = vadd.f32 %v1279, %v63
    %v1283 = vxor.u32 %v1282, 2147483648
    %v1284 = vmul.f32 %v1283, 1.442695
    %v1285 = vpow.pop %v1284
    %v1286 = vadd.f32 %v1285, 1.0
    %v1287 = vrcp.pop %v1286
    %v1288 = vmul.f32 1.0, %v1287
    %v1289 = vmul.f32 %v1288, 2.0
    %v1290 = vsub.f32 %v1289, 1.0
    %v1291 = vmul.f32 %v1288, %v1125
    %1293 = vrot.lane.b32.xlu0 %v1290, 64
    %v1294 = vpop.permute.xlu0 %1293
    %v1296 = vmul.f32 %v1288, %v1294
    %1298 = vrot.lane.b32.xlu0 %v1296, 32
    %v1299 = vpop.permute.xlu0 %1298
    %v1301 = vadd.f32 %v1291, %v1299
    %v1302 = vtanh.pop %v1301
    %1304 = vrot.lane.b32.xlu0 %v1302, 64
    %v1305 = vpop.permute.xlu0 %1304
    %v1307 = vmul.f32 %v1288, %v1305
    %s1308 = scalar_lea.vmem %s1, 56
    %v1309 = vld [vmem:[%s1308] sm:$0xff]
    %1311 = vrot.lane.b32.xlu0 %v1307, 32
    %v1312 = vpop.permute.xlu0 %1311
    %v1313 = vsel %vm79, %v1312, 0
    %1315 = vmatprep.subr.mxu0 0.0
    %1316 = vmatpush1.msra.mxu0 %v59
    %1317 = vmatprep.subr.mxu0 0.0
    %1318 = vmatpush1.msra.mxu0 %v60
    %1319 = vmatprep.subr.mxu0 0.0
    %1320 = vmatpush1.msra.mxu0 %v61
    %1321 = vmatprep.subr.mxu0 0.0
    %1322 = vmatpush1.msra.mxu0 %v62
    %1323 = vmatprep.subr.mxu0 0.0
    %1324 = vmatpush1.msra.mxu0 0.0
    %1325 = vmatprep.subr.mxu0 0.0
    %1326 = vmatpush1.msra.mxu0 0.0
    %1327 = vmatprep.subr.mxu0 0.0
    %1328 = vmatpush1.msra.mxu0 0.0
    %1329 = vmatprep.subr.mxu0 0.0
    %1330 = vmatpush1.msra.mxu0 0.0
    %1331 = vmatprep.subr.mxu0 0.0
    %1332 = vmatpush1.msra.mxu0 0.0
    %1333 = vmatprep.subr.mxu0 0.0
    %1334 = vmatpush1.msra.mxu0 0.0
    %1335 = vmatprep.subr.mxu0 0.0
    %1336 = vmatpush1.msra.mxu0 0.0
    %1337 = vmatprep.subr.mxu0 0.0
    %1338 = vmatpush1.msra.mxu0 0.0
    %1339 = vmatprep.subr.mxu0 0.0
    %1340 = vmatpush1.msra.mxu0 0.0
    %1341 = vmatprep.subr.mxu0 0.0
    %1342 = vmatpush1.msra.mxu0 0.0
    %1343 = vmatprep.subr.mxu0 0.0
    %1344 = vmatpush1.msra.mxu0 0.0
    %1345 = vmatprep.subr.mxu0 0.0
    %1346 = vmatpush1.msra.mxu0 0.0
    %1347 = vmatprep.subr.mxu0 0.0
    %1348 = vmatpush1.msra.mxu0 0.0
    %1349 = vmatprep.subr.mxu0 0.0
    %1350 = vmatpush1.msra.mxu0 0.0
    %1351 = vmatprep.subr.mxu0 0.0
    %1352 = vmatpush1.msra.mxu0 0.0
    %1353 = vmatprep.subr.mxu0 0.0
    %1354 = vmatpush1.msra.mxu0 0.0
    %1355 = vmatprep.subr.mxu0 0.0
    %1356 = vmatpush1.msra.mxu0 0.0
    %1357 = vmatprep.subr.mxu0 0.0
    %1358 = vmatpush1.msra.mxu0 0.0
    %1359 = vmatprep.subr.mxu0 0.0
    %1360 = vmatpush1.msra.mxu0 0.0
    %1361 = vmatprep.subr.mxu0 0.0
    %1362 = vmatpush1.msra.mxu0 0.0
    %1363 = vmatprep.subr.mxu0 0.0
    %1364 = vmatpush1.msra.mxu0 0.0
    %1365 = vmatprep.subr.mxu0 0.0
    %1366 = vmatpush1.msra.mxu0 0.0
    %1367 = vmatprep.subr.mxu0 0.0
    %1368 = vmatpush1.msra.mxu0 0.0
    %1369 = vmatprep.subr.mxu0 0.0
    %1370 = vmatpush1.msra.mxu0 0.0
    %1371 = vmatprep.subr.mxu0 0.0
    %1372 = vmatpush1.msra.mxu0 0.0
    %1373 = vmatprep.subr.mxu0 0.0
    %1374 = vmatpush1.msra.mxu0 0.0
    %1375 = vmatprep.subr.mxu0 0.0
    %1376 = vmatpush1.msra.mxu0 0.0
    %1377 = vmatprep.subr.mxu0 0.0
    %1378 = vmatpush1.msra.mxu0 0.0
    %1379 = vmatprep.mubr.f32.mxu0 0.0
    %1380 = vmatmul.mubr.f32.gmra.mrb[0].mxu0 %v1313
    %v1381 = vpop.f32.mrb[0].mxu0
    %v1382 = vadd.f32 0.0, %v1381
    %v1383 = vpop.f32.mrb[0].mxu0
    %1384 = vdwg.mxu0
    %v1386 = vsel %vm79, %v1309, 0
    %1388 = vmatprep.subr.mxu0 0.0
    %1389 = vmatpush1.msra.mxu0 %v55
    %1390 = vmatprep.subr.mxu0 0.0
    %1391 = vmatpush1.msra.mxu0 %v56
    %1392 = vmatprep.subr.mxu0 0.0
    %1393 = vmatpush1.msra.mxu0 %v57
    %1394 = vmatprep.subr.mxu0 0.0
    %1395 = vmatpush1.msra.mxu0 %v58
    %1396 = vmatprep.subr.mxu0 0.0
    %1397 = vmatpush1.msra.mxu0 0.0
    %1398 = vmatprep.subr.mxu0 0.0
    %1399 = vmatpush1.msra.mxu0 0.0
    %1400 = vmatprep.subr.mxu0 0.0
    %1401 = vmatpush1.msra.mxu0 0.0
    %1402 = vmatprep.subr.mxu0 0.0
    %1403 = vmatpush1.msra.mxu0 0.0
    %1404 = vmatprep.subr.mxu0 0.0
    %1405 = vmatpush1.msra.mxu0 0.0
    %1406 = vmatprep.subr.mxu0 0.0
    %1407 = vmatpush1.msra.mxu0 0.0
    %1408 = vmatprep.subr.mxu0 0.0
    %1409 = vmatpush1.msra.mxu0 0.0
    %1410 = vmatprep.subr.mxu0 0.0
    %1411 = vmatpush1.msra.mxu0 0.0
    %1412 = vmatprep.subr.mxu0 0.0
    %1413 = vmatpush1.msra.mxu0 0.0
    %1414 = vmatprep.subr.mxu0 0.0
    %1415 = vmatpush1.msra.mxu0 0.0
    %1416 = vmatprep.subr.mxu0 0.0
    %1417 = vmatpush1.msra.mxu0 0.0
    %1418 = vmatprep.subr.mxu0 0.0
    %1419 = vmatpush1.msra.mxu0 0.0
    %1420 = vmatprep.subr.mxu0 0.0
    %1421 = vmatpush1.msra.mxu0 0.0
    %1422 = vmatprep.subr.mxu0 0.0
    %1423 = vmatpush1.msra.mxu0 0.0
    %1424 = vmatprep.subr.mxu0 0.0
    %1425 = vmatpush1.msra.mxu0 0.0
    %1426 = vmatprep.subr.mxu0 0.0
    %1427 = vmatpush1.msra.mxu0 0.0
    %1428 = vmatprep.subr.mxu0 0.0
    %1429 = vmatpush1.msra.mxu0 0.0
    %1430 = vmatprep.subr.mxu0 0.0
    %1431 = vmatpush1.msra.mxu0 0.0
    %1432 = vmatprep.subr.mxu0 0.0
    %1433 = vmatpush1.msra.mxu0 0.0
    %1434 = vmatprep.subr.mxu0 0.0
    %1435 = vmatpush1.msra.mxu0 0.0
    %1436 = vmatprep.subr.mxu0 0.0
    %1437 = vmatpush1.msra.mxu0 0.0
    %1438 = vmatprep.subr.mxu0 0.0
    %1439 = vmatpush1.msra.mxu0 0.0
    %1440 = vmatprep.subr.mxu0 0.0
    %1441 = vmatpush1.msra.mxu0 0.0
    %1442 = vmatprep.subr.mxu0 0.0
    %1443 = vmatpush1.msra.mxu0 0.0
    %1444 = vmatprep.subr.mxu0 0.0
    %1445 = vmatpush1.msra.mxu0 0.0
    %1446 = vmatprep.subr.mxu0 0.0
    %1447 = vmatpush1.msra.mxu0 0.0
    %1448 = vmatprep.subr.mxu0 0.0
    %1449 = vmatpush1.msra.mxu0 0.0
    %1450 = vmatprep.subr.mxu0 0.0
    %1451 = vmatpush1.msra.mxu0 0.0
    %1452 = vmatprep.mubr.f32.mxu0 0.0
    %1453 = vmatmul.mubr.f32.gmra.mrb[0].mxu0 %v1386
    %v1454 = vpop.f32.mrb[0].mxu0
    %v1455 = vadd.f32 %v1382, %v1454
    %v1456 = vpop.f32.mrb[0].mxu0
    %1457 = vdwg.mxu0
    %v1458 = vadd.f32 %v1455, %v63
    %v1459 = vxor.u32 %v1458, 2147483648
    %v1460 = vmul.f32 %v1459, 1.442695
    %v1461 = vpow.pop %v1460
    %v1462 = vadd.f32 %v1461, 1.0
    %v1463 = vrcp.pop %v1462
    %v1464 = vmul.f32 1.0, %v1463
    %v1465 = vmul.f32 %v1464, 2.0
    %v1466 = vsub.f32 %v1465, 1.0
    %v1467 = vmul.f32 %v1464, %v1301
    %1469 = vrot.lane.b32.xlu0 %v1466, 64
    %v1470 = vpop.permute.xlu0 %1469
    %v1472 = vmul.f32 %v1464, %v1470
    %1474 = vrot.lane.b32.xlu0 %v1472, 32
    %v1475 = vpop.permute.xlu0 %1474
    %v1477 = vadd.f32 %v1467, %v1475
    %v1478 = vtanh.pop %v1477
    %1480 = vrot.lane.b32.xlu0 %v1478, 64
    %v1481 = vpop.permute.xlu0 %1480
    %v1483 = vmul.f32 %v1464, %v1481
    %1484 = vst [vmem:[#allocation5] sm:$0xff] 0.0
    %v1485 = vlaneseq
    %v1486 = vand.u32 %v1485, 127
    %v1487 = vld [vmem:[%s2] sm:$0xff]
    %1489 = vrot.lane.b32.xlu0 %v1483, 32
    %v1490 = vpop.permute.xlu0 %1489
    %v1491 = vsel %vm79, %v1490, 0
    %1493 = vmatprep.subr.mxu0 0.0
    %1494 = vmatpush1.msra.mxu0 %v68
    %1495 = vmatprep.subr.mxu0 0.0
    %1496 = vmatpush1.msra.mxu0 %v69
    %1497 = vmatprep.subr.mxu0 0.0
    %1498 = vmatpush1.msra.mxu0 %v70
    %1499 = vmatprep.subr.mxu0 0.0
    %1500 = vmatpush1.msra.mxu0 %v71
    %1501 = vmatprep.subr.mxu0 0.0
    %1502 = vmatpush1.msra.mxu0 0.0
    %1503 = vmatprep.subr.mxu0 0.0
    %1504 = vmatpush1.msra.mxu0 0.0
    %1505 = vmatprep.subr.mxu0 0.0
    %1506 = vmatpush1.msra.mxu0 0.0
    %1507 = vmatprep.subr.mxu0 0.0
    %1508 = vmatpush1.msra.mxu0 0.0
    %1509 = vmatprep.subr.mxu0 0.0
    %1510 = vmatpush1.msra.mxu0 0.0
    %1511 = vmatprep.subr.mxu0 0.0
    %1512 = vmatpush1.msra.mxu0 0.0
    %1513 = vmatprep.subr.mxu0 0.0
    %1514 = vmatpush1.msra.mxu0 0.0
    %1515 = vmatprep.subr.mxu0 0.0
    %1516 = vmatpush1.msra.mxu0 0.0
    %1517 = vmatprep.subr.mxu0 0.0
    %1518 = vmatpush1.msra.mxu0 0.0
    %1519 = vmatprep.subr.mxu0 0.0
    %1520 = vmatpush1.msra.mxu0 0.0
    %1521 = vmatprep.subr.mxu0 0.0
    %1522 = vmatpush1.msra.mxu0 0.0
    %1523 = vmatprep.subr.mxu0 0.0
    %1524 = vmatpush1.msra.mxu0 0.0
    %1525 = vmatprep.subr.mxu0 0.0
    %1526 = vmatpush1.msra.mxu0 0.0
    %1527 = vmatprep.subr.mxu0 0.0
    %1528 = vmatpush1.msra.mxu0 0.0
    %1529 = vmatprep.subr.mxu0 0.0
    %1530 = vmatpush1.msra.mxu0 0.0
    %1531 = vmatprep.subr.mxu0 0.0
    %1532 = vmatpush1.msra.mxu0 0.0
    %1533 = vmatprep.subr.mxu0 0.0
    %1534 = vmatpush1.msra.mxu0 0.0
    %1535 = vmatprep.subr.mxu0 0.0
    %1536 = vmatpush1.msra.mxu0 0.0
    %1537 = vmatprep.subr.mxu0 0.0
    %1538 = vmatpush1.msra.mxu0 0.0
    %1539 = vmatprep.subr.mxu0 0.0
    %1540 = vmatpush1.msra.mxu0 0.0
    %1541 = vmatprep.subr.mxu0 0.0
    %1542 = vmatpush1.msra.mxu0 0.0
    %1543 = vmatprep.subr.mxu0 0.0
    %1544 = vmatpush1.msra.mxu0 0.0
    %1545 = vmatprep.subr.mxu0 0.0
    %1546 = vmatpush1.msra.mxu0 0.0
    %1547 = vmatprep.subr.mxu0 0.0
    %1548 = vmatpush1.msra.mxu0 0.0
    %1549 = vmatprep.subr.mxu0 0.0
    %1550 = vmatpush1.msra.mxu0 0.0
    %1551 = vmatprep.subr.mxu0 0.0
    %1552 = vmatpush1.msra.mxu0 0.0
    %1553 = vmatprep.subr.mxu0 0.0
    %1554 = vmatpush1.msra.mxu0 0.0
    %1555 = vmatprep.subr.mxu0 0.0
    %1556 = vmatpush1.msra.mxu0 0.0
    %1557 = vmatprep.mubr.f32.mxu0 0.0
    %1558 = vmatmul.mubr.f32.gmra.mrb[0].mxu0 %v1491
    %v1559 = vpop.f32.mrb[0].mxu0
    %v1560 = vadd.f32 0.0, %v1559
    %v1561 = vpop.f32.mrb[0].mxu0
    %1562 = vdwg.mxu0
    %v1564 = vsel %vm79, %v1487, 0
    %1566 = vmatprep.subr.mxu0 0.0
    %1567 = vmatpush1.msra.mxu0 %v64
    %1568 = vmatprep.subr.mxu0 0.0
    %1569 = vmatpush1.msra.mxu0 %v65
    %1570 = vmatprep.subr.mxu0 0.0
    %1571 = vmatpush1.msra.mxu0 %v66
    %1572 = vmatprep.subr.mxu0 0.0
    %1573 = vmatpush1.msra.mxu0 %v67
    %1574 = vmatprep.subr.mxu0 0.0
    %1575 = vmatpush1.msra.mxu0 0.0
    %1576 = vmatprep.subr.mxu0 0.0
    %1577 = vmatpush1.msra.mxu0 0.0
    %1578 = vmatprep.subr.mxu0 0.0
    %1579 = vmatpush1.msra.mxu0 0.0
    %1580 = vmatprep.subr.mxu0 0.0
    %1581 = vmatpush1.msra.mxu0 0.0
    %1582 = vmatprep.subr.mxu0 0.0
    %1583 = vmatpush1.msra.mxu0 0.0
    %1584 = vmatprep.subr.mxu0 0.0
    %1585 = vmatpush1.msra.mxu0 0.0
    %1586 = vmatprep.subr.mxu0 0.0
    %1587 = vmatpush1.msra.mxu0 0.0
    %1588 = vmatprep.subr.mxu0 0.0
    %1589 = vmatpush1.msra.mxu0 0.0
    %1590 = vmatprep.subr.mxu0 0.0
    %1591 = vmatpush1.msra.mxu0 0.0
    %1592 = vmatprep.subr.mxu0 0.0
    %1593 = vmatpush1.msra.mxu0 0.0
    %1594 = vmatprep.subr.mxu0 0.0
    %1595 = vmatpush1.msra.mxu0 0.0
    %1596 = vmatprep.subr.mxu0 0.0
    %1597 = vmatpush1.msra.mxu0 0.0
    %1598 = vmatprep.subr.mxu0 0.0
    %1599 = vmatpush1.msra.mxu0 0.0
    %1600 = vmatprep.subr.mxu0 0.0
    %1601 = vmatpush1.msra.mxu0 0.0
    %1602 = vmatprep.subr.mxu0 0.0
    %1603 = vmatpush1.msra.mxu0 0.0
    %1604 = vmatprep.subr.mxu0 0.0
    %1605 = vmatpush1.msra.mxu0 0.0
    %1606 = vmatprep.subr.mxu0 0.0
    %1607 = vmatpush1.msra.mxu0 0.0
    %1608 = vmatprep.subr.mxu0 0.0
    %1609 = vmatpush1.msra.mxu0 0.0
    %1610 = vmatprep.subr.mxu0 0.0
    %1611 = vmatpush1.msra.mxu0 0.0
    %1612 = vmatprep.subr.mxu0 0.0
    %1613 = vmatpush1.msra.mxu0 0.0
    %1614 = vmatprep.subr.mxu0 0.0
    %1615 = vmatpush1.msra.mxu0 0.0
    %1616 = vmatprep.subr.mxu0 0.0
    %1617 = vmatpush1.msra.mxu0 0.0
    %1618 = vmatprep.subr.mxu0 0.0
    %1619 = vmatpush1.msra.mxu0 0.0
    %1620 = vmatprep.subr.mxu0 0.0
    %1621 = vmatpush1.msra.mxu0 0.0
    %1622 = vmatprep.subr.mxu0 0.0
    %1623 = vmatpush1.msra.mxu0 0.0
    %1624 = vmatprep.subr.mxu0 0.0
    %1625 = vmatpush1.msra.mxu0 0.0
    %1626 = vmatprep.subr.mxu0 0.0
    %1627 = vmatpush1.msra.mxu0 0.0
    %1628 = vmatprep.subr.mxu0 0.0
    %1629 = vmatpush1.msra.mxu0 0.0
    %1630 = vmatprep.mubr.f32.mxu0 0.0
    %1631 = vmatmul.mubr.f32.gmra.mrb[0].mxu0 %v1564
    %v1632 = vpop.f32.mrb[0].mxu0
    %v1633 = vadd.f32 %v1560, %v1632
    %v1634 = vpop.f32.mrb[0].mxu0
    %1635 = vdwg.mxu0
    %v1636 = vadd.f32 %v1633, %v72
    %v1637 = vxor.u32 %v1636, 2147483648
    %v1638 = vmul.f32 %v1637, 1.442695
    %v1639 = vpow.pop %v1638
    %v1640 = vadd.f32 %v1639, 1.0
    %v1641 = vrcp.pop %v1640
    %v1642 = vmul.f32 1.0, %v1641
    %v1643 = vmul.f32 %v1642, 2.0
    %v1644 = vsub.f32 %v1643, 1.0
    %v1645 = vmul.f32 %v1642, %v1477
    %1647 = vrot.lane.b32.xlu0 %v1644, 64
    %v1648 = vpop.permute.xlu0 %1647
    %v1650 = vmul.f32 %v1642, %v1648
    %1652 = vrot.lane.b32.xlu0 %v1650, 32
    %v1653 = vpop.permute.xlu0 %1652
    %v1655 = vadd.f32 %v1645, %v1653
    %v1656 = vtanh.pop %v1655
    %1658 = vrot.lane.b32.xlu0 %v1656, 64
    %v1659 = vpop.permute.xlu0 %1658
    %v1661 = vmul.f32 %v1642, %v1659
    %1663 = vrot.lane.b32.xlu0 %v1661, 32
    %v1664 = vpop.permute.xlu0 %1663
    %v1665 = vsel %vm79, %v1664, 0
    %1667 = vmatprep.subr.mxu0 0.0
    %1668 = vmatpush1.msra.mxu0 %v73
    %1669 = vmatprep.subr.mxu0 0.0
    %1670 = vmatpush1.msra.mxu0 %v74
    %1671 = vmatprep.subr.mxu0 0.0
    %1672 = vmatpush1.msra.mxu0 %v75
    %1673 = vmatprep.subr.mxu0 0.0
    %1674 = vmatpush1.msra.mxu0 %v76
    %1675 = vmatprep.subr.mxu0 0.0
    %1676 = vmatpush1.msra.mxu0 0.0
    %1677 = vmatprep.subr.mxu0 0.0
    %1678 = vmatpush1.msra.mxu0 0.0
    %1679 = vmatprep.subr.mxu0 0.0
    %1680 = vmatpush1.msra.mxu0 0.0
    %1681 = vmatprep.subr.mxu0 0.0
    %1682 = vmatpush1.msra.mxu0 0.0
    %1683 = vmatprep.subr.mxu0 0.0
    %1684 = vmatpush1.msra.mxu0 0.0
    %1685 = vmatprep.subr.mxu0 0.0
    %1686 = vmatpush1.msra.mxu0 0.0
    %1687 = vmatprep.subr.mxu0 0.0
    %1688 = vmatpush1.msra.mxu0 0.0
    %1689 = vmatprep.subr.mxu0 0.0
    %1690 = vmatpush1.msra.mxu0 0.0
    %1691 = vmatprep.subr.mxu0 0.0
    %1692 = vmatpush1.msra.mxu0 0.0
    %1693 = vmatprep.subr.mxu0 0.0
    %1694 = vmatpush1.msra.mxu0 0.0
    %1695 = vmatprep.subr.mxu0 0.0
    %1696 = vmatpush1.msra.mxu0 0.0
    %1697 = vmatprep.subr.mxu0 0.0
    %1698 = vmatpush1.msra.mxu0 0.0
    %1699 = vmatprep.subr.mxu0 0.0
    %1700 = vmatpush1.msra.mxu0 0.0
    %1701 = vmatprep.subr.mxu0 0.0
    %1702 = vmatpush1.msra.mxu0 0.0
    %1703 = vmatprep.subr.mxu0 0.0
    %1704 = vmatpush1.msra.mxu0 0.0
    %1705 = vmatprep.subr.mxu0 0.0
    %1706 = vmatpush1.msra.mxu0 0.0
    %1707 = vmatprep.subr.mxu0 0.0
    %1708 = vmatpush1.msra.mxu0 0.0
    %1709 = vmatprep.subr.mxu0 0.0
    %1710 = vmatpush1.msra.mxu0 0.0
    %1711 = vmatprep.subr.mxu0 0.0
    %1712 = vmatpush1.msra.mxu0 0.0
    %1713 = vmatprep.subr.mxu0 0.0
    %1714 = vmatpush1.msra.mxu0 0.0
    %1715 = vmatprep.subr.mxu0 0.0
    %1716 = vmatpush1.msra.mxu0 0.0
    %1717 = vmatprep.subr.mxu0 0.0
    %1718 = vmatpush1.msra.mxu0 0.0
    %1719 = vmatprep.subr.mxu0 0.0
    %1720 = vmatpush1.msra.mxu0 0.0
    %1721 = vmatprep.subr.mxu0 0.0
    %1722 = vmatpush1.msra.mxu0 0.0
    %1723 = vmatprep.subr.mxu0 0.0
    %1724 = vmatpush1.msra.mxu0 0.0
    %1725 = vmatprep.subr.mxu0 0.0
    %1726 = vmatpush1.msra.mxu0 0.0
    %1727 = vmatprep.subr.mxu0 0.0
    %1728 = vmatpush1.msra.mxu0 0.0
    %1729 = vmatprep.subr.mxu0 0.0
    %1730 = vmatpush1.msra.mxu0 0.0
    %1731 = vmatprep.mubr.f32.mxu0 0.0
    %1732 = vmatmul.mubr.f32.gmra.mrb[0].mxu0 %v1665
    %v1733 = vpop.f32.mrb[0].mxu0
    %v1734 = vadd.f32 %v77, %v1733
    %v1735 = vpop.f32.mrb[0].mxu0
    %1736 = vdwg.mxu0
    %s1737 = scalar_lea.vmem [#allocation5], 8
    %1738 = vst [vmem:[%s1737] sm:$0xff] %v1734
    %1739 = vmax.xlane.f32.xlu0 %v1734
    %v1740 = vpop.xlane.xlu0 %1739
    %vm1741 = vcmp.ge.f32.partialorder %v1734, %v1740
    %v1742 = vsel %vm1741, %v1486, 128
    %v1743 = vand.u32 %v1742, 65535
    %v1744 = vshra.s32 %v1742, 16
    %v1745 = vcvt.s32.f32 %v1743
    %v1746 = vcvt.s32.f32 %v1744
    %1747 = vmin.xlane.f32.xlu0 %v1746
    %v1748 = vpop.xlane.xlu0 %1747
    %vm1749 = vcmp.eq.f32.partialorder %v1746, %v1748
    %v1750 = vsel %vm1749, %v1745, inf
    %1751 = vmin.xlane.f32.xlu0 %v1750
    %v1752 = vpop.xlane.xlu0 %1751
    %v1753 = vcvt.f32.s32 %v1752
    %v1754 = vcvt.f32.s32 %v1748
    %v1755 = vshll.u32 %v1754, 16
    %v1756 = vadd.s32 %v1755, %v1753
    %vm1757 = vcmp.eq.s32.totalorder %v1486, %v1756
    %v1758 = vsel %vm1757, 1, 0
    %v1759 = vcvt.s32.f32 %v1758
    %v1760 = vld [vmem:[%s11] sm:$0xff]
    %v1761 = vld [vmem:[%s11 + $0x8] sm:$0xff]
    %v1762 = vld [vmem:[%s11 + $0x10] sm:$0xff]
    %v1763 = vld [vmem:[%s11 + $0x18] sm:$0xff]
    %v1764 = vld [vmem:[%s11 + $0x20] sm:$0xff]
    %v1765 = vld [vmem:[%s11 + $0x28] sm:$0xff]
    %v1766 = vld [vmem:[%s11 + $0x30] sm:$0xff]
    %v1767 = vld [vmem:[%s11 + $0x38] sm:$0xff]
    %v1768 = vld [vmem:[%s11 + $0x40] sm:$0xff]
    %v1769 = vld [vmem:[%s11 + $0x48] sm:$0xff]
    %v1770 = vld [vmem:[%s11 + $0x50] sm:$0xff]
    %v1771 = vld [vmem:[%s11 + $0x58] sm:$0xff]
    %v1772 = vld [vmem:[%s11 + $0x60] sm:$0xff]
    %v1773 = vld [vmem:[%s11 + $0x68] sm:$0xff]
    %v1774 = vld [vmem:[%s11 + $0x70] sm:$0xff]
    %v1775 = vld [vmem:[%s11 + $0x78] sm:$0xff]
    %1776 = vmatprep.subr.mxu0 0.0
    %1777 = vmatpush1.msra.mxu0 %v1760
    %1778 = vmatprep.subr.mxu0 0.0
    %1779 = vmatpush1.msra.mxu0 %v1761
    %1780 = vmatprep.subr.mxu0 0.0
    %1781 = vmatpush1.msra.mxu0 %v1762
    %1782 = vmatprep.subr.mxu0 0.0
    %1783 = vmatpush1.msra.mxu0 %v1763
    %1784 = vmatprep.subr.mxu0 0.0
    %1785 = vmatpush1.msra.mxu0 %v1764
    %1786 = vmatprep.subr.mxu0 0.0
    %1787 = vmatpush1.msra.mxu0 %v1765
    %1788 = vmatprep.subr.mxu0 0.0
    %1789 = vmatpush1.msra.mxu0 %v1766
    %1790 = vmatprep.subr.mxu0 0.0
    %1791 = vmatpush1.msra.mxu0 %v1767
    %1792 = vmatprep.subr.mxu0 0.0
    %1793 = vmatpush1.msra.mxu0 %v1768
    %1794 = vmatprep.subr.mxu0 0.0
    %1795 = vmatpush1.msra.mxu0 %v1769
    %1796 = vmatprep.subr.mxu0 0.0
    %1797 = vmatpush1.msra.mxu0 %v1770
    %1798 = vmatprep.subr.mxu0 0.0
    %1799 = vmatpush1.msra.mxu0 %v1771
    %1800 = vmatprep.subr.mxu0 0.0
    %1801 = vmatpush1.msra.mxu0 %v1772
    %1802 = vmatprep.subr.mxu0 0.0
    %1803 = vmatpush1.msra.mxu0 %v1773
    %1804 = vmatprep.subr.mxu0 0.0
    %1805 = vmatpush1.msra.mxu0 %v1774
    %1806 = vmatprep.subr.mxu0 0.0
    %1807 = vmatpush1.msra.mxu0 %v1775
    %1808 = vmatprep.subr.mxu0 0.0
    %1809 = vmatpush1.msra.mxu0 0.0
    %1810 = vmatprep.subr.mxu0 0.0
    %1811 = vmatpush1.msra.mxu0 0.0
    %1812 = vmatprep.subr.mxu0 0.0
    %1813 = vmatpush1.msra.mxu0 0.0
    %1814 = vmatprep.subr.mxu0 0.0
    %1815 = vmatpush1.msra.mxu0 0.0
    %1816 = vmatprep.subr.mxu0 0.0
    %1817 = vmatpush1.msra.mxu0 0.0
    %1818 = vmatprep.subr.mxu0 0.0
    %1819 = vmatpush1.msra.mxu0 0.0
    %1820 = vmatprep.subr.mxu0 0.0
    %1821 = vmatpush1.msra.mxu0 0.0
    %1822 = vmatprep.subr.mxu0 0.0
    %1823 = vmatpush1.msra.mxu0 0.0
    %1824 = vmatprep.subr.mxu0 0.0
    %1825 = vmatpush1.msra.mxu0 0.0
    %1826 = vmatprep.subr.mxu0 0.0
    %1827 = vmatpush1.msra.mxu0 0.0
    %1828 = vmatprep.subr.mxu0 0.0
    %1829 = vmatpush1.msra.mxu0 0.0
    %1830 = vmatprep.subr.mxu0 0.0
    %1831 = vmatpush1.msra.mxu0 0.0
    %1832 = vmatprep.subr.mxu0 0.0
    %1833 = vmatpush1.msra.mxu0 0.0
    %1834 = vmatprep.subr.mxu0 0.0
    %1835 = vmatpush1.msra.mxu0 0.0
    %1836 = vmatprep.subr.mxu0 0.0
    %1837 = vmatpush1.msra.mxu0 0.0
    %1838 = vmatprep.subr.mxu0 0.0
    %1839 = vmatpush1.msra.mxu0 0.0
    %1840 = vmatprep.mubr.f32.mxu0 0.0
    %1841 = vmatmul.mubr.f32.gmra.mrb[0].mxu0 %v1759
    %v1842 = vpop.f32.mrb[0].mxu0
    %v1843 = vadd.f32 0.0, %v1842
    %v1844 = vpop.f32.mrb[0].mxu0
    %1845 = vdwg.mxu0
    %s1846 = sld [smem:[#allocation2 + $0x1]]
    %p1847 = scmp.ne.s32.totalorder %s1846, 0
    %s1848 = scalar_select %p1847, 1, 0
    %s1849 = scvt.s32.f32 %s1848
    %s1850 = scalar_lea.vmem %s2, 8
    %v1851 = vld [vmem:[%s1850] sm:$0xff]
    %v1852 = vstv %s1849
    %v1853 = vmul.f32 %v1852, %v1851
    %s1854 = ssub.f32 1.0, %s1849
    %v1855 = vstv %s1854
    %v1856 = vmul.f32 %v1855, %v1843
    %v1857 = vadd.f32 %v1853, %v1856
    %1858 = vmatprep.subr.mxu0 0.0
    %1859 = vmatpush1.msra.mxu0 %v68
    %1860 = vmatprep.subr.mxu0 0.0
    %1861 = vmatpush1.msra.mxu0 %v69
    %1862 = vmatprep.subr.mxu0 0.0
    %1863 = vmatpush1.msra.mxu0 %v70
    %1864 = vmatprep.subr.mxu0 0.0
    %1865 = vmatpush1.msra.mxu0 %v71
    %1866 = vmatprep.subr.mxu0 0.0
    %1867 = vmatpush1.msra.mxu0 0.0
    %1868 = vmatprep.subr.mxu0 0.0
    %1869 = vmatpush1.msra.mxu0 0.0
    %1870 = vmatprep.subr.mxu0 0.0
    %1871 = vmatpush1.msra.mxu0 0.0
    %1872 = vmatprep.subr.mxu0 0.0
    %1873 = vmatpush1.msra.mxu0 0.0
    %1874 = vmatprep.subr.mxu0 0.0
    %1875 = vmatpush1.msra.mxu0 0.0
    %1876 = vmatprep.subr.mxu0 0.0
    %1877 = vmatpush1.msra.mxu0 0.0
    %1878 = vmatprep.subr.mxu0 0.0
    %1879 = vmatpush1.msra.mxu0 0.0
    %1880 = vmatprep.subr.mxu0 0.0
    %1881 = vmatpush1.msra.mxu0 0.0
    %1882 = vmatprep.subr.mxu0 0.0
    %1883 = vmatpush1.msra.mxu0 0.0
    %1884 = vmatprep.subr.mxu0 0.0
    %1885 = vmatpush1.msra.mxu0 0.0
    %1886 = vmatprep.subr.mxu0 0.0
    %1887 = vmatpush1.msra.mxu0 0.0
    %1888 = vmatprep.subr.mxu0 0.0
    %1889 = vmatpush1.msra.mxu0 0.0
    %1890 = vmatprep.subr.mxu0 0.0
    %1891 = vmatpush1.msra.mxu0 0.0
    %1892 = vmatprep.subr.mxu0 0.0
    %1893 = vmatpush1.msra.mxu0 0.0
    %1894 = vmatprep.subr.mxu0 0.0
    %1895 = vmatpush1.msra.mxu0 0.0
    %1896 = vmatprep.subr.mxu0 0.0
    %1897 = vmatpush1.msra.mxu0 0.0
    %1898 = vmatprep.subr.mxu0 0.0
    %1899 = vmatpush1.msra.mxu0 0.0
    %1900 = vmatprep.subr.mxu0 0.0
    %1901 = vmatpush1.msra.mxu0 0.0
    %1902 = vmatprep.subr.mxu0 0.0
    %1903 = vmatpush1.msra.mxu0 0.0
    %1904 = vmatprep.subr.mxu0 0.0
    %1905 = vmatpush1.msra.mxu0 0.0
    %1906 = vmatprep.subr.mxu0 0.0
    %1907 = vmatpush1.msra.mxu0 0.0
    %1908 = vmatprep.subr.mxu0 0.0
    %1909 = vmatpush1.msra.mxu0 0.0
    %1910 = vmatprep.subr.mxu0 0.0
    %1911 = vmatpush1.msra.mxu0 0.0
    %1912 = vmatprep.subr.mxu0 0.0
    %1913 = vmatpush1.msra.mxu0 0.0
    %1914 = vmatprep.subr.mxu0 0.0
    %1915 = vmatpush1.msra.mxu0 0.0
    %1916 = vmatprep.subr.mxu0 0.0
    %1917 = vmatpush1.msra.mxu0 0.0
    %1918 = vmatprep.subr.mxu0 0.0
    %1919 = vmatpush1.msra.mxu0 0.0
    %1920 = vmatprep.subr.mxu0 0.0
    %1921 = vmatpush1.msra.mxu0 0.0
    %1922 = vmatprep.mubr.f32.mxu0 0.0
    %1923 = vmatmul.mubr.f32.gmra.mrb[0].mxu0 %v1665
    %v1924 = vpop.f32.mrb[0].mxu0
    %v1925 = vadd.f32 0.0, %v1924
    %v1926 = vpop.f32.mrb[0].mxu0
    %1927 = vdwg.mxu0
    %v1929 = vsel %vm79, %v1857, 0
    %1931 = vmatprep.subr.mxu0 0.0
    %1932 = vmatpush1.msra.mxu0 %v64
    %1933 = vmatprep.subr.mxu0 0.0
    %1934 = vmatpush1.msra.mxu0 %v65
    %1935 = vmatprep.subr.mxu0 0.0
    %1936 = vmatpush1.msra.mxu0 %v66
    %1937 = vmatprep.subr.mxu0 0.0
    %1938 = vmatpush1.msra.mxu0 %v67
    %1939 = vmatprep.subr.mxu0 0.0
    %1940 = vmatpush1.msra.mxu0 0.0
    %1941 = vmatprep.subr.mxu0 0.0
    %1942 = vmatpush1.msra.mxu0 0.0
    %1943 = vmatprep.subr.mxu0 0.0
    %1944 = vmatpush1.msra.mxu0 0.0
    %1945 = vmatprep.subr.mxu0 0.0
    %1946 = vmatpush1.msra.mxu0 0.0
    %1947 = vmatprep.subr.mxu0 0.0
    %1948 = vmatpush1.msra.mxu0 0.0
    %1949 = vmatprep.subr.mxu0 0.0
    %1950 = vmatpush1.msra.mxu0 0.0
    %1951 = vmatprep.subr.mxu0 0.0
    %1952 = vmatpush1.msra.mxu0 0.0
    %1953 = vmatprep.subr.mxu0 0.0
    %1954 = vmatpush1.msra.mxu0 0.0
    %1955 = vmatprep.subr.mxu0 0.0
    %1956 = vmatpush1.msra.mxu0 0.0
    %1957 = vmatprep.subr.mxu0 0.0
    %1958 = vmatpush1.msra.mxu0 0.0
    %1959 = vmatprep.subr.mxu0 0.0
    %1960 = vmatpush1.msra.mxu0 0.0
    %1961 = vmatprep.subr.mxu0 0.0
    %1962 = vmatpush1.msra.mxu0 0.0
    %1963 = vmatprep.subr.mxu0 0.0
    %1964 = vmatpush1.msra.mxu0 0.0
    %1965 = vmatprep.subr.mxu0 0.0
    %1966 = vmatpush1.msra.mxu0 0.0
    %1967 = vmatprep.subr.mxu0 0.0
    %1968 = vmatpush1.msra.mxu0 0.0
    %1969 = vmatprep.subr.mxu0 0.0
    %1970 = vmatpush1.msra.mxu0 0.0
    %1971 = vmatprep.subr.mxu0 0.0
    %1972 = vmatpush1.msra.mxu0 0.0
    %1973 = vmatprep.subr.mxu0 0.0
    %1974 = vmatpush1.msra.mxu0 0.0
    %1975 = vmatprep.subr.mxu0 0.0
    %1976 = vmatpush1.msra.mxu0 0.0
    %1977 = vmatprep.subr.mxu0 0.0
    %1978 = vmatpush1.msra.mxu0 0.0
    %1979 = vmatprep.subr.mxu0 0.0
    %1980 = vmatpush1.msra.mxu0 0.0
    %1981 = vmatprep.subr.mxu0 0.0
    %1982 = vmatpush1.msra.mxu0 0.0
    %1983 = vmatprep.subr.mxu0 0.0
    %1984 = vmatpush1.msra.mxu0 0.0
    %1985 = vmatprep.subr.mxu0 0.0
    %1986 = vmatpush1.msra.mxu0 0.0
    %1987 = vmatprep.subr.mxu0 0.0
    %1988 = vmatpush1.msra.mxu0 0.0
    %1989 = vmatprep.subr.mxu0 0.0
    %1990 = vmatpush1.msra.mxu0 0.0
    %1991 = vmatprep.subr.mxu0 0.0
    %1992 = vmatpush1.msra.mxu0 0.0
    %1993 = vmatprep.subr.mxu0 0.0
    %1994 = vmatpush1.msra.mxu0 0.0
    %1995 = vmatprep.mubr.f32.mxu0 0.0
    %1996 = vmatmul.mubr.f32.gmra.mrb[0].mxu0 %v1929
    %v1997 = vpop.f32.mrb[0].mxu0
    %v1998 = vadd.f32 %v1925, %v1997
    %v1999 = vpop.f32.mrb[0].mxu0
    %2000 = vdwg.mxu0
    %v2001 = vadd.f32 %v1998, %v72
    %v2002 = vxor.u32 %v2001, 2147483648
    %v2003 = vmul.f32 %v2002, 1.442695
    %v2004 = vpow.pop %v2003
    %v2005 = vadd.f32 %v2004, 1.0
    %v2006 = vrcp.pop %v2005
    %v2007 = vmul.f32 1.0, %v2006
    %v2008 = vmul.f32 %v2007, 2.0
    %v2009 = vsub.f32 %v2008, 1.0
    %v2010 = vmul.f32 %v2007, %v1655
    %2012 = vrot.lane.b32.xlu0 %v2009, 64
    %v2013 = vpop.permute.xlu0 %2012
    %v2015 = vmul.f32 %v2007, %v2013
    %2017 = vrot.lane.b32.xlu0 %v2015, 32
    %v2018 = vpop.permute.xlu0 %2017
    %v2020 = vadd.f32 %v2010, %v2018
    %v2021 = vtanh.pop %v2020
    %2023 = vrot.lane.b32.xlu0 %v2021, 64
    %v2024 = vpop.permute.xlu0 %2023
    %v2026 = vmul.f32 %v2007, %v2024
    %2028 = vrot.lane.b32.xlu0 %v2026, 32
    %v2029 = vpop.permute.xlu0 %2028
    %v2030 = vsel %vm79, %v2029, 0
    %2032 = vmatprep.subr.mxu0 0.0
    %2033 = vmatpush1.msra.mxu0 %v73
    %2034 = vmatprep.subr.mxu0 0.0
    %2035 = vmatpush1.msra.mxu0 %v74
    %2036 = vmatprep.subr.mxu0 0.0
    %2037 = vmatpush1.msra.mxu0 %v75
    %2038 = vmatprep.subr.mxu0 0.0
    %2039 = vmatpush1.msra.mxu0 %v76
    %2040 = vmatprep.subr.mxu0 0.0
    %2041 = vmatpush1.msra.mxu0 0.0
    %2042 = vmatprep.subr.mxu0 0.0
    %2043 = vmatpush1.msra.mxu0 0.0
    %2044 = vmatprep.subr.mxu0 0.0
    %2045 = vmatpush1.msra.mxu0 0.0
    %2046 = vmatprep.subr.mxu0 0.0
    %2047 = vmatpush1.msra.mxu0 0.0
    %2048 = vmatprep.subr.mxu0 0.0
    %2049 = vmatpush1.msra.mxu0 0.0
    %2050 = vmatprep.subr.mxu0 0.0
    %2051 = vmatpush1.msra.mxu0 0.0
    %2052 = vmatprep.subr.mxu0 0.0
    %2053 = vmatpush1.msra.mxu0 0.0
    %2054 = vmatprep.subr.mxu0 0.0
    %2055 = vmatpush1.msra.mxu0 0.0
    %2056 = vmatprep.subr.mxu0 0.0
    %2057 = vmatpush1.msra.mxu0 0.0
    %2058 = vmatprep.subr.mxu0 0.0
    %2059 = vmatpush1.msra.mxu0 0.0
    %2060 = vmatprep.subr.mxu0 0.0
    %2061 = vmatpush1.msra.mxu0 0.0
    %2062 = vmatprep.subr.mxu0 0.0
    %2063 = vmatpush1.msra.mxu0 0.0
    %2064 = vmatprep.subr.mxu0 0.0
    %2065 = vmatpush1.msra.mxu0 0.0
    %2066 = vmatprep.subr.mxu0 0.0
    %2067 = vmatpush1.msra.mxu0 0.0
    %2068 = vmatprep.subr.mxu0 0.0
    %2069 = vmatpush1.msra.mxu0 0.0
    %2070 = vmatprep.subr.mxu0 0.0
    %2071 = vmatpush1.msra.mxu0 0.0
    %2072 = vmatprep.subr.mxu0 0.0
    %2073 = vmatpush1.msra.mxu0 0.0
    %2074 = vmatprep.subr.mxu0 0.0
    %2075 = vmatpush1.msra.mxu0 0.0
    %2076 = vmatprep.subr.mxu0 0.0
    %2077 = vmatpush1.msra.mxu0 0.0
    %2078 = vmatprep.subr.mxu0 0.0
    %2079 = vmatpush1.msra.mxu0 0.0
    %2080 = vmatprep.subr.mxu0 0.0
    %2081 = vmatpush1.msra.mxu0 0.0
    %2082 = vmatprep.subr.mxu0 0.0
    %2083 = vmatpush1.msra.mxu0 0.0
    %2084 = vmatprep.subr.mxu0 0.0
    %2085 = vmatpush1.msra.mxu0 0.0
    %2086 = vmatprep.subr.mxu0 0.0
    %2087 = vmatpush1.msra.mxu0 0.0
    %2088 = vmatprep.subr.mxu0 0.0
    %2089 = vmatpush1.msra.mxu0 0.0
    %2090 = vmatprep.subr.mxu0 0.0
    %2091 = vmatpush1.msra.mxu0 0.0
    %2092 = vmatprep.subr.mxu0 0.0
    %2093 = vmatpush1.msra.mxu0 0.0
    %2094 = vmatprep.subr.mxu0 0.0
    %2095 = vmatpush1.msra.mxu0 0.0
    %2096 = vmatprep.mubr.f32.mxu0 0.0
    %2097 = vmatmul.mubr.f32.gmra.mrb[0].mxu0 %v2030
    %v2098 = vpop.f32.mrb[0].mxu0
    %v2099 = vadd.f32 %v77, %v2098
    %v2100 = vpop.f32.mrb[0].mxu0
    %2101 = vdwg.mxu0
    %s2102 = scalar_lea.vmem [#allocation5], 16
    %2103 = vst [vmem:[%s2102] sm:$0xff] %v2099
    %2104 = vmax.xlane.f32.xlu0 %v2099
    %v2105 = vpop.xlane.xlu0 %2104
    %vm2106 = vcmp.ge.f32.partialorder %v2099, %v2105
    %v2107 = vsel %vm2106, %v1486, 128
    %v2108 = vand.u32 %v2107, 65535
    %v2109 = vshra.s32 %v2107, 16
    %v2110 = vcvt.s32.f32 %v2108
    %v2111 = vcvt.s32.f32 %v2109
    %2112 = vmin.xlane.f32.xlu0 %v2111
    %v2113 = vpop.xlane.xlu0 %2112
    %vm2114 = vcmp.eq.f32.partialorder %v2111, %v2113
    %v2115 = vsel %vm2114, %v2110, inf
    %2116 = vmin.xlane.f32.xlu0 %v2115
    %v2117 = vpop.xlane.xlu0 %2116
    %v2118 = vcvt.f32.s32 %v2117
    %v2119 = vcvt.f32.s32 %v2113
    %v2120 = vshll.u32 %v2119, 16
    %v2121 = vadd.s32 %v2120, %v2118
    %vm2122 = vcmp.eq.s32.totalorder %v1486, %v2121
    %v2123 = vsel %vm2122, 1, 0
    %v2124 = vcvt.s32.f32 %v2123
    %v2125 = vld [vmem:[%s11] sm:$0xff]
    %v2126 = vld [vmem:[%s11 + $0x8] sm:$0xff]
    %v2127 = vld [vmem:[%s11 + $0x10] sm:$0xff]
    %v2128 = vld [vmem:[%s11 + $0x18] sm:$0xff]
    %v2129 = vld [vmem:[%s11 + $0x20] sm:$0xff]
    %v2130 = vld [vmem:[%s11 + $0x28] sm:$0xff]
    %v2131 = vld [vmem:[%s11 + $0x30] sm:$0xff]
    %v2132 = vld [vmem:[%s11 + $0x38] sm:$0xff]
    %v2133 = vld [vmem:[%s11 + $0x40] sm:$0xff]
    %v2134 = vld [vmem:[%s11 + $0x48] sm:$0xff]
    %v2135 = vld [vmem:[%s11 + $0x50] sm:$0xff]
    %v2136 = vld [vmem:[%s11 + $0x58] sm:$0xff]
    %v2137 = vld [vmem:[%s11 + $0x60] sm:$0xff]
    %v2138 = vld [vmem:[%s11 + $0x68] sm:$0xff]
    %v2139 = vld [vmem:[%s11 + $0x70] sm:$0xff]
    %v2140 = vld [vmem:[%s11 + $0x78] sm:$0xff]
    %2141 = vmatprep.subr.mxu0 0.0
    %2142 = vmatpush1.msra.mxu0 %v2125
    %2143 = vmatprep.subr.mxu0 0.0
    %2144 = vmatpush1.msra.mxu0 %v2126
    %2145 = vmatprep.subr.mxu0 0.0
    %2146 = vmatpush1.msra.mxu0 %v2127
    %2147 = vmatprep.subr.mxu0 0.0
    %2148 = vmatpush1.msra.mxu0 %v2128
    %2149 = vmatprep.subr.mxu0 0.0
    %2150 = vmatpush1.msra.mxu0 %v2129
    %2151 = vmatprep.subr.mxu0 0.0
    %2152 = vmatpush1.msra.mxu0 %v2130
    %2153 = vmatprep.subr.mxu0 0.0
    %2154 = vmatpush1.msra.mxu0 %v2131
    %2155 = vmatprep.subr.mxu0 0.0
    %2156 = vmatpush1.msra.mxu0 %v2132
    %2157 = vmatprep.subr.mxu0 0.0
    %2158 = vmatpush1.msra.mxu0 %v2133
    %2159 = vmatprep.subr.mxu0 0.0
    %2160 = vmatpush1.msra.mxu0 %v2134
    %2161 = vmatprep.subr.mxu0 0.0
    %2162 = vmatpush1.msra.mxu0 %v2135
    %2163 = vmatprep.subr.mxu0 0.0
    %2164 = vmatpush1.msra.mxu0 %v2136
    %2165 = vmatprep.subr.mxu0 0.0
    %2166 = vmatpush1.msra.mxu0 %v2137
    %2167 = vmatprep.subr.mxu0 0.0
    %2168 = vmatpush1.msra.mxu0 %v2138
    %2169 = vmatprep.subr.mxu0 0.0
    %2170 = vmatpush1.msra.mxu0 %v2139
    %2171 = vmatprep.subr.mxu0 0.0
    %2172 = vmatpush1.msra.mxu0 %v2140
    %2173 = vmatprep.subr.mxu0 0.0
    %2174 = vmatpush1.msra.mxu0 0.0
    %2175 = vmatprep.subr.mxu0 0.0
    %2176 = vmatpush1.msra.mxu0 0.0
    %2177 = vmatprep.subr.mxu0 0.0
    %2178 = vmatpush1.msra.mxu0 0.0
    %2179 = vmatprep.subr.mxu0 0.0
    %2180 = vmatpush1.msra.mxu0 0.0
    %2181 = vmatprep.subr.mxu0 0.0
    %2182 = vmatpush1.msra.mxu0 0.0
    %2183 = vmatprep.subr.mxu0 0.0
    %2184 = vmatpush1.msra.mxu0 0.0
    %2185 = vmatprep.subr.mxu0 0.0
    %2186 = vmatpush1.msra.mxu0 0.0
    %2187 = vmatprep.subr.mxu0 0.0
    %2188 = vmatpush1.msra.mxu0 0.0
    %2189 = vmatprep.subr.mxu0 0.0
    %2190 = vmatpush1.msra.mxu0 0.0
    %2191 = vmatprep.subr.mxu0 0.0
    %2192 = vmatpush1.msra.mxu0 0.0
    %2193 = vmatprep.subr.mxu0 0.0
    %2194 = vmatpush1.msra.mxu0 0.0
    %2195 = vmatprep.subr.mxu0 0.0
    %2196 = vmatpush1.msra.mxu0 0.0
    %2197 = vmatprep.subr.mxu0 0.0
    %2198 = vmatpush1.msra.mxu0 0.0
    %2199 = vmatprep.subr.mxu0 0.0
    %2200 = vmatpush1.msra.mxu0 0.0
    %2201 = vmatprep.subr.mxu0 0.0
    %2202 = vmatpush1.msra.mxu0 0.0
    %2203 = vmatprep.subr.mxu0 0.0
    %2204 = vmatpush1.msra.mxu0 0.0
    %2205 = vmatprep.mubr.f32.mxu0 0.0
    %2206 = vmatmul.mubr.f32.gmra.mrb[0].mxu0 %v2124
    %v2207 = vpop.f32.mrb[0].mxu0
    %v2208 = vadd.f32 0.0, %v2207
    %v2209 = vpop.f32.mrb[0].mxu0
    %2210 = vdwg.mxu0
    %s2211 = sld [smem:[#allocation2 + $0x2]]
    %p2212 = scmp.ne.s32.totalorder %s2211, 0
    %s2213 = scalar_select %p2212, 1, 0
    %s2214 = scvt.s32.f32 %s2213
    %s2215 = scalar_lea.vmem %s2, 16
    %v2216 = vld [vmem:[%s2215] sm:$0xff]
    %v2217 = vstv %s2214
    %v2218 = vmul.f32 %v2217, %v2216
    %s2219 = ssub.f32 1.0, %s2214
    %v2220 = vstv %s2219
    %v2221 = vmul.f32 %v2220, %v2208
    %v2222 = vadd.f32 %v2218, %v2221
    %2223 = vmatprep.subr.mxu0 0.0
    %2224 = vmatpush1.msra.mxu0 %v68
    %2225 = vmatprep.subr.mxu0 0.0
    %2226 = vmatpush1.msra.mxu0 %v69
    %2227 = vmatprep.subr.mxu0 0.0
    %2228 = vmatpush1.msra.mxu0 %v70
    %2229 = vmatprep.subr.mxu0 0.0
    %2230 = vmatpush1.msra.mxu0 %v71
    %2231 = vmatprep.subr.mxu0 0.0
    %2232 = vmatpush1.msra.mxu0 0.0
    %2233 = vmatprep.subr.mxu0 0.0
    %2234 = vmatpush1.msra.mxu0 0.0
    %2235 = vmatprep.subr.mxu0 0.0
    %2236 = vmatpush1.msra.mxu0 0.0
    %2237 = vmatprep.subr.mxu0 0.0
    %2238 = vmatpush1.msra.mxu0 0.0
    %2239 = vmatprep.subr.mxu0 0.0
    %2240 = vmatpush1.msra.mxu0 0.0
    %2241 = vmatprep.subr.mxu0 0.0
    %2242 = vmatpush1.msra.mxu0 0.0
    %2243 = vmatprep.subr.mxu0 0.0
    %2244 = vmatpush1.msra.mxu0 0.0
    %2245 = vmatprep.subr.mxu0 0.0
    %2246 = vmatpush1.msra.mxu0 0.0
    %2247 = vmatprep.subr.mxu0 0.0
    %2248 = vmatpush1.msra.mxu0 0.0
    %2249 = vmatprep.subr.mxu0 0.0
    %2250 = vmatpush1.msra.mxu0 0.0
    %2251 = vmatprep.subr.mxu0 0.0
    %2252 = vmatpush1.msra.mxu0 0.0
    %2253 = vmatprep.subr.mxu0 0.0
    %2254 = vmatpush1.msra.mxu0 0.0
    %2255 = vmatprep.subr.mxu0 0.0
    %2256 = vmatpush1.msra.mxu0 0.0
    %2257 = vmatprep.subr.mxu0 0.0
    %2258 = vmatpush1.msra.mxu0 0.0
    %2259 = vmatprep.subr.mxu0 0.0
    %2260 = vmatpush1.msra.mxu0 0.0
    %2261 = vmatprep.subr.mxu0 0.0
    %2262 = vmatpush1.msra.mxu0 0.0
    %2263 = vmatprep.subr.mxu0 0.0
    %2264 = vmatpush1.msra.mxu0 0.0
    %2265 = vmatprep.subr.mxu0 0.0
    %2266 = vmatpush1.msra.mxu0 0.0
    %2267 = vmatprep.subr.mxu0 0.0
    %2268 = vmatpush1.msra.mxu0 0.0
    %2269 = vmatprep.subr.mxu0 0.0
    %2270 = vmatpush1.msra.mxu0 0.0
    %2271 = vmatprep.subr.mxu0 0.0
    %2272 = vmatpush1.msra.mxu0 0.0
    %2273 = vmatprep.subr.mxu0 0.0
    %2274 = vmatpush1.msra.mxu0 0.0
    %2275 = vmatprep.subr.mxu0 0.0
    %2276 = vmatpush1.msra.mxu0 0.0
    %2277 = vmatprep.subr.mxu0 0.0
    %2278 = vmatpush1.msra.mxu0 0.0
    %2279 = vmatprep.subr.mxu0 0.0
    %2280 = vmatpush1.msra.mxu0 0.0
    %2281 = vmatprep.subr.mxu0 0.0
    %2282 = vmatpush1.msra.mxu0 0.0
    %2283 = vmatprep.subr.mxu0 0.0
    %2284 = vmatpush1.msra.mxu0 0.0
    %2285 = vmatprep.subr.mxu0 0.0
    %2286 = vmatpush1.msra.mxu0 0.0
    %2287 = vmatprep.mubr.f32.mxu0 0.0
    %2288 = vmatmul.mubr.f32.gmra.mrb[0].mxu0 %v2030
    %v2289 = vpop.f32.mrb[0].mxu0
    %v2290 = vadd.f32 0.0, %v2289
    %v2291 = vpop.f32.mrb[0].mxu0
    %2292 = vdwg.mxu0
    %v2294 = vsel %vm79, %v2222, 0
    %2296 = vmatprep.subr.mxu0 0.0
    %2297 = vmatpush1.msra.mxu0 %v64
    %2298 = vmatprep.subr.mxu0 0.0
    %2299 = vmatpush1.msra.mxu0 %v65
    %2300 = vmatprep.subr.mxu0 0.0
    %2301 = vmatpush1.msra.mxu0 %v66
    %2302 = vmatprep.subr.mxu0 0.0
    %2303 = vmatpush1.msra.mxu0 %v67
    %2304 = vmatprep.subr.mxu0 0.0
    %2305 = vmatpush1.msra.mxu0 0.0
    %2306 = vmatprep.subr.mxu0 0.0
    %2307 = vmatpush1.msra.mxu0 0.0
    %2308 = vmatprep.subr.mxu0 0.0
    %2309 = vmatpush1.msra.mxu0 0.0
    %2310 = vmatprep.subr.mxu0 0.0
    %2311 = vmatpush1.msra.mxu0 0.0
    %2312 = vmatprep.subr.mxu0 0.0
    %2313 = vmatpush1.msra.mxu0 0.0
    %2314 = vmatprep.subr.mxu0 0.0
    %2315 = vmatpush1.msra.mxu0 0.0
    %2316 = vmatprep.subr.mxu0 0.0
    %2317 = vmatpush1.msra.mxu0 0.0
    %2318 = vmatprep.subr.mxu0 0.0
    %2319 = vmatpush1.msra.mxu0 0.0
    %2320 = vmatprep.subr.mxu0 0.0
    %2321 = vmatpush1.msra.mxu0 0.0
    %2322 = vmatprep.subr.mxu0 0.0
    %2323 = vmatpush1.msra.mxu0 0.0
    %2324 = vmatprep.subr.mxu0 0.0
    %2325 = vmatpush1.msra.mxu0 0.0
    %2326 = vmatprep.subr.mxu0 0.0
    %2327 = vmatpush1.msra.mxu0 0.0
    %2328 = vmatprep.subr.mxu0 0.0
    %2329 = vmatpush1.msra.mxu0 0.0
    %2330 = vmatprep.subr.mxu0 0.0
    %2331 = vmatpush1.msra.mxu0 0.0
    %2332 = vmatprep.subr.mxu0 0.0
    %2333 = vmatpush1.msra.mxu0 0.0
    %2334 = vmatprep.subr.mxu0 0.0
    %2335 = vmatpush1.msra.mxu0 0.0
    %2336 = vmatprep.subr.mxu0 0.0
    %2337 = vmatpush1.msra.mxu0 0.0
    %2338 = vmatprep.subr.mxu0 0.0
    %2339 = vmatpush1.msra.mxu0 0.0
    %2340 = vmatprep.subr.mxu0 0.0
    %2341 = vmatpush1.msra.mxu0 0.0
    %2342 = vmatprep.subr.mxu0 0.0
    %2343 = vmatpush1.msra.mxu0 0.0
    %2344 = vmatprep.subr.mxu0 0.0
    %2345 = vmatpush1.msra.mxu0 0.0
    %2346 = vmatprep.subr.mxu0 0.0
    %2347 = vmatpush1.msra.mxu0 0.0
    %2348 = vmatprep.subr.mxu0 0.0
    %2349 = vmatpush1.msra.mxu0 0.0
    %2350 = vmatprep.subr.mxu0 0.0
    %2351 = vmatpush1.msra.mxu0 0.0
    %2352 = vmatprep.subr.mxu0 0.0
    %2353 = vmatpush1.msra.mxu0 0.0
    %2354 = vmatprep.subr.mxu0 0.0
    %2355 = vmatpush1.msra.mxu0 0.0
    %2356 = vmatprep.subr.mxu0 0.0
    %2357 = vmatpush1.msra.mxu0 0.0
    %2358 = vmatprep.subr.mxu0 0.0
    %2359 = vmatpush1.msra.mxu0 0.0
    %2360 = vmatprep.mubr.f32.mxu0 0.0
    %2361 = vmatmul.mubr.f32.gmra.mrb[0].mxu0 %v2294
    %v2362 = vpop.f32.mrb[0].mxu0
    %v2363 = vadd.f32 %v2290, %v2362
    %v2364 = vpop.f32.mrb[0].mxu0
    %2365 = vdwg.mxu0
    %v2366 = vadd.f32 %v2363, %v72
    %v2367 = vxor.u32 %v2366, 2147483648
    %v2368 = vmul.f32 %v2367, 1.442695
    %v2369 = vpow.pop %v2368
    %v2370 = vadd.f32 %v2369, 1.0
    %v2371 = vrcp.pop %v2370
    %v2372 = vmul.f32 1.0, %v2371
    %v2373 = vmul.f32 %v2372, 2.0
    %v2374 = vsub.f32 %v2373, 1.0
    %v2375 = vmul.f32 %v2372, %v2020
    %2377 = vrot.lane.b32.xlu0 %v2374, 64
    %v2378 = vpop.permute.xlu0 %2377
    %v2380 = vmul.f32 %v2372, %v2378
    %2382 = vrot.lane.b32.xlu0 %v2380, 32
    %v2383 = vpop.permute.xlu0 %2382
    %v2385 = vadd.f32 %v2375, %v2383
    %v2386 = vtanh.pop %v2385
    %2388 = vrot.lane.b32.xlu0 %v2386, 64
    %v2389 = vpop.permute.xlu0 %2388
    %v2391 = vmul.f32 %v2372, %v2389
    %2393 = vrot.lane.b32.xlu0 %v2391, 32
    %v2394 = vpop.permute.xlu0 %2393
    %v2395 = vsel %vm79, %v2394, 0
    %2397 = vmatprep.subr.mxu0 0.0
    %2398 = vmatpush1.msra.mxu0 %v73
    %2399 = vmatprep.subr.mxu0 0.0
    %2400 = vmatpush1.msra.mxu0 %v74
    %2401 = vmatprep.subr.mxu0 0.0
    %2402 = vmatpush1.msra.mxu0 %v75
    %2403 = vmatprep.subr.mxu0 0.0
    %2404 = vmatpush1.msra.mxu0 %v76
    %2405 = vmatprep.subr.mxu0 0.0
    %2406 = vmatpush1.msra.mxu0 0.0
    %2407 = vmatprep.subr.mxu0 0.0
    %2408 = vmatpush1.msra.mxu0 0.0
    %2409 = vmatprep.subr.mxu0 0.0
    %2410 = vmatpush1.msra.mxu0 0.0
    %2411 = vmatprep.subr.mxu0 0.0
    %2412 = vmatpush1.msra.mxu0 0.0
    %2413 = vmatprep.subr.mxu0 0.0
    %2414 = vmatpush1.msra.mxu0 0.0
    %2415 = vmatprep.subr.mxu0 0.0
    %2416 = vmatpush1.msra.mxu0 0.0
    %2417 = vmatprep.subr.mxu0 0.0
    %2418 = vmatpush1.msra.mxu0 0.0
    %2419 = vmatprep.subr.mxu0 0.0
    %2420 = vmatpush1.msra.mxu0 0.0
    %2421 = vmatprep.subr.mxu0 0.0
    %2422 = vmatpush1.msra.mxu0 0.0
    %2423 = vmatprep.subr.mxu0 0.0
    %2424 = vmatpush1.msra.mxu0 0.0
    %2425 = vmatprep.subr.mxu0 0.0
    %2426 = vmatpush1.msra.mxu0 0.0
    %2427 = vmatprep.subr.mxu0 0.0
    %2428 = vmatpush1.msra.mxu0 0.0
    %2429 = vmatprep.subr.mxu0 0.0
    %2430 = vmatpush1.msra.mxu0 0.0
    %2431 = vmatprep.subr.mxu0 0.0
    %2432 = vmatpush1.msra.mxu0 0.0
    %2433 = vmatprep.subr.mxu0 0.0
    %2434 = vmatpush1.msra.mxu0 0.0
    %2435 = vmatprep.subr.mxu0 0.0
    %2436 = vmatpush1.msra.mxu0 0.0
    %2437 = vmatprep.subr.mxu0 0.0
    %2438 = vmatpush1.msra.mxu0 0.0
    %2439 = vmatprep.subr.mxu0 0.0
    %2440 = vmatpush1.msra.mxu0 0.0
    %2441 = vmatprep.subr.mxu0 0.0
    %2442 = vmatpush1.msra.mxu0 0.0
    %2443 = vmatprep.subr.mxu0 0.0
    %2444 = vmatpush1.msra.mxu0 0.0
    %2445 = vmatprep.subr.mxu0 0.0
    %2446 = vmatpush1.msra.mxu0 0.0
    %2447 = vmatprep.subr.mxu0 0.0
    %2448 = vmatpush1.msra.mxu0 0.0
    %2449 = vmatprep.subr.mxu0 0.0
    %2450 = vmatpush1.msra.mxu0 0.0
    %2451 = vmatprep.subr.mxu0 0.0
    %2452 = vmatpush1.msra.mxu0 0.0
    %2453 = vmatprep.subr.mxu0 0.0
    %2454 = vmatpush1.msra.mxu0 0.0
    %2455 = vmatprep.subr.mxu0 0.0
    %2456 = vmatpush1.msra.mxu0 0.0
    %2457 = vmatprep.subr.mxu0 0.0
    %2458 = vmatpush1.msra.mxu0 0.0
    %2459 = vmatprep.subr.mxu0 0.0
    %2460 = vmatpush1.msra.mxu0 0.0
    %2461 = vmatprep.mubr.f32.mxu0 0.0
    %2462 = vmatmul.mubr.f32.gmra.mrb[0].mxu0 %v2395
    %v2463 = vpop.f32.mrb[0].mxu0
    %v2464 = vadd.f32 %v77, %v2463
    %v2465 = vpop.f32.mrb[0].mxu0
    %2466 = vdwg.mxu0
    %s2467 = scalar_lea.vmem [#allocation5], 24
    %2468 = vst [vmem:[%s2467] sm:$0xff] %v2464
    %2469 = vmax.xlane.f32.xlu0 %v2464
    %v2470 = vpop.xlane.xlu0 %2469
    %vm2471 = vcmp.ge.f32.partialorder %v2464, %v2470
    %v2472 = vsel %vm2471, %v1486, 128
    %v2473 = vand.u32 %v2472, 65535
    %v2474 = vshra.s32 %v2472, 16
    %v2475 = vcvt.s32.f32 %v2473
    %v2476 = vcvt.s32.f32 %v2474
    %2477 = vmin.xlane.f32.xlu0 %v2476
    %v2478 = vpop.xlane.xlu0 %2477
    %vm2479 = vcmp.eq.f32.partialorder %v2476, %v2478
    %v2480 = vsel %vm2479, %v2475, inf
    %2481 = vmin.xlane.f32.xlu0 %v2480
    %v2482 = vpop.xlane.xlu0 %2481
    %v2483 = vcvt.f32.s32 %v2482
    %v2484 = vcvt.f32.s32 %v2478
    %v2485 = vshll.u32 %v2484, 16
    %v2486 = vadd.s32 %v2485, %v2483
    %vm2487 = vcmp.eq.s32.totalorder %v1486, %v2486
    %v2488 = vsel %vm2487, 1, 0
    %v2489 = vcvt.s32.f32 %v2488
    %v2490 = vld [vmem:[%s11] sm:$0xff]
    %v2491 = vld [vmem:[%s11 + $0x8] sm:$0xff]
    %v2492 = vld [vmem:[%s11 + $0x10] sm:$0xff]
    %v2493 = vld [vmem:[%s11 + $0x18] sm:$0xff]
    %v2494 = vld [vmem:[%s11 + $0x20] sm:$0xff]
    %v2495 = vld [vmem:[%s11 + $0x28] sm:$0xff]
    %v2496 = vld [vmem:[%s11 + $0x30] sm:$0xff]
    %v2497 = vld [vmem:[%s11 + $0x38] sm:$0xff]
    %v2498 = vld [vmem:[%s11 + $0x40] sm:$0xff]
    %v2499 = vld [vmem:[%s11 + $0x48] sm:$0xff]
    %v2500 = vld [vmem:[%s11 + $0x50] sm:$0xff]
    %v2501 = vld [vmem:[%s11 + $0x58] sm:$0xff]
    %v2502 = vld [vmem:[%s11 + $0x60] sm:$0xff]
    %v2503 = vld [vmem:[%s11 + $0x68] sm:$0xff]
    %v2504 = vld [vmem:[%s11 + $0x70] sm:$0xff]
    %v2505 = vld [vmem:[%s11 + $0x78] sm:$0xff]
    %2506 = vmatprep.subr.mxu0 0.0
    %2507 = vmatpush1.msra.mxu0 %v2490
    %2508 = vmatprep.subr.mxu0 0.0
    %2509 = vmatpush1.msra.mxu0 %v2491
    %2510 = vmatprep.subr.mxu0 0.0
    %2511 = vmatpush1.msra.mxu0 %v2492
    %2512 = vmatprep.subr.mxu0 0.0
    %2513 = vmatpush1.msra.mxu0 %v2493
    %2514 = vmatprep.subr.mxu0 0.0
    %2515 = vmatpush1.msra.mxu0 %v2494
    %2516 = vmatprep.subr.mxu0 0.0
    %2517 = vmatpush1.msra.mxu0 %v2495
    %2518 = vmatprep.subr.mxu0 0.0
    %2519 = vmatpush1.msra.mxu0 %v2496
    %2520 = vmatprep.subr.mxu0 0.0
    %2521 = vmatpush1.msra.mxu0 %v2497
    %2522 = vmatprep.subr.mxu0 0.0
    %2523 = vmatpush1.msra.mxu0 %v2498
    %2524 = vmatprep.subr.mxu0 0.0
    %2525 = vmatpush1.msra.mxu0 %v2499
    %2526 = vmatprep.subr.mxu0 0.0
    %2527 = vmatpush1.msra.mxu0 %v2500
    %2528 = vmatprep.subr.mxu0 0.0
    %2529 = vmatpush1.msra.mxu0 %v2501
    %2530 = vmatprep.subr.mxu0 0.0
    %2531 = vmatpush1.msra.mxu0 %v2502
    %2532 = vmatprep.subr.mxu0 0.0
    %2533 = vmatpush1.msra.mxu0 %v2503
    %2534 = vmatprep.subr.mxu0 0.0
    %2535 = vmatpush1.msra.mxu0 %v2504
    %2536 = vmatprep.subr.mxu0 0.0
    %2537 = vmatpush1.msra.mxu0 %v2505
    %2538 = vmatprep.subr.mxu0 0.0
    %2539 = vmatpush1.msra.mxu0 0.0
    %2540 = vmatprep.subr.mxu0 0.0
    %2541 = vmatpush1.msra.mxu0 0.0
    %2542 = vmatprep.subr.mxu0 0.0
    %2543 = vmatpush1.msra.mxu0 0.0
    %2544 = vmatprep.subr.mxu0 0.0
    %2545 = vmatpush1.msra.mxu0 0.0
    %2546 = vmatprep.subr.mxu0 0.0
    %2547 = vmatpush1.msra.mxu0 0.0
    %2548 = vmatprep.subr.mxu0 0.0
    %2549 = vmatpush1.msra.mxu0 0.0
    %2550 = vmatprep.subr.mxu0 0.0
    %2551 = vmatpush1.msra.mxu0 0.0
    %2552 = vmatprep.subr.mxu0 0.0
    %2553 = vmatpush1.msra.mxu0 0.0
    %2554 = vmatprep.subr.mxu0 0.0
    %2555 = vmatpush1.msra.mxu0 0.0
    %2556 = vmatprep.subr.mxu0 0.0
    %2557 = vmatpush1.msra.mxu0 0.0
    %2558 = vmatprep.subr.mxu0 0.0
    %2559 = vmatpush1.msra.mxu0 0.0
    %2560 = vmatprep.subr.mxu0 0.0
    %2561 = vmatpush1.msra.mxu0 0.0
    %2562 = vmatprep.subr.mxu0 0.0
    %2563 = vmatpush1.msra.mxu0 0.0
    %2564 = vmatprep.subr.mxu0 0.0
    %2565 = vmatpush1.msra.mxu0 0.0
    %2566 = vmatprep.subr.mxu0 0.0
    %2567 = vmatpush1.msra.mxu0 0.0
    %2568 = vmatprep.subr.mxu0 0.0
    %2569 = vmatpush1.msra.mxu0 0.0
    %2570 = vmatprep.mubr.f32.mxu0 0.0
    %2571 = vmatmul.mubr.f32.gmra.mrb[0].mxu0 %v2489
    %v2572 = vpop.f32.mrb[0].mxu0
    %v2573 = vadd.f32 0.0, %v2572
    %v2574 = vpop.f32.mrb[0].mxu0
    %2575 = vdwg.mxu0
    %s2576 = sld [smem:[#allocation2 + $0x3]]
    %p2577 = scmp.ne.s32.totalorder %s2576, 0
    %s2578 = scalar_select %p2577, 1, 0
    %s2579 = scvt.s32.f32 %s2578
    %s2580 = scalar_lea.vmem %s2, 24
    %v2581 = vld [vmem:[%s2580] sm:$0xff]
    %v2582 = vstv %s2579
    %v2583 = vmul.f32 %v2582, %v2581
    %s2584 = ssub.f32 1.0, %s2579
    %v2585 = vstv %s2584
    %v2586 = vmul.f32 %v2585, %v2573
    %v2587 = vadd.f32 %v2583, %v2586
    %2588 = vmatprep.subr.mxu0 0.0
    %2589 = vmatpush1.msra.mxu0 %v68
    %2590 = vmatprep.subr.mxu0 0.0
    %2591 = vmatpush1.msra.mxu0 %v69
    %2592 = vmatprep.subr.mxu0 0.0
    %2593 = vmatpush1.msra.mxu0 %v70
    %2594 = vmatprep.subr.mxu0 0.0
    %2595 = vmatpush1.msra.mxu0 %v71
    %2596 = vmatprep.subr.mxu0 0.0
    %2597 = vmatpush1.msra.mxu0 0.0
    %2598 = vmatprep.subr.mxu0 0.0
    %2599 = vmatpush1.msra.mxu0 0.0
    %2600 = vmatprep.subr.mxu0 0.0
    %2601 = vmatpush1.msra.mxu0 0.0
    %2602 = vmatprep.subr.mxu0 0.0
    %2603 = vmatpush1.msra.mxu0 0.0
    %2604 = vmatprep.subr.mxu0 0.0
    %2605 = vmatpush1.msra.mxu0 0.0
    %2606 = vmatprep.subr.mxu0 0.0
    %2607 = vmatpush1.msra.mxu0 0.0
    %2608 = vmatprep.subr.mxu0 0.0
    %2609 = vmatpush1.msra.mxu0 0.0
    %2610 = vmatprep.subr.mxu0 0.0
    %2611 = vmatpush1.msra.mxu0 0.0
    %2612 = vmatprep.subr.mxu0 0.0
    %2613 = vmatpush1.msra.mxu0 0.0
    %2614 = vmatprep.subr.mxu0 0.0
    %2615 = vmatpush1.msra.mxu0 0.0
    %2616 = vmatprep.subr.mxu0 0.0
    %2617 = vmatpush1.msra.mxu0 0.0
    %2618 = vmatprep.subr.mxu0 0.0
    %2619 = vmatpush1.msra.mxu0 0.0
    %2620 = vmatprep.subr.mxu0 0.0
    %2621 = vmatpush1.msra.mxu0 0.0
    %2622 = vmatprep.subr.mxu0 0.0
    %2623 = vmatpush1.msra.mxu0 0.0
    %2624 = vmatprep.subr.mxu0 0.0
    %2625 = vmatpush1.msra.mxu0 0.0
    %2626 = vmatprep.subr.mxu0 0.0
    %2627 = vmatpush1.msra.mxu0 0.0
    %2628 = vmatprep.subr.mxu0 0.0
    %2629 = vmatpush1.msra.mxu0 0.0
    %2630 = vmatprep.subr.mxu0 0.0
    %2631 = vmatpush1.msra.mxu0 0.0
    %2632 = vmatprep.subr.mxu0 0.0
    %2633 = vmatpush1.msra.mxu0 0.0
    %2634 = vmatprep.subr.mxu0 0.0
    %2635 = vmatpush1.msra.mxu0 0.0
    %2636 = vmatprep.subr.mxu0 0.0
    %2637 = vmatpush1.msra.mxu0 0.0
    %2638 = vmatprep.subr.mxu0 0.0
    %2639 = vmatpush1.msra.mxu0 0.0
    %2640 = vmatprep.subr.mxu0 0.0
    %2641 = vmatpush1.msra.mxu0 0.0
    %2642 = vmatprep.subr.mxu0 0.0
    %2643 = vmatpush1.msra.mxu0 0.0
    %2644 = vmatprep.subr.mxu0 0.0
    %2645 = vmatpush1.msra.mxu0 0.0
    %2646 = vmatprep.subr.mxu0 0.0
    %2647 = vmatpush1.msra.mxu0 0.0
    %2648 = vmatprep.subr.mxu0 0.0
    %2649 = vmatpush1.msra.mxu0 0.0
    %2650 = vmatprep.subr.mxu0 0.0
    %2651 = vmatpush1.msra.mxu0 0.0
    %2652 = vmatprep.mubr.f32.mxu0 0.0
    %2653 = vmatmul.mubr.f32.gmra.mrb[0].mxu0 %v2395
    %v2654 = vpop.f32.mrb[0].mxu0
    %v2655 = vadd.f32 0.0, %v2654
    %v2656 = vpop.f32.mrb[0].mxu0
    %2657 = vdwg.mxu0
    %v2659 = vsel %vm79, %v2587, 0
    %2661 = vmatprep.subr.mxu0 0.0
    %2662 = vmatpush1.msra.mxu0 %v64
    %2663 = vmatprep.subr.mxu0 0.0
    %2664 = vmatpush1.msra.mxu0 %v65
    %2665 = vmatprep.subr.mxu0 0.0
    %2666 = vmatpush1.msra.mxu0 %v66
    %2667 = vmatprep.subr.mxu0 0.0
    %2668 = vmatpush1.msra.mxu0 %v67
    %2669 = vmatprep.subr.mxu0 0.0
    %2670 = vmatpush1.msra.mxu0 0.0
    %2671 = vmatprep.subr.mxu0 0.0
    %2672 = vmatpush1.msra.mxu0 0.0
    %2673 = vmatprep.subr.mxu0 0.0
    %2674 = vmatpush1.msra.mxu0 0.0
    %2675 = vmatprep.subr.mxu0 0.0
    %2676 = vmatpush1.msra.mxu0 0.0
    %2677 = vmatprep.subr.mxu0 0.0
    %2678 = vmatpush1.msra.mxu0 0.0
    %2679 = vmatprep.subr.mxu0 0.0
    %2680 = vmatpush1.msra.mxu0 0.0
    %2681 = vmatprep.subr.mxu0 0.0
    %2682 = vmatpush1.msra.mxu0 0.0
    %2683 = vmatprep.subr.mxu0 0.0
    %2684 = vmatpush1.msra.mxu0 0.0
    %2685 = vmatprep.subr.mxu0 0.0
    %2686 = vmatpush1.msra.mxu0 0.0
    %2687 = vmatprep.subr.mxu0 0.0
    %2688 = vmatpush1.msra.mxu0 0.0
    %2689 = vmatprep.subr.mxu0 0.0
    %2690 = vmatpush1.msra.mxu0 0.0
    %2691 = vmatprep.subr.mxu0 0.0
    %2692 = vmatpush1.msra.mxu0 0.0
    %2693 = vmatprep.subr.mxu0 0.0
    %2694 = vmatpush1.msra.mxu0 0.0
    %2695 = vmatprep.subr.mxu0 0.0
    %2696 = vmatpush1.msra.mxu0 0.0
    %2697 = vmatprep.subr.mxu0 0.0
    %2698 = vmatpush1.msra.mxu0 0.0
    %2699 = vmatprep.subr.mxu0 0.0
    %2700 = vmatpush1.msra.mxu0 0.0
    %2701 = vmatprep.subr.mxu0 0.0
    %2702 = vmatpush1.msra.mxu0 0.0
    %2703 = vmatprep.subr.mxu0 0.0
    %2704 = vmatpush1.msra.mxu0 0.0
    %2705 = vmatprep.subr.mxu0 0.0
    %2706 = vmatpush1.msra.mxu0 0.0
    %2707 = vmatprep.subr.mxu0 0.0
    %2708 = vmatpush1.msra.mxu0 0.0
    %2709 = vmatprep.subr.mxu0 0.0
    %2710 = vmatpush1.msra.mxu0 0.0
    %2711 = vmatprep.subr.mxu0 0.0
    %2712 = vmatpush1.msra.mxu0 0.0
    %2713 = vmatprep.subr.mxu0 0.0
    %2714 = vmatpush1.msra.mxu0 0.0
    %2715 = vmatprep.subr.mxu0 0.0
    %2716 = vmatpush1.msra.mxu0 0.0
    %2717 = vmatprep.subr.mxu0 0.0
    %2718 = vmatpush1.msra.mxu0 0.0
    %2719 = vmatprep.subr.mxu0 0.0
    %2720 = vmatpush1.msra.mxu0 0.0
    %2721 = vmatprep.subr.mxu0 0.0
    %2722 = vmatpush1.msra.mxu0 0.0
    %2723 = vmatprep.subr.mxu0 0.0
    %2724 = vmatpush1.msra.mxu0 0.0
    %2725 = vmatprep.mubr.f32.mxu0 0.0
    %2726 = vmatmul.mubr.f32.gmra.mrb[0].mxu0 %v2659
    %v2727 = vpop.f32.mrb[0].mxu0
    %v2728 = vadd.f32 %v2655, %v2727
    %v2729 = vpop.f32.mrb[0].mxu0
    %2730 = vdwg.mxu0
    %v2731 = vadd.f32 %v2728, %v72
    %v2732 = vxor.u32 %v2731, 2147483648
    %v2733 = vmul.f32 %v2732, 1.442695
    %v2734 = vpow.pop %v2733
    %v2735 = vadd.f32 %v2734, 1.0
    %v2736 = vrcp.pop %v2735
    %v2737 = vmul.f32 1.0, %v2736
    %v2738 = vmul.f32 %v2737, 2.0
    %v2739 = vsub.f32 %v2738, 1.0
    %v2740 = vmul.f32 %v2737, %v2385
    %2742 = vrot.lane.b32.xlu0 %v2739, 64
    %v2743 = vpop.permute.xlu0 %2742
    %v2745 = vmul.f32 %v2737, %v2743
    %2747 = vrot.lane.b32.xlu0 %v2745, 32
    %v2748 = vpop.permute.xlu0 %2747
    %v2750 = vadd.f32 %v2740, %v2748
    %v2751 = vtanh.pop %v2750
    %2753 = vrot.lane.b32.xlu0 %v2751, 64
    %v2754 = vpop.permute.xlu0 %2753
    %v2756 = vmul.f32 %v2737, %v2754
    %2758 = vrot.lane.b32.xlu0 %v2756, 32
    %v2759 = vpop.permute.xlu0 %2758
    %v2760 = vsel %vm79, %v2759, 0
    %2762 = vmatprep.subr.mxu0 0.0
    %2763 = vmatpush1.msra.mxu0 %v73
    %2764 = vmatprep.subr.mxu0 0.0
    %2765 = vmatpush1.msra.mxu0 %v74
    %2766 = vmatprep.subr.mxu0 0.0
    %2767 = vmatpush1.msra.mxu0 %v75
    %2768 = vmatprep.subr.mxu0 0.0
    %2769 = vmatpush1.msra.mxu0 %v76
    %2770 = vmatprep.subr.mxu0 0.0
    %2771 = vmatpush1.msra.mxu0 0.0
    %2772 = vmatprep.subr.mxu0 0.0
    %2773 = vmatpush1.msra.mxu0 0.0
    %2774 = vmatprep.subr.mxu0 0.0
    %2775 = vmatpush1.msra.mxu0 0.0
    %2776 = vmatprep.subr.mxu0 0.0
    %2777 = vmatpush1.msra.mxu0 0.0
    %2778 = vmatprep.subr.mxu0 0.0
    %2779 = vmatpush1.msra.mxu0 0.0
    %2780 = vmatprep.subr.mxu0 0.0
    %2781 = vmatpush1.msra.mxu0 0.0
    %2782 = vmatprep.subr.mxu0 0.0
    %2783 = vmatpush1.msra.mxu0 0.0
    %2784 = vmatprep.subr.mxu0 0.0
    %2785 = vmatpush1.msra.mxu0 0.0
    %2786 = vmatprep.subr.mxu0 0.0
    %2787 = vmatpush1.msra.mxu0 0.0
    %2788 = vmatprep.subr.mxu0 0.0
    %2789 = vmatpush1.msra.mxu0 0.0
    %2790 = vmatprep.subr.mxu0 0.0
    %2791 = vmatpush1.msra.mxu0 0.0
    %2792 = vmatprep.subr.mxu0 0.0
    %2793 = vmatpush1.msra.mxu0 0.0
    %2794 = vmatprep.subr.mxu0 0.0
    %2795 = vmatpush1.msra.mxu0 0.0
    %2796 = vmatprep.subr.mxu0 0.0
    %2797 = vmatpush1.msra.mxu0 0.0
    %2798 = vmatprep.subr.mxu0 0.0
    %2799 = vmatpush1.msra.mxu0 0.0
    %2800 = vmatprep.subr.mxu0 0.0
    %2801 = vmatpush1.msra.mxu0 0.0
    %2802 = vmatprep.subr.mxu0 0.0
    %2803 = vmatpush1.msra.mxu0 0.0
    %2804 = vmatprep.subr.mxu0 0.0
    %2805 = vmatpush1.msra.mxu0 0.0
    %2806 = vmatprep.subr.mxu0 0.0
    %2807 = vmatpush1.msra.mxu0 0.0
    %2808 = vmatprep.subr.mxu0 0.0
    %2809 = vmatpush1.msra.mxu0 0.0
    %2810 = vmatprep.subr.mxu0 0.0
    %2811 = vmatpush1.msra.mxu0 0.0
    %2812 = vmatprep.subr.mxu0 0.0
    %2813 = vmatpush1.msra.mxu0 0.0
    %2814 = vmatprep.subr.mxu0 0.0
    %2815 = vmatpush1.msra.mxu0 0.0
    %2816 = vmatprep.subr.mxu0 0.0
    %2817 = vmatpush1.msra.mxu0 0.0
    %2818 = vmatprep.subr.mxu0 0.0
    %2819 = vmatpush1.msra.mxu0 0.0
    %2820 = vmatprep.subr.mxu0 0.0
    %2821 = vmatpush1.msra.mxu0 0.0
    %2822 = vmatprep.subr.mxu0 0.0
    %2823 = vmatpush1.msra.mxu0 0.0
    %2824 = vmatprep.subr.mxu0 0.0
    %2825 = vmatpush1.msra.mxu0 0.0
    %2826 = vmatprep.mubr.f32.mxu0 0.0
    %2827 = vmatmul.mubr.f32.gmra.mrb[0].mxu0 %v2760
    %v2828 = vpop.f32.mrb[0].mxu0
    %v2829 = vadd.f32 %v77, %v2828
    %v2830 = vpop.f32.mrb[0].mxu0
    %2831 = vdwg.mxu0
    %s2832 = scalar_lea.vmem [#allocation5], 32
    %2833 = vst [vmem:[%s2832] sm:$0xff] %v2829
    %2834 = vmax.xlane.f32.xlu0 %v2829
    %v2835 = vpop.xlane.xlu0 %2834
    %vm2836 = vcmp.ge.f32.partialorder %v2829, %v2835
    %v2837 = vsel %vm2836, %v1486, 128
    %v2838 = vand.u32 %v2837, 65535
    %v2839 = vshra.s32 %v2837, 16
    %v2840 = vcvt.s32.f32 %v2838
    %v2841 = vcvt.s32.f32 %v2839
    %2842 = vmin.xlane.f32.xlu0 %v2841
    %v2843 = vpop.xlane.xlu0 %2842
    %vm2844 = vcmp.eq.f32.partialorder %v2841, %v2843
    %v2845 = vsel %vm2844, %v2840, inf
    %2846 = vmin.xlane.f32.xlu0 %v2845
    %v2847 = vpop.xlane.xlu0 %2846
    %v2848 = vcvt.f32.s32 %v2847
    %v2849 = vcvt.f32.s32 %v2843
    %v2850 = vshll.u32 %v2849, 16
    %v2851 = vadd.s32 %v2850, %v2848
    %vm2852 = vcmp.eq.s32.totalorder %v1486, %v2851
    %v2853 = vsel %vm2852, 1, 0
    %v2854 = vcvt.s32.f32 %v2853
    %v2855 = vld [vmem:[%s11] sm:$0xff]
    %v2856 = vld [vmem:[%s11 + $0x8] sm:$0xff]
    %v2857 = vld [vmem:[%s11 + $0x10] sm:$0xff]
    %v2858 = vld [vmem:[%s11 + $0x18] sm:$0xff]
    %v2859 = vld [vmem:[%s11 + $0x20] sm:$0xff]
    %v2860 = vld [vmem:[%s11 + $0x28] sm:$0xff]
    %v2861 = vld [vmem:[%s11 + $0x30] sm:$0xff]
    %v2862 = vld [vmem:[%s11 + $0x38] sm:$0xff]
    %v2863 = vld [vmem:[%s11 + $0x40] sm:$0xff]
    %v2864 = vld [vmem:[%s11 + $0x48] sm:$0xff]
    %v2865 = vld [vmem:[%s11 + $0x50] sm:$0xff]
    %v2866 = vld [vmem:[%s11 + $0x58] sm:$0xff]
    %v2867 = vld [vmem:[%s11 + $0x60] sm:$0xff]
    %v2868 = vld [vmem:[%s11 + $0x68] sm:$0xff]
    %v2869 = vld [vmem:[%s11 + $0x70] sm:$0xff]
    %v2870 = vld [vmem:[%s11 + $0x78] sm:$0xff]
    %2871 = vmatprep.subr.mxu0 0.0
    %2872 = vmatpush1.msra.mxu0 %v2855
    %2873 = vmatprep.subr.mxu0 0.0
    %2874 = vmatpush1.msra.mxu0 %v2856
    %2875 = vmatprep.subr.mxu0 0.0
    %2876 = vmatpush1.msra.mxu0 %v2857
    %2877 = vmatprep.subr.mxu0 0.0
    %2878 = vmatpush1.msra.mxu0 %v2858
    %2879 = vmatprep.subr.mxu0 0.0
    %2880 = vmatpush1.msra.mxu0 %v2859
    %2881 = vmatprep.subr.mxu0 0.0
    %2882 = vmatpush1.msra.mxu0 %v2860
    %2883 = vmatprep.subr.mxu0 0.0
    %2884 = vmatpush1.msra.mxu0 %v2861
    %2885 = vmatprep.subr.mxu0 0.0
    %2886 = vmatpush1.msra.mxu0 %v2862
    %2887 = vmatprep.subr.mxu0 0.0
    %2888 = vmatpush1.msra.mxu0 %v2863
    %2889 = vmatprep.subr.mxu0 0.0
    %2890 = vmatpush1.msra.mxu0 %v2864
    %2891 = vmatprep.subr.mxu0 0.0
    %2892 = vmatpush1.msra.mxu0 %v2865
    %2893 = vmatprep.subr.mxu0 0.0
    %2894 = vmatpush1.msra.mxu0 %v2866
    %2895 = vmatprep.subr.mxu0 0.0
    %2896 = vmatpush1.msra.mxu0 %v2867
    %2897 = vmatprep.subr.mxu0 0.0
    %2898 = vmatpush1.msra.mxu0 %v2868
    %2899 = vmatprep.subr.mxu0 0.0
    %2900 = vmatpush1.msra.mxu0 %v2869
    %2901 = vmatprep.subr.mxu0 0.0
    %2902 = vmatpush1.msra.mxu0 %v2870
    %2903 = vmatprep.subr.mxu0 0.0
    %2904 = vmatpush1.msra.mxu0 0.0
    %2905 = vmatprep.subr.mxu0 0.0
    %2906 = vmatpush1.msra.mxu0 0.0
    %2907 = vmatprep.subr.mxu0 0.0
    %2908 = vmatpush1.msra.mxu0 0.0
    %2909 = vmatprep.subr.mxu0 0.0
    %2910 = vmatpush1.msra.mxu0 0.0
    %2911 = vmatprep.subr.mxu0 0.0
    %2912 = vmatpush1.msra.mxu0 0.0
    %2913 = vmatprep.subr.mxu0 0.0
    %2914 = vmatpush1.msra.mxu0 0.0
    %2915 = vmatprep.subr.mxu0 0.0
    %2916 = vmatpush1.msra.mxu0 0.0
    %2917 = vmatprep.subr.mxu0 0.0
    %2918 = vmatpush1.msra.mxu0 0.0
    %2919 = vmatprep.subr.mxu0 0.0
    %2920 = vmatpush1.msra.mxu0 0.0
    %2921 = vmatprep.subr.mxu0 0.0
    %2922 = vmatpush1.msra.mxu0 0.0
    %2923 = vmatprep.subr.mxu0 0.0
    %2924 = vmatpush1.msra.mxu0 0.0
    %2925 = vmatprep.subr.mxu0 0.0
    %2926 = vmatpush1.msra.mxu0 0.0
    %2927 = vmatprep.subr.mxu0 0.0
    %2928 = vmatpush1.msra.mxu0 0.0
    %2929 = vmatprep.subr.mxu0 0.0
    %2930 = vmatpush1.msra.mxu0 0.0
    %2931 = vmatprep.subr.mxu0 0.0
    %2932 = vmatpush1.msra.mxu0 0.0
    %2933 = vmatprep.subr.mxu0 0.0
    %2934 = vmatpush1.msra.mxu0 0.0
    %2935 = vmatprep.mubr.f32.mxu0 0.0
    %2936 = vmatmul.mubr.f32.gmra.mrb[0].mxu0 %v2854
    %v2937 = vpop.f32.mrb[0].mxu0
    %v2938 = vadd.f32 0.0, %v2937
    %v2939 = vpop.f32.mrb[0].mxu0
    %2940 = vdwg.mxu0
    %s2941 = sld [smem:[#allocation2 + $0x4]]
    %p2942 = scmp.ne.s32.totalorder %s2941, 0
    %s2943 = scalar_select %p2942, 1, 0
    %s2944 = scvt.s32.f32 %s2943
    %s2945 = scalar_lea.vmem %s2, 32
    %v2946 = vld [vmem:[%s2945] sm:$0xff]
    %v2947 = vstv %s2944
    %v2948 = vmul.f32 %v2947, %v2946
    %s2949 = ssub.f32 1.0, %s2944
    %v2950 = vstv %s2949
    %v2951 = vmul.f32 %v2950, %v2938
    %v2952 = vadd.f32 %v2948, %v2951
    %2953 = vmatprep.subr.mxu0 0.0
    %2954 = vmatpush1.msra.mxu0 %v68
    %2955 = vmatprep.subr.mxu0 0.0
    %2956 = vmatpush1.msra.mxu0 %v69
    %2957 = vmatprep.subr.mxu0 0.0
    %2958 = vmatpush1.msra.mxu0 %v70
    %2959 = vmatprep.subr.mxu0 0.0
    %2960 = vmatpush1.msra.mxu0 %v71
    %2961 = vmatprep.subr.mxu0 0.0
    %2962 = vmatpush1.msra.mxu0 0.0
    %2963 = vmatprep.subr.mxu0 0.0
    %2964 = vmatpush1.msra.mxu0 0.0
    %2965 = vmatprep.subr.mxu0 0.0
    %2966 = vmatpush1.msra.mxu0 0.0
    %2967 = vmatprep.subr.mxu0 0.0
    %2968 = vmatpush1.msra.mxu0 0.0
    %2969 = vmatprep.subr.mxu0 0.0
    %2970 = vmatpush1.msra.mxu0 0.0
    %2971 = vmatprep.subr.mxu0 0.0
    %2972 = vmatpush1.msra.mxu0 0.0
    %2973 = vmatprep.subr.mxu0 0.0
    %2974 = vmatpush1.msra.mxu0 0.0
    %2975 = vmatprep.subr.mxu0 0.0
    %2976 = vmatpush1.msra.mxu0 0.0
    %2977 = vmatprep.subr.mxu0 0.0
    %2978 = vmatpush1.msra.mxu0 0.0
    %2979 = vmatprep.subr.mxu0 0.0
    %2980 = vmatpush1.msra.mxu0 0.0
    %2981 = vmatprep.subr.mxu0 0.0
    %2982 = vmatpush1.msra.mxu0 0.0
    %2983 = vmatprep.subr.mxu0 0.0
    %2984 = vmatpush1.msra.mxu0 0.0
    %2985 = vmatprep.subr.mxu0 0.0
    %2986 = vmatpush1.msra.mxu0 0.0
    %2987 = vmatprep.subr.mxu0 0.0
    %2988 = vmatpush1.msra.mxu0 0.0
    %2989 = vmatprep.subr.mxu0 0.0
    %2990 = vmatpush1.msra.mxu0 0.0
    %2991 = vmatprep.subr.mxu0 0.0
    %2992 = vmatpush1.msra.mxu0 0.0
    %2993 = vmatprep.subr.mxu0 0.0
    %2994 = vmatpush1.msra.mxu0 0.0
    %2995 = vmatprep.subr.mxu0 0.0
    %2996 = vmatpush1.msra.mxu0 0.0
    %2997 = vmatprep.subr.mxu0 0.0
    %2998 = vmatpush1.msra.mxu0 0.0
    %2999 = vmatprep.subr.mxu0 0.0
    %3000 = vmatpush1.msra.mxu0 0.0
    %3001 = vmatprep.subr.mxu0 0.0
    %3002 = vmatpush1.msra.mxu0 0.0
    %3003 = vmatprep.subr.mxu0 0.0
    %3004 = vmatpush1.msra.mxu0 0.0
    %3005 = vmatprep.subr.mxu0 0.0
    %3006 = vmatpush1.msra.mxu0 0.0
    %3007 = vmatprep.subr.mxu0 0.0
    %3008 = vmatpush1.msra.mxu0 0.0
    %3009 = vmatprep.subr.mxu0 0.0
    %3010 = vmatpush1.msra.mxu0 0.0
    %3011 = vmatprep.subr.mxu0 0.0
    %3012 = vmatpush1.msra.mxu0 0.0
    %3013 = vmatprep.subr.mxu0 0.0
    %3014 = vmatpush1.msra.mxu0 0.0
    %3015 = vmatprep.subr.mxu0 0.0
    %3016 = vmatpush1.msra.mxu0 0.0
    %3017 = vmatprep.mubr.f32.mxu0 0.0
    %3018 = vmatmul.mubr.f32.gmra.mrb[0].mxu0 %v2760
    %v3019 = vpop.f32.mrb[0].mxu0
    %v3020 = vadd.f32 0.0, %v3019
    %v3021 = vpop.f32.mrb[0].mxu0
    %3022 = vdwg.mxu0
    %v3024 = vsel %vm79, %v2952, 0
    %3026 = vmatprep.subr.mxu0 0.0
    %3027 = vmatpush1.msra.mxu0 %v64
    %3028 = vmatprep.subr.mxu0 0.0
    %3029 = vmatpush1.msra.mxu0 %v65
    %3030 = vmatprep.subr.mxu0 0.0
    %3031 = vmatpush1.msra.mxu0 %v66
    %3032 = vmatprep.subr.mxu0 0.0
    %3033 = vmatpush1.msra.mxu0 %v67
    %3034 = vmatprep.subr.mxu0 0.0
    %3035 = vmatpush1.msra.mxu0 0.0
    %3036 = vmatprep.subr.mxu0 0.0
    %3037 = vmatpush1.msra.mxu0 0.0
    %3038 = vmatprep.subr.mxu0 0.0
    %3039 = vmatpush1.msra.mxu0 0.0
    %3040 = vmatprep.subr.mxu0 0.0
    %3041 = vmatpush1.msra.mxu0 0.0
    %3042 = vmatprep.subr.mxu0 0.0
    %3043 = vmatpush1.msra.mxu0 0.0
    %3044 = vmatprep.subr.mxu0 0.0
    %3045 = vmatpush1.msra.mxu0 0.0
    %3046 = vmatprep.subr.mxu0 0.0
    %3047 = vmatpush1.msra.mxu0 0.0
    %3048 = vmatprep.subr.mxu0 0.0
    %3049 = vmatpush1.msra.mxu0 0.0
    %3050 = vmatprep.subr.mxu0 0.0
    %3051 = vmatpush1.msra.mxu0 0.0
    %3052 = vmatprep.subr.mxu0 0.0
    %3053 = vmatpush1.msra.mxu0 0.0
    %3054 = vmatprep.subr.mxu0 0.0
    %3055 = vmatpush1.msra.mxu0 0.0
    %3056 = vmatprep.subr.mxu0 0.0
    %3057 = vmatpush1.msra.mxu0 0.0
    %3058 = vmatprep.subr.mxu0 0.0
    %3059 = vmatpush1.msra.mxu0 0.0
    %3060 = vmatprep.subr.mxu0 0.0
    %3061 = vmatpush1.msra.mxu0 0.0
    %3062 = vmatprep.subr.mxu0 0.0
    %3063 = vmatpush1.msra.mxu0 0.0
    %3064 = vmatprep.subr.mxu0 0.0
    %3065 = vmatpush1.msra.mxu0 0.0
    %3066 = vmatprep.subr.mxu0 0.0
    %3067 = vmatpush1.msra.mxu0 0.0
    %3068 = vmatprep.subr.mxu0 0.0
    %3069 = vmatpush1.msra.mxu0 0.0
    %3070 = vmatprep.subr.mxu0 0.0
    %3071 = vmatpush1.msra.mxu0 0.0
    %3072 = vmatprep.subr.mxu0 0.0
    %3073 = vmatpush1.msra.mxu0 0.0
    %3074 = vmatprep.subr.mxu0 0.0
    %3075 = vmatpush1.msra.mxu0 0.0
    %3076 = vmatprep.subr.mxu0 0.0
    %3077 = vmatpush1.msra.mxu0 0.0
    %3078 = vmatprep.subr.mxu0 0.0
    %3079 = vmatpush1.msra.mxu0 0.0
    %3080 = vmatprep.subr.mxu0 0.0
    %3081 = vmatpush1.msra.mxu0 0.0
    %3082 = vmatprep.subr.mxu0 0.0
    %3083 = vmatpush1.msra.mxu0 0.0
    %3084 = vmatprep.subr.mxu0 0.0
    %3085 = vmatpush1.msra.mxu0 0.0
    %3086 = vmatprep.subr.mxu0 0.0
    %3087 = vmatpush1.msra.mxu0 0.0
    %3088 = vmatprep.subr.mxu0 0.0
    %3089 = vmatpush1.msra.mxu0 0.0
    %3090 = vmatprep.mubr.f32.mxu0 0.0
    %3091 = vmatmul.mubr.f32.gmra.mrb[0].mxu0 %v3024
    %v3092 = vpop.f32.mrb[0].mxu0
    %v3093 = vadd.f32 %v3020, %v3092
    %v3094 = vpop.f32.mrb[0].mxu0
    %3095 = vdwg.mxu0
    %v3096 = vadd.f32 %v3093, %v72
    %v3097 = vxor.u32 %v3096, 2147483648
    %v3098 = vmul.f32 %v3097, 1.442695
    %v3099 = vpow.pop %v3098
    %v3100 = vadd.f32 %v3099, 1.0
    %v3101 = vrcp.pop %v3100
    %v3102 = vmul.f32 1.0, %v3101
    %v3103 = vmul.f32 %v3102, 2.0
    %v3104 = vsub.f32 %v3103, 1.0
    %v3105 = vmul.f32 %v3102, %v2750
    %3107 = vrot.lane.b32.xlu0 %v3104, 64
    %v3108 = vpop.permute.xlu0 %3107
    %v3110 = vmul.f32 %v3102, %v3108
    %3112 = vrot.lane.b32.xlu0 %v3110, 32
    %v3113 = vpop.permute.xlu0 %3112
    %v3115 = vadd.f32 %v3105, %v3113
    %v3116 = vtanh.pop %v3115
    %3118 = vrot.lane.b32.xlu0 %v3116, 64
    %v3119 = vpop.permute.xlu0 %3118
    %v3121 = vmul.f32 %v3102, %v3119
    %3123 = vrot.lane.b32.xlu0 %v3121, 32
    %v3124 = vpop.permute.xlu0 %3123
    %v3125 = vsel %vm79, %v3124, 0
    %3127 = vmatprep.subr.mxu0 0.0
    %3128 = vmatpush1.msra.mxu0 %v73
    %3129 = vmatprep.subr.mxu0 0.0
    %3130 = vmatpush1.msra.mxu0 %v74
    %3131 = vmatprep.subr.mxu0 0.0
    %3132 = vmatpush1.msra.mxu0 %v75
    %3133 = vmatprep.subr.mxu0 0.0
    %3134 = vmatpush1.msra.mxu0 %v76
    %3135 = vmatprep.subr.mxu0 0.0
    %3136 = vmatpush1.msra.mxu0 0.0
    %3137 = vmatprep.subr.mxu0 0.0
    %3138 = vmatpush1.msra.mxu0 0.0
    %3139 = vmatprep.subr.mxu0 0.0
    %3140 = vmatpush1.msra.mxu0 0.0
    %3141 = vmatprep.subr.mxu0 0.0
    %3142 = vmatpush1.msra.mxu0 0.0
    %3143 = vmatprep.subr.mxu0 0.0
    %3144 = vmatpush1.msra.mxu0 0.0
    %3145 = vmatprep.subr.mxu0 0.0
    %3146 = vmatpush1.msra.mxu0 0.0
    %3147 = vmatprep.subr.mxu0 0.0
    %3148 = vmatpush1.msra.mxu0 0.0
    %3149 = vmatprep.subr.mxu0 0.0
    %3150 = vmatpush1.msra.mxu0 0.0
    %3151 = vmatprep.subr.mxu0 0.0
    %3152 = vmatpush1.msra.mxu0 0.0
    %3153 = vmatprep.subr.mxu0 0.0
    %3154 = vmatpush1.msra.mxu0 0.0
    %3155 = vmatprep.subr.mxu0 0.0
    %3156 = vmatpush1.msra.mxu0 0.0
    %3157 = vmatprep.subr.mxu0 0.0
    %3158 = vmatpush1.msra.mxu0 0.0
    %3159 = vmatprep.subr.mxu0 0.0
    %3160 = vmatpush1.msra.mxu0 0.0
    %3161 = vmatprep.subr.mxu0 0.0
    %3162 = vmatpush1.msra.mxu0 0.0
    %3163 = vmatprep.subr.mxu0 0.0
    %3164 = vmatpush1.msra.mxu0 0.0
    %3165 = vmatprep.subr.mxu0 0.0
    %3166 = vmatpush1.msra.mxu0 0.0
    %3167 = vmatprep.subr.mxu0 0.0
    %3168 = vmatpush1.msra.mxu0 0.0
    %3169 = vmatprep.subr.mxu0 0.0
    %3170 = vmatpush1.msra.mxu0 0.0
    %3171 = vmatprep.subr.mxu0 0.0
    %3172 = vmatpush1.msra.mxu0 0.0
    %3173 = vmatprep.subr.mxu0 0.0
    %3174 = vmatpush1.msra.mxu0 0.0
    %3175 = vmatprep.subr.mxu0 0.0
    %3176 = vmatpush1.msra.mxu0 0.0
    %3177 = vmatprep.subr.mxu0 0.0
    %3178 = vmatpush1.msra.mxu0 0.0
    %3179 = vmatprep.subr.mxu0 0.0
    %3180 = vmatpush1.msra.mxu0 0.0
    %3181 = vmatprep.subr.mxu0 0.0
    %3182 = vmatpush1.msra.mxu0 0.0
    %3183 = vmatprep.subr.mxu0 0.0
    %3184 = vmatpush1.msra.mxu0 0.0
    %3185 = vmatprep.subr.mxu0 0.0
    %3186 = vmatpush1.msra.mxu0 0.0
    %3187 = vmatprep.subr.mxu0 0.0
    %3188 = vmatpush1.msra.mxu0 0.0
    %3189 = vmatprep.subr.mxu0 0.0
    %3190 = vmatpush1.msra.mxu0 0.0
    %3191 = vmatprep.mubr.f32.mxu0 0.0
    %3192 = vmatmul.mubr.f32.gmra.mrb[0].mxu0 %v3125
    %v3193 = vpop.f32.mrb[0].mxu0
    %v3194 = vadd.f32 %v77, %v3193
    %v3195 = vpop.f32.mrb[0].mxu0
    %3196 = vdwg.mxu0
    %s3197 = scalar_lea.vmem [#allocation5], 40
    %3198 = vst [vmem:[%s3197] sm:$0xff] %v3194
    %3199 = vmax.xlane.f32.xlu0 %v3194
    %v3200 = vpop.xlane.xlu0 %3199
    %vm3201 = vcmp.ge.f32.partialorder %v3194, %v3200
    %v3202 = vsel %vm3201, %v1486, 128
    %v3203 = vand.u32 %v3202, 65535
    %v3204 = vshra.s32 %v3202, 16
    %v3205 = vcvt.s32.f32 %v3203
    %v3206 = vcvt.s32.f32 %v3204
    %3207 = vmin.xlane.f32.xlu0 %v3206
    %v3208 = vpop.xlane.xlu0 %3207
    %vm3209 = vcmp.eq.f32.partialorder %v3206, %v3208
    %v3210 = vsel %vm3209, %v3205, inf
    %3211 = vmin.xlane.f32.xlu0 %v3210
    %v3212 = vpop.xlane.xlu0 %3211
    %v3213 = vcvt.f32.s32 %v3212
    %v3214 = vcvt.f32.s32 %v3208
    %v3215 = vshll.u32 %v3214, 16
    %v3216 = vadd.s32 %v3215, %v3213
    %vm3217 = vcmp.eq.s32.totalorder %v1486, %v3216
    %v3218 = vsel %vm3217, 1, 0
    %v3219 = vcvt.s32.f32 %v3218
    %v3220 = vld [vmem:[%s11] sm:$0xff]
    %v3221 = vld [vmem:[%s11 + $0x8] sm:$0xff]
    %v3222 = vld [vmem:[%s11 + $0x10] sm:$0xff]
    %v3223 = vld [vmem:[%s11 + $0x18] sm:$0xff]
    %v3224 = vld [vmem:[%s11 + $0x20] sm:$0xff]
    %v3225 = vld [vmem:[%s11 + $0x28] sm:$0xff]
    %v3226 = vld [vmem:[%s11 + $0x30] sm:$0xff]
    %v3227 = vld [vmem:[%s11 + $0x38] sm:$0xff]
    %v3228 = vld [vmem:[%s11 + $0x40] sm:$0xff]
    %v3229 = vld [vmem:[%s11 + $0x48] sm:$0xff]
    %v3230 = vld [vmem:[%s11 + $0x50] sm:$0xff]
    %v3231 = vld [vmem:[%s11 + $0x58] sm:$0xff]
    %v3232 = vld [vmem:[%s11 + $0x60] sm:$0xff]
    %v3233 = vld [vmem:[%s11 + $0x68] sm:$0xff]
    %v3234 = vld [vmem:[%s11 + $0x70] sm:$0xff]
    %v3235 = vld [vmem:[%s11 + $0x78] sm:$0xff]
    %3236 = vmatprep.subr.mxu0 0.0
    %3237 = vmatpush1.msra.mxu0 %v3220
    %3238 = vmatprep.subr.mxu0 0.0
    %3239 = vmatpush1.msra.mxu0 %v3221
    %3240 = vmatprep.subr.mxu0 0.0
    %3241 = vmatpush1.msra.mxu0 %v3222
    %3242 = vmatprep.subr.mxu0 0.0
    %3243 = vmatpush1.msra.mxu0 %v3223
    %3244 = vmatprep.subr.mxu0 0.0
    %3245 = vmatpush1.msra.mxu0 %v3224
    %3246 = vmatprep.subr.mxu0 0.0
    %3247 = vmatpush1.msra.mxu0 %v3225
    %3248 = vmatprep.subr.mxu0 0.0
    %3249 = vmatpush1.msra.mxu0 %v3226
    %3250 = vmatprep.subr.mxu0 0.0
    %3251 = vmatpush1.msra.mxu0 %v3227
    %3252 = vmatprep.subr.mxu0 0.0
    %3253 = vmatpush1.msra.mxu0 %v3228
    %3254 = vmatprep.subr.mxu0 0.0
    %3255 = vmatpush1.msra.mxu0 %v3229
    %3256 = vmatprep.subr.mxu0 0.0
    %3257 = vmatpush1.msra.mxu0 %v3230
    %3258 = vmatprep.subr.mxu0 0.0
    %3259 = vmatpush1.msra.mxu0 %v3231
    %3260 = vmatprep.subr.mxu0 0.0
    %3261 = vmatpush1.msra.mxu0 %v3232
    %3262 = vmatprep.subr.mxu0 0.0
    %3263 = vmatpush1.msra.mxu0 %v3233
    %3264 = vmatprep.subr.mxu0 0.0
    %3265 = vmatpush1.msra.mxu0 %v3234
    %3266 = vmatprep.subr.mxu0 0.0
    %3267 = vmatpush1.msra.mxu0 %v3235
    %3268 = vmatprep.subr.mxu0 0.0
    %3269 = vmatpush1.msra.mxu0 0.0
    %3270 = vmatprep.subr.mxu0 0.0
    %3271 = vmatpush1.msra.mxu0 0.0
    %3272 = vmatprep.subr.mxu0 0.0
    %3273 = vmatpush1.msra.mxu0 0.0
    %3274 = vmatprep.subr.mxu0 0.0
    %3275 = vmatpush1.msra.mxu0 0.0
    %3276 = vmatprep.subr.mxu0 0.0
    %3277 = vmatpush1.msra.mxu0 0.0
    %3278 = vmatprep.subr.mxu0 0.0
    %3279 = vmatpush1.msra.mxu0 0.0
    %3280 = vmatprep.subr.mxu0 0.0
    %3281 = vmatpush1.msra.mxu0 0.0
    %3282 = vmatprep.subr.mxu0 0.0
    %3283 = vmatpush1.msra.mxu0 0.0
    %3284 = vmatprep.subr.mxu0 0.0
    %3285 = vmatpush1.msra.mxu0 0.0
    %3286 = vmatprep.subr.mxu0 0.0
    %3287 = vmatpush1.msra.mxu0 0.0
    %3288 = vmatprep.subr.mxu0 0.0
    %3289 = vmatpush1.msra.mxu0 0.0
    %3290 = vmatprep.subr.mxu0 0.0
    %3291 = vmatpush1.msra.mxu0 0.0
    %3292 = vmatprep.subr.mxu0 0.0
    %3293 = vmatpush1.msra.mxu0 0.0
    %3294 = vmatprep.subr.mxu0 0.0
    %3295 = vmatpush1.msra.mxu0 0.0
    %3296 = vmatprep.subr.mxu0 0.0
    %3297 = vmatpush1.msra.mxu0 0.0
    %3298 = vmatprep.subr.mxu0 0.0
    %3299 = vmatpush1.msra.mxu0 0.0
    %3300 = vmatprep.mubr.f32.mxu0 0.0
    %3301 = vmatmul.mubr.f32.gmra.mrb[0].mxu0 %v3219
    %v3302 = vpop.f32.mrb[0].mxu0
    %v3303 = vadd.f32 0.0, %v3302
    %v3304 = vpop.f32.mrb[0].mxu0
    %3305 = vdwg.mxu0
    %s3306 = sld [smem:[#allocation2 + $0x5]]
    %p3307 = scmp.ne.s32.totalorder %s3306, 0
    %s3308 = scalar_select %p3307, 1, 0
    %s3309 = scvt.s32.f32 %s3308
    %s3310 = scalar_lea.vmem %s2, 40
    %v3311 = vld [vmem:[%s3310] sm:$0xff]
    %v3312 = vstv %s3309
    %v3313 = vmul.f32 %v3312, %v3311
    %s3314 = ssub.f32 1.0, %s3309
    %v3315 = vstv %s3314
    %v3316 = vmul.f32 %v3315, %v3303
    %v3317 = vadd.f32 %v3313, %v3316
    %3318 = vmatprep.subr.mxu0 0.0
    %3319 = vmatpush1.msra.mxu0 %v68
    %3320 = vmatprep.subr.mxu0 0.0
    %3321 = vmatpush1.msra.mxu0 %v69
    %3322 = vmatprep.subr.mxu0 0.0
    %3323 = vmatpush1.msra.mxu0 %v70
    %3324 = vmatprep.subr.mxu0 0.0
    %3325 = vmatpush1.msra.mxu0 %v71
    %3326 = vmatprep.subr.mxu0 0.0
    %3327 = vmatpush1.msra.mxu0 0.0
    %3328 = vmatprep.subr.mxu0 0.0
    %3329 = vmatpush1.msra.mxu0 0.0
    %3330 = vmatprep.subr.mxu0 0.0
    %3331 = vmatpush1.msra.mxu0 0.0
    %3332 = vmatprep.subr.mxu0 0.0
    %3333 = vmatpush1.msra.mxu0 0.0
    %3334 = vmatprep.subr.mxu0 0.0
    %3335 = vmatpush1.msra.mxu0 0.0
    %3336 = vmatprep.subr.mxu0 0.0
    %3337 = vmatpush1.msra.mxu0 0.0
    %3338 = vmatprep.subr.mxu0 0.0
    %3339 = vmatpush1.msra.mxu0 0.0
    %3340 = vmatprep.subr.mxu0 0.0
    %3341 = vmatpush1.msra.mxu0 0.0
    %3342 = vmatprep.subr.mxu0 0.0
    %3343 = vmatpush1.msra.mxu0 0.0
    %3344 = vmatprep.subr.mxu0 0.0
    %3345 = vmatpush1.msra.mxu0 0.0
    %3346 = vmatprep.subr.mxu0 0.0
    %3347 = vmatpush1.msra.mxu0 0.0
    %3348 = vmatprep.subr.mxu0 0.0
    %3349 = vmatpush1.msra.mxu0 0.0
    %3350 = vmatprep.subr.mxu0 0.0
    %3351 = vmatpush1.msra.mxu0 0.0
    %3352 = vmatprep.subr.mxu0 0.0
    %3353 = vmatpush1.msra.mxu0 0.0
    %3354 = vmatprep.subr.mxu0 0.0
    %3355 = vmatpush1.msra.mxu0 0.0
    %3356 = vmatprep.subr.mxu0 0.0
    %3357 = vmatpush1.msra.mxu0 0.0
    %3358 = vmatprep.subr.mxu0 0.0
    %3359 = vmatpush1.msra.mxu0 0.0
    %3360 = vmatprep.subr.mxu0 0.0
    %3361 = vmatpush1.msra.mxu0 0.0
    %3362 = vmatprep.subr.mxu0 0.0
    %3363 = vmatpush1.msra.mxu0 0.0
    %3364 = vmatprep.subr.mxu0 0.0
    %3365 = vmatpush1.msra.mxu0 0.0
    %3366 = vmatprep.subr.mxu0 0.0
    %3367 = vmatpush1.msra.mxu0 0.0
    %3368 = vmatprep.subr.mxu0 0.0
    %3369 = vmatpush1.msra.mxu0 0.0
    %3370 = vmatprep.subr.mxu0 0.0
    %3371 = vmatpush1.msra.mxu0 0.0
    %3372 = vmatprep.subr.mxu0 0.0
    %3373 = vmatpush1.msra.mxu0 0.0
    %3374 = vmatprep.subr.mxu0 0.0
    %3375 = vmatpush1.msra.mxu0 0.0
    %3376 = vmatprep.subr.mxu0 0.0
    %3377 = vmatpush1.msra.mxu0 0.0
    %3378 = vmatprep.subr.mxu0 0.0
    %3379 = vmatpush1.msra.mxu0 0.0
    %3380 = vmatprep.subr.mxu0 0.0
    %3381 = vmatpush1.msra.mxu0 0.0
    %3382 = vmatprep.mubr.f32.mxu0 0.0
    %3383 = vmatmul.mubr.f32.gmra.mrb[0].mxu0 %v3125
    %v3384 = vpop.f32.mrb[0].mxu0
    %v3385 = vadd.f32 0.0, %v3384
    %v3386 = vpop.f32.mrb[0].mxu0
    %3387 = vdwg.mxu0
    %v3389 = vsel %vm79, %v3317, 0
    %3391 = vmatprep.subr.mxu0 0.0
    %3392 = vmatpush1.msra.mxu0 %v64
    %3393 = vmatprep.subr.mxu0 0.0
    %3394 = vmatpush1.msra.mxu0 %v65
    %3395 = vmatprep.subr.mxu0 0.0
    %3396 = vmatpush1.msra.mxu0 %v66
    %3397 = vmatprep.subr.mxu0 0.0
    %3398 = vmatpush1.msra.mxu0 %v67
    %3399 = vmatprep.subr.mxu0 0.0
    %3400 = vmatpush1.msra.mxu0 0.0
    %3401 = vmatprep.subr.mxu0 0.0
    %3402 = vmatpush1.msra.mxu0 0.0
    %3403 = vmatprep.subr.mxu0 0.0
    %3404 = vmatpush1.msra.mxu0 0.0
    %3405 = vmatprep.subr.mxu0 0.0
    %3406 = vmatpush1.msra.mxu0 0.0
    %3407 = vmatprep.subr.mxu0 0.0
    %3408 = vmatpush1.msra.mxu0 0.0
    %3409 = vmatprep.subr.mxu0 0.0
    %3410 = vmatpush1.msra.mxu0 0.0
    %3411 = vmatprep.subr.mxu0 0.0
    %3412 = vmatpush1.msra.mxu0 0.0
    %3413 = vmatprep.subr.mxu0 0.0
    %3414 = vmatpush1.msra.mxu0 0.0
    %3415 = vmatprep.subr.mxu0 0.0
    %3416 = vmatpush1.msra.mxu0 0.0
    %3417 = vmatprep.subr.mxu0 0.0
    %3418 = vmatpush1.msra.mxu0 0.0
    %3419 = vmatprep.subr.mxu0 0.0
    %3420 = vmatpush1.msra.mxu0 0.0
    %3421 = vmatprep.subr.mxu0 0.0
    %3422 = vmatpush1.msra.mxu0 0.0
    %3423 = vmatprep.subr.mxu0 0.0
    %3424 = vmatpush1.msra.mxu0 0.0
    %3425 = vmatprep.subr.mxu0 0.0
    %3426 = vmatpush1.msra.mxu0 0.0
    %3427 = vmatprep.subr.mxu0 0.0
    %3428 = vmatpush1.msra.mxu0 0.0
    %3429 = vmatprep.subr.mxu0 0.0
    %3430 = vmatpush1.msra.mxu0 0.0
    %3431 = vmatprep.subr.mxu0 0.0
    %3432 = vmatpush1.msra.mxu0 0.0
    %3433 = vmatprep.subr.mxu0 0.0
    %3434 = vmatpush1.msra.mxu0 0.0
    %3435 = vmatprep.subr.mxu0 0.0
    %3436 = vmatpush1.msra.mxu0 0.0
    %3437 = vmatprep.subr.mxu0 0.0
    %3438 = vmatpush1.msra.mxu0 0.0
    %3439 = vmatprep.subr.mxu0 0.0
    %3440 = vmatpush1.msra.mxu0 0.0
    %3441 = vmatprep.subr.mxu0 0.0
    %3442 = vmatpush1.msra.mxu0 0.0
    %3443 = vmatprep.subr.mxu0 0.0
    %3444 = vmatpush1.msra.mxu0 0.0
    %3445 = vmatprep.subr.mxu0 0.0
    %3446 = vmatpush1.msra.mxu0 0.0
    %3447 = vmatprep.subr.mxu0 0.0
    %3448 = vmatpush1.msra.mxu0 0.0
    %3449 = vmatprep.subr.mxu0 0.0
    %3450 = vmatpush1.msra.mxu0 0.0
    %3451 = vmatprep.subr.mxu0 0.0
    %3452 = vmatpush1.msra.mxu0 0.0
    %3453 = vmatprep.subr.mxu0 0.0
    %3454 = vmatpush1.msra.mxu0 0.0
    %3455 = vmatprep.mubr.f32.mxu0 0.0
    %3456 = vmatmul.mubr.f32.gmra.mrb[0].mxu0 %v3389
    %v3457 = vpop.f32.mrb[0].mxu0
    %v3458 = vadd.f32 %v3385, %v3457
    %v3459 = vpop.f32.mrb[0].mxu0
    %3460 = vdwg.mxu0
    %v3461 = vadd.f32 %v3458, %v72
    %v3462 = vxor.u32 %v3461, 2147483648
    %v3463 = vmul.f32 %v3462, 1.442695
    %v3464 = vpow.pop %v3463
    %v3465 = vadd.f32 %v3464, 1.0
    %v3466 = vrcp.pop %v3465
    %v3467 = vmul.f32 1.0, %v3466
    %v3468 = vmul.f32 %v3467, 2.0
    %v3469 = vsub.f32 %v3468, 1.0
    %v3470 = vmul.f32 %v3467, %v3115
    %3472 = vrot.lane.b32.xlu0 %v3469, 64
    %v3473 = vpop.permute.xlu0 %3472
    %v3475 = vmul.f32 %v3467, %v3473
    %3477 = vrot.lane.b32.xlu0 %v3475, 32
    %v3478 = vpop.permute.xlu0 %3477
    %v3480 = vadd.f32 %v3470, %v3478
    %v3481 = vtanh.pop %v3480
    %3483 = vrot.lane.b32.xlu0 %v3481, 64
    %v3484 = vpop.permute.xlu0 %3483
    %v3486 = vmul.f32 %v3467, %v3484
    %3488 = vrot.lane.b32.xlu0 %v3486, 32
    %v3489 = vpop.permute.xlu0 %3488
    %v3490 = vsel %vm79, %v3489, 0
    %3492 = vmatprep.subr.mxu0 0.0
    %3493 = vmatpush1.msra.mxu0 %v73
    %3494 = vmatprep.subr.mxu0 0.0
    %3495 = vmatpush1.msra.mxu0 %v74
    %3496 = vmatprep.subr.mxu0 0.0
    %3497 = vmatpush1.msra.mxu0 %v75
    %3498 = vmatprep.subr.mxu0 0.0
    %3499 = vmatpush1.msra.mxu0 %v76
    %3500 = vmatprep.subr.mxu0 0.0
    %3501 = vmatpush1.msra.mxu0 0.0
    %3502 = vmatprep.subr.mxu0 0.0
    %3503 = vmatpush1.msra.mxu0 0.0
    %3504 = vmatprep.subr.mxu0 0.0
    %3505 = vmatpush1.msra.mxu0 0.0
    %3506 = vmatprep.subr.mxu0 0.0
    %3507 = vmatpush1.msra.mxu0 0.0
    %3508 = vmatprep.subr.mxu0 0.0
    %3509 = vmatpush1.msra.mxu0 0.0
    %3510 = vmatprep.subr.mxu0 0.0
    %3511 = vmatpush1.msra.mxu0 0.0
    %3512 = vmatprep.subr.mxu0 0.0
    %3513 = vmatpush1.msra.mxu0 0.0
    %3514 = vmatprep.subr.mxu0 0.0
    %3515 = vmatpush1.msra.mxu0 0.0
    %3516 = vmatprep.subr.mxu0 0.0
    %3517 = vmatpush1.msra.mxu0 0.0
    %3518 = vmatprep.subr.mxu0 0.0
    %3519 = vmatpush1.msra.mxu0 0.0
    %3520 = vmatprep.subr.mxu0 0.0
    %3521 = vmatpush1.msra.mxu0 0.0
    %3522 = vmatprep.subr.mxu0 0.0
    %3523 = vmatpush1.msra.mxu0 0.0
    %3524 = vmatprep.subr.mxu0 0.0
    %3525 = vmatpush1.msra.mxu0 0.0
    %3526 = vmatprep.subr.mxu0 0.0
    %3527 = vmatpush1.msra.mxu0 0.0
    %3528 = vmatprep.subr.mxu0 0.0
    %3529 = vmatpush1.msra.mxu0 0.0
    %3530 = vmatprep.subr.mxu0 0.0
    %3531 = vmatpush1.msra.mxu0 0.0
    %3532 = vmatprep.subr.mxu0 0.0
    %3533 = vmatpush1.msra.mxu0 0.0
    %3534 = vmatprep.subr.mxu0 0.0
    %3535 = vmatpush1.msra.mxu0 0.0
    %3536 = vmatprep.subr.mxu0 0.0
    %3537 = vmatpush1.msra.mxu0 0.0
    %3538 = vmatprep.subr.mxu0 0.0
    %3539 = vmatpush1.msra.mxu0 0.0
    %3540 = vmatprep.subr.mxu0 0.0
    %3541 = vmatpush1.msra.mxu0 0.0
    %3542 = vmatprep.subr.mxu0 0.0
    %3543 = vmatpush1.msra.mxu0 0.0
    %3544 = vmatprep.subr.mxu0 0.0
    %3545 = vmatpush1.msra.mxu0 0.0
    %3546 = vmatprep.subr.mxu0 0.0
    %3547 = vmatpush1.msra.mxu0 0.0
    %3548 = vmatprep.subr.mxu0 0.0
    %3549 = vmatpush1.msra.mxu0 0.0
    %3550 = vmatprep.subr.mxu0 0.0
    %3551 = vmatpush1.msra.mxu0 0.0
    %3552 = vmatprep.subr.mxu0 0.0
    %3553 = vmatpush1.msra.mxu0 0.0
    %3554 = vmatprep.subr.mxu0 0.0
    %3555 = vmatpush1.msra.mxu0 0.0
    %3556 = vmatprep.mubr.f32.mxu0 0.0
    %3557 = vmatmul.mubr.f32.gmra.mrb[0].mxu0 %v3490
    %v3558 = vpop.f32.mrb[0].mxu0
    %v3559 = vadd.f32 %v77, %v3558
    %v3560 = vpop.f32.mrb[0].mxu0
    %3561 = vdwg.mxu0
    %s3562 = scalar_lea.vmem [#allocation5], 48
    %3563 = vst [vmem:[%s3562] sm:$0xff] %v3559
    %3564 = vmax.xlane.f32.xlu0 %v3559
    %v3565 = vpop.xlane.xlu0 %3564
    %vm3566 = vcmp.ge.f32.partialorder %v3559, %v3565
    %v3567 = vsel %vm3566, %v1486, 128
    %v3568 = vand.u32 %v3567, 65535
    %v3569 = vshra.s32 %v3567, 16
    %v3570 = vcvt.s32.f32 %v3568
    %v3571 = vcvt.s32.f32 %v3569
    %3572 = vmin.xlane.f32.xlu0 %v3571
    %v3573 = vpop.xlane.xlu0 %3572
    %vm3574 = vcmp.eq.f32.partialorder %v3571, %v3573
    %v3575 = vsel %vm3574, %v3570, inf
    %3576 = vmin.xlane.f32.xlu0 %v3575
    %v3577 = vpop.xlane.xlu0 %3576
    %v3578 = vcvt.f32.s32 %v3577
    %v3579 = vcvt.f32.s32 %v3573
    %v3580 = vshll.u32 %v3579, 16
    %v3581 = vadd.s32 %v3580, %v3578
    %vm3582 = vcmp.eq.s32.totalorder %v1486, %v3581
    %v3583 = vsel %vm3582, 1, 0
    %v3584 = vcvt.s32.f32 %v3583
    %v3585 = vld [vmem:[%s11] sm:$0xff]
    %v3586 = vld [vmem:[%s11 + $0x8] sm:$0xff]
    %v3587 = vld [vmem:[%s11 + $0x10] sm:$0xff]
    %v3588 = vld [vmem:[%s11 + $0x18] sm:$0xff]
    %v3589 = vld [vmem:[%s11 + $0x20] sm:$0xff]
    %v3590 = vld [vmem:[%s11 + $0x28] sm:$0xff]
    %v3591 = vld [vmem:[%s11 + $0x30] sm:$0xff]
    %v3592 = vld [vmem:[%s11 + $0x38] sm:$0xff]
    %v3593 = vld [vmem:[%s11 + $0x40] sm:$0xff]
    %v3594 = vld [vmem:[%s11 + $0x48] sm:$0xff]
    %v3595 = vld [vmem:[%s11 + $0x50] sm:$0xff]
    %v3596 = vld [vmem:[%s11 + $0x58] sm:$0xff]
    %v3597 = vld [vmem:[%s11 + $0x60] sm:$0xff]
    %v3598 = vld [vmem:[%s11 + $0x68] sm:$0xff]
    %v3599 = vld [vmem:[%s11 + $0x70] sm:$0xff]
    %v3600 = vld [vmem:[%s11 + $0x78] sm:$0xff]
    %3601 = vmatprep.subr.mxu0 0.0
    %3602 = vmatpush1.msra.mxu0 %v3585
    %3603 = vmatprep.subr.mxu0 0.0
    %3604 = vmatpush1.msra.mxu0 %v3586
    %3605 = vmatprep.subr.mxu0 0.0
    %3606 = vmatpush1.msra.mxu0 %v3587
    %3607 = vmatprep.subr.mxu0 0.0
    %3608 = vmatpush1.msra.mxu0 %v3588
    %3609 = vmatprep.subr.mxu0 0.0
    %3610 = vmatpush1.msra.mxu0 %v3589
    %3611 = vmatprep.subr.mxu0 0.0
    %3612 = vmatpush1.msra.mxu0 %v3590
    %3613 = vmatprep.subr.mxu0 0.0
    %3614 = vmatpush1.msra.mxu0 %v3591
    %3615 = vmatprep.subr.mxu0 0.0
    %3616 = vmatpush1.msra.mxu0 %v3592
    %3617 = vmatprep.subr.mxu0 0.0
    %3618 = vmatpush1.msra.mxu0 %v3593
    %3619 = vmatprep.subr.mxu0 0.0
    %3620 = vmatpush1.msra.mxu0 %v3594
    %3621 = vmatprep.subr.mxu0 0.0
    %3622 = vmatpush1.msra.mxu0 %v3595
    %3623 = vmatprep.subr.mxu0 0.0
    %3624 = vmatpush1.msra.mxu0 %v3596
    %3625 = vmatprep.subr.mxu0 0.0
    %3626 = vmatpush1.msra.mxu0 %v3597
    %3627 = vmatprep.subr.mxu0 0.0
    %3628 = vmatpush1.msra.mxu0 %v3598
    %3629 = vmatprep.subr.mxu0 0.0
    %3630 = vmatpush1.msra.mxu0 %v3599
    %3631 = vmatprep.subr.mxu0 0.0
    %3632 = vmatpush1.msra.mxu0 %v3600
    %3633 = vmatprep.subr.mxu0 0.0
    %3634 = vmatpush1.msra.mxu0 0.0
    %3635 = vmatprep.subr.mxu0 0.0
    %3636 = vmatpush1.msra.mxu0 0.0
    %3637 = vmatprep.subr.mxu0 0.0
    %3638 = vmatpush1.msra.mxu0 0.0
    %3639 = vmatprep.subr.mxu0 0.0
    %3640 = vmatpush1.msra.mxu0 0.0
    %3641 = vmatprep.subr.mxu0 0.0
    %3642 = vmatpush1.msra.mxu0 0.0
    %3643 = vmatprep.subr.mxu0 0.0
    %3644 = vmatpush1.msra.mxu0 0.0
    %3645 = vmatprep.subr.mxu0 0.0
    %3646 = vmatpush1.msra.mxu0 0.0
    %3647 = vmatprep.subr.mxu0 0.0
    %3648 = vmatpush1.msra.mxu0 0.0
    %3649 = vmatprep.subr.mxu0 0.0
    %3650 = vmatpush1.msra.mxu0 0.0
    %3651 = vmatprep.subr.mxu0 0.0
    %3652 = vmatpush1.msra.mxu0 0.0
    %3653 = vmatprep.subr.mxu0 0.0
    %3654 = vmatpush1.msra.mxu0 0.0
    %3655 = vmatprep.subr.mxu0 0.0
    %3656 = vmatpush1.msra.mxu0 0.0
    %3657 = vmatprep.subr.mxu0 0.0
    %3658 = vmatpush1.msra.mxu0 0.0
    %3659 = vmatprep.subr.mxu0 0.0
    %3660 = vmatpush1.msra.mxu0 0.0
    %3661 = vmatprep.subr.mxu0 0.0
    %3662 = vmatpush1.msra.mxu0 0.0
    %3663 = vmatprep.subr.mxu0 0.0
    %3664 = vmatpush1.msra.mxu0 0.0
    %3665 = vmatprep.mubr.f32.mxu0 0.0
    %3666 = vmatmul.mubr.f32.gmra.mrb[0].mxu0 %v3584
    %v3667 = vpop.f32.mrb[0].mxu0
    %v3668 = vadd.f32 0.0, %v3667
    %v3669 = vpop.f32.mrb[0].mxu0
    %3670 = vdwg.mxu0
    %s3671 = sld [smem:[#allocation2 + $0x6]]
    %p3672 = scmp.ne.s32.totalorder %s3671, 0
    %s3673 = scalar_select %p3672, 1, 0
    %s3674 = scvt.s32.f32 %s3673
    %s3675 = scalar_lea.vmem %s2, 48
    %v3676 = vld [vmem:[%s3675] sm:$0xff]
    %v3677 = vstv %s3674
    %v3678 = vmul.f32 %v3677, %v3676
    %s3679 = ssub.f32 1.0, %s3674
    %v3680 = vstv %s3679
    %v3681 = vmul.f32 %v3680, %v3668
    %v3682 = vadd.f32 %v3678, %v3681
    %3683 = vmatprep.subr.mxu0 0.0
    %3684 = vmatpush1.msra.mxu0 %v68
    %3685 = vmatprep.subr.mxu0 0.0
    %3686 = vmatpush1.msra.mxu0 %v69
    %3687 = vmatprep.subr.mxu0 0.0
    %3688 = vmatpush1.msra.mxu0 %v70
    %3689 = vmatprep.subr.mxu0 0.0
    %3690 = vmatpush1.msra.mxu0 %v71
    %3691 = vmatprep.subr.mxu0 0.0
    %3692 = vmatpush1.msra.mxu0 0.0
    %3693 = vmatprep.subr.mxu0 0.0
    %3694 = vmatpush1.msra.mxu0 0.0
    %3695 = vmatprep.subr.mxu0 0.0
    %3696 = vmatpush1.msra.mxu0 0.0
    %3697 = vmatprep.subr.mxu0 0.0
    %3698 = vmatpush1.msra.mxu0 0.0
    %3699 = vmatprep.subr.mxu0 0.0
    %3700 = vmatpush1.msra.mxu0 0.0
    %3701 = vmatprep.subr.mxu0 0.0
    %3702 = vmatpush1.msra.mxu0 0.0
    %3703 = vmatprep.subr.mxu0 0.0
    %3704 = vmatpush1.msra.mxu0 0.0
    %3705 = vmatprep.subr.mxu0 0.0
    %3706 = vmatpush1.msra.mxu0 0.0
    %3707 = vmatprep.subr.mxu0 0.0
    %3708 = vmatpush1.msra.mxu0 0.0
    %3709 = vmatprep.subr.mxu0 0.0
    %3710 = vmatpush1.msra.mxu0 0.0
    %3711 = vmatprep.subr.mxu0 0.0
    %3712 = vmatpush1.msra.mxu0 0.0
    %3713 = vmatprep.subr.mxu0 0.0
    %3714 = vmatpush1.msra.mxu0 0.0
    %3715 = vmatprep.subr.mxu0 0.0
    %3716 = vmatpush1.msra.mxu0 0.0
    %3717 = vmatprep.subr.mxu0 0.0
    %3718 = vmatpush1.msra.mxu0 0.0
    %3719 = vmatprep.subr.mxu0 0.0
    %3720 = vmatpush1.msra.mxu0 0.0
    %3721 = vmatprep.subr.mxu0 0.0
    %3722 = vmatpush1.msra.mxu0 0.0
    %3723 = vmatprep.subr.mxu0 0.0
    %3724 = vmatpush1.msra.mxu0 0.0
    %3725 = vmatprep.subr.mxu0 0.0
    %3726 = vmatpush1.msra.mxu0 0.0
    %3727 = vmatprep.subr.mxu0 0.0
    %3728 = vmatpush1.msra.mxu0 0.0
    %3729 = vmatprep.subr.mxu0 0.0
    %3730 = vmatpush1.msra.mxu0 0.0
    %3731 = vmatprep.subr.mxu0 0.0
    %3732 = vmatpush1.msra.mxu0 0.0
    %3733 = vmatprep.subr.mxu0 0.0
    %3734 = vmatpush1.msra.mxu0 0.0
    %3735 = vmatprep.subr.mxu0 0.0
    %3736 = vmatpush1.msra.mxu0 0.0
    %3737 = vmatprep.subr.mxu0 0.0
    %3738 = vmatpush1.msra.mxu0 0.0
    %3739 = vmatprep.subr.mxu0 0.0
    %3740 = vmatpush1.msra.mxu0 0.0
    %3741 = vmatprep.subr.mxu0 0.0
    %3742 = vmatpush1.msra.mxu0 0.0
    %3743 = vmatprep.subr.mxu0 0.0
    %3744 = vmatpush1.msra.mxu0 0.0
    %3745 = vmatprep.subr.mxu0 0.0
    %3746 = vmatpush1.msra.mxu0 0.0
    %3747 = vmatprep.mubr.f32.mxu0 0.0
    %3748 = vmatmul.mubr.f32.gmra.mrb[0].mxu0 %v3490
    %v3749 = vpop.f32.mrb[0].mxu0
    %v3750 = vadd.f32 0.0, %v3749
    %v3751 = vpop.f32.mrb[0].mxu0
    %3752 = vdwg.mxu0
    %v3754 = vsel %vm79, %v3682, 0
    %3756 = vmatprep.subr.mxu0 0.0
    %3757 = vmatpush1.msra.mxu0 %v64
    %3758 = vmatprep.subr.mxu0 0.0
    %3759 = vmatpush1.msra.mxu0 %v65
    %3760 = vmatprep.subr.mxu0 0.0
    %3761 = vmatpush1.msra.mxu0 %v66
    %3762 = vmatprep.subr.mxu0 0.0
    %3763 = vmatpush1.msra.mxu0 %v67
    %3764 = vmatprep.subr.mxu0 0.0
    %3765 = vmatpush1.msra.mxu0 0.0
    %3766 = vmatprep.subr.mxu0 0.0
    %3767 = vmatpush1.msra.mxu0 0.0
    %3768 = vmatprep.subr.mxu0 0.0
    %3769 = vmatpush1.msra.mxu0 0.0
    %3770 = vmatprep.subr.mxu0 0.0
    %3771 = vmatpush1.msra.mxu0 0.0
    %3772 = vmatprep.subr.mxu0 0.0
    %3773 = vmatpush1.msra.mxu0 0.0
    %3774 = vmatprep.subr.mxu0 0.0
    %3775 = vmatpush1.msra.mxu0 0.0
    %3776 = vmatprep.subr.mxu0 0.0
    %3777 = vmatpush1.msra.mxu0 0.0
    %3778 = vmatprep.subr.mxu0 0.0
    %3779 = vmatpush1.msra.mxu0 0.0
    %3780 = vmatprep.subr.mxu0 0.0
    %3781 = vmatpush1.msra.mxu0 0.0
    %3782 = vmatprep.subr.mxu0 0.0
    %3783 = vmatpush1.msra.mxu0 0.0
    %3784 = vmatprep.subr.mxu0 0.0
    %3785 = vmatpush1.msra.mxu0 0.0
    %3786 = vmatprep.subr.mxu0 0.0
    %3787 = vmatpush1.msra.mxu0 0.0
    %3788 = vmatprep.subr.mxu0 0.0
    %3789 = vmatpush1.msra.mxu0 0.0
    %3790 = vmatprep.subr.mxu0 0.0
    %3791 = vmatpush1.msra.mxu0 0.0
    %3792 = vmatprep.subr.mxu0 0.0
    %3793 = vmatpush1.msra.mxu0 0.0
    %3794 = vmatprep.subr.mxu0 0.0
    %3795 = vmatpush1.msra.mxu0 0.0
    %3796 = vmatprep.subr.mxu0 0.0
    %3797 = vmatpush1.msra.mxu0 0.0
    %3798 = vmatprep.subr.mxu0 0.0
    %3799 = vmatpush1.msra.mxu0 0.0
    %3800 = vmatprep.subr.mxu0 0.0
    %3801 = vmatpush1.msra.mxu0 0.0
    %3802 = vmatprep.subr.mxu0 0.0
    %3803 = vmatpush1.msra.mxu0 0.0
    %3804 = vmatprep.subr.mxu0 0.0
    %3805 = vmatpush1.msra.mxu0 0.0
    %3806 = vmatprep.subr.mxu0 0.0
    %3807 = vmatpush1.msra.mxu0 0.0
    %3808 = vmatprep.subr.mxu0 0.0
    %3809 = vmatpush1.msra.mxu0 0.0
    %3810 = vmatprep.subr.mxu0 0.0
    %3811 = vmatpush1.msra.mxu0 0.0
    %3812 = vmatprep.subr.mxu0 0.0
    %3813 = vmatpush1.msra.mxu0 0.0
    %3814 = vmatprep.subr.mxu0 0.0
    %3815 = vmatpush1.msra.mxu0 0.0
    %3816 = vmatprep.subr.mxu0 0.0
    %3817 = vmatpush1.msra.mxu0 0.0
    %3818 = vmatprep.subr.mxu0 0.0
    %3819 = vmatpush1.msra.mxu0 0.0
    %3820 = vmatprep.mubr.f32.mxu0 0.0
    %3821 = vmatmul.mubr.f32.gmra.mrb[0].mxu0 %v3754
    %v3822 = vpop.f32.mrb[0].mxu0
    %v3823 = vadd.f32 %v3750, %v3822
    %v3824 = vpop.f32.mrb[0].mxu0
    %3825 = vdwg.mxu0
    %v3826 = vadd.f32 %v3823, %v72
    %v3827 = vxor.u32 %v3826, 2147483648
    %v3828 = vmul.f32 %v3827, 1.442695
    %v3829 = vpow.pop %v3828
    %v3830 = vadd.f32 %v3829, 1.0
    %v3831 = vrcp.pop %v3830
    %v3832 = vmul.f32 1.0, %v3831
    %v3833 = vmul.f32 %v3832, 2.0
    %v3834 = vsub.f32 %v3833, 1.0
    %v3835 = vmul.f32 %v3832, %v3480
    %3837 = vrot.lane.b32.xlu0 %v3834, 64
    %v3838 = vpop.permute.xlu0 %3837
    %v3840 = vmul.f32 %v3832, %v3838
    %3842 = vrot.lane.b32.xlu0 %v3840, 32
    %v3843 = vpop.permute.xlu0 %3842
    %v3845 = vadd.f32 %v3835, %v3843
    %v3846 = vtanh.pop %v3845
    %3848 = vrot.lane.b32.xlu0 %v3846, 64
    %v3849 = vpop.permute.xlu0 %3848
    %v3851 = vmul.f32 %v3832, %v3849
    %3853 = vrot.lane.b32.xlu0 %v3851, 32
    %v3854 = vpop.permute.xlu0 %3853
    %v3855 = vsel %vm79, %v3854, 0
    %3857 = vmatprep.subr.mxu0 0.0
    %3858 = vmatpush1.msra.mxu0 %v73
    %3859 = vmatprep.subr.mxu0 0.0
    %3860 = vmatpush1.msra.mxu0 %v74
    %3861 = vmatprep.subr.mxu0 0.0
    %3862 = vmatpush1.msra.mxu0 %v75
    %3863 = vmatprep.subr.mxu0 0.0
    %3864 = vmatpush1.msra.mxu0 %v76
    %3865 = vmatprep.subr.mxu0 0.0
    %3866 = vmatpush1.msra.mxu0 0.0
    %3867 = vmatprep.subr.mxu0 0.0
    %3868 = vmatpush1.msra.mxu0 0.0
    %3869 = vmatprep.subr.mxu0 0.0
    %3870 = vmatpush1.msra.mxu0 0.0
    %3871 = vmatprep.subr.mxu0 0.0
    %3872 = vmatpush1.msra.mxu0 0.0
    %3873 = vmatprep.subr.mxu0 0.0
    %3874 = vmatpush1.msra.mxu0 0.0
    %3875 = vmatprep.subr.mxu0 0.0
    %3876 = vmatpush1.msra.mxu0 0.0
    %3877 = vmatprep.subr.mxu0 0.0
    %3878 = vmatpush1.msra.mxu0 0.0
    %3879 = vmatprep.subr.mxu0 0.0
    %3880 = vmatpush1.msra.mxu0 0.0
    %3881 = vmatprep.subr.mxu0 0.0
    %3882 = vmatpush1.msra.mxu0 0.0
    %3883 = vmatprep.subr.mxu0 0.0
    %3884 = vmatpush1.msra.mxu0 0.0
    %3885 = vmatprep.subr.mxu0 0.0
    %3886 = vmatpush1.msra.mxu0 0.0
    %3887 = vmatprep.subr.mxu0 0.0
    %3888 = vmatpush1.msra.mxu0 0.0
    %3889 = vmatprep.subr.mxu0 0.0
    %3890 = vmatpush1.msra.mxu0 0.0
    %3891 = vmatprep.subr.mxu0 0.0
    %3892 = vmatpush1.msra.mxu0 0.0
    %3893 = vmatprep.subr.mxu0 0.0
    %3894 = vmatpush1.msra.mxu0 0.0
    %3895 = vmatprep.subr.mxu0 0.0
    %3896 = vmatpush1.msra.mxu0 0.0
    %3897 = vmatprep.subr.mxu0 0.0
    %3898 = vmatpush1.msra.mxu0 0.0
    %3899 = vmatprep.subr.mxu0 0.0
    %3900 = vmatpush1.msra.mxu0 0.0
    %3901 = vmatprep.subr.mxu0 0.0
    %3902 = vmatpush1.msra.mxu0 0.0
    %3903 = vmatprep.subr.mxu0 0.0
    %3904 = vmatpush1.msra.mxu0 0.0
    %3905 = vmatprep.subr.mxu0 0.0
    %3906 = vmatpush1.msra.mxu0 0.0
    %3907 = vmatprep.subr.mxu0 0.0
    %3908 = vmatpush1.msra.mxu0 0.0
    %3909 = vmatprep.subr.mxu0 0.0
    %3910 = vmatpush1.msra.mxu0 0.0
    %3911 = vmatprep.subr.mxu0 0.0
    %3912 = vmatpush1.msra.mxu0 0.0
    %3913 = vmatprep.subr.mxu0 0.0
    %3914 = vmatpush1.msra.mxu0 0.0
    %3915 = vmatprep.subr.mxu0 0.0
    %3916 = vmatpush1.msra.mxu0 0.0
    %3917 = vmatprep.subr.mxu0 0.0
    %3918 = vmatpush1.msra.mxu0 0.0
    %3919 = vmatprep.subr.mxu0 0.0
    %3920 = vmatpush1.msra.mxu0 0.0
    %3921 = vmatprep.mubr.f32.mxu0 0.0
    %3922 = vmatmul.mubr.f32.gmra.mrb[0].mxu0 %v3855
    %v3923 = vpop.f32.mrb[0].mxu0
    %v3924 = vadd.f32 %v77, %v3923
    %v3925 = vpop.f32.mrb[0].mxu0
    %3926 = vdwg.mxu0
    %s3927 = scalar_lea.vmem [#allocation5], 56
    %3928 = vst [vmem:[%s3927] sm:$0xff] %v3924
    // Predicated region
    $region54: #{seq2seq_forward.1} parent=1 // pred_check
      _
    $region55: #{seq2seq_forward.1} parent=1 // pred_check_branch
      %3930 = sbr.rel (0) target = $region57
    $region56: #{seq2seq_forward.1} parent=1 // pred_region
      %s3932 = ssub.s32 1024, 1024
      %3933 = vsyncadd [#allocation3], %s3932
      %s3934 = sshll.u32 [#allocation5], 4
      %s3935 = int_to_ptr.vmem [resolvable:$true] %s3934
      %3940 = dma.vmem_to_hbm [thread:$0]  %s3935, 1024, %s12, [#allocation3], 128, 128, 8
    $region57: #{seq2seq_forward.1} parent=1 // pred_fallthru
      _
    // Predicated region
    $region58: #{seq2seq_forward.1} parent=1 // pred_check
      _
    $region59: #{seq2seq_forward.1} parent=1 // pred_check_branch
      %3942 = sbr.rel (0) target = $region61
    $region60: #{seq2seq_forward.1} parent=1 // pred_region
      %3943 = dma.done [#allocation3], 1024
    $region61: #{seq2seq_forward.1} parent=1 // pred_fallthru
      _
    %3944 = vsyncpa [#allocation3], 1
    %3945 = vsyncpa [#allocation4], 1

</llo_original>
